<compile_context>
chip_gen: v7x
topology: tpu7x:2x2x1
jax: 0.10.0
libtpu: 0.0.40
codegen_flags: <defaults>
</compile_context>

<pallas_src>
import functools

import jax
import jax.numpy as jnp
from jax import lax
from jax.experimental import pallas as pl
from jax.experimental.pallas import tpu as pltpu


# ------------------------------ recurrent kernels ------------------------------
def _lstm_layer_kernel(x_ref, wih_ref, whh_ref, b_ref, out_ref,
                       gx_scr, h_scr, c_scr, *, B, Hp, Tc, unroll, mxu_dtype):
    tb = pl.program_id(0)

    @pl.when(tb == 0)
    def _():
        h_scr[...] = jnp.zeros_like(h_scr)
        c_scr[...] = jnp.zeros_like(c_scr)

    # Fused input projection for this time block (no recurrent dependency):
    # (Tc*B, IN) @ (IN, 4Hp) on the MXU, f32 accumulation, held in VMEM scratch.
    gx_scr[...] = (
        jnp.dot(x_ref[...], wih_ref[...], preferred_element_type=jnp.float32)
        + b_ref[...])

    def step(s, carry):
        row = s * B
        h = h_scr[...]
        c = c_scr[...]
        gates = gx_scr[pl.ds(row, B), :] + jnp.dot(
            h.astype(mxu_dtype), whh_ref[...],
            preferred_element_type=jnp.float32)
        # Lane-aligned gate slices (Hp is a multiple of 128).
        i_g = jax.nn.sigmoid(gates[:, 0 * Hp:1 * Hp])
        f_g = jax.nn.sigmoid(gates[:, 1 * Hp:2 * Hp])
        g_g = jnp.tanh(gates[:, 2 * Hp:3 * Hp])
        o_g = jax.nn.sigmoid(gates[:, 3 * Hp:4 * Hp])
        c_new = f_g * c + i_g * g_g
        h_new = o_g * jnp.tanh(c_new)
        h_scr[...] = h_new
        c_scr[...] = c_new
        out_ref[pl.ds(row, B), :] = h_new.astype(out_ref.dtype)
        return carry

    lax.fori_loop(0, Tc, step, 0, unroll=unroll)


def _lstm_last_layer_kernel(x_ref, wih_ref, whh_ref, b_ref, wcls_ref, bcls_ref,
                            prob_ref, gx_scr, h_scr, c_scr,
                            *, B, Hp, Tc, unroll, mxu_dtype):
    tb = pl.program_id(0)

    @pl.when(tb == 0)
    def _():
        h_scr[...] = jnp.zeros_like(h_scr)
        c_scr[...] = jnp.zeros_like(c_scr)

    gx_scr[...] = (
        jnp.dot(x_ref[...], wih_ref[...], preferred_element_type=jnp.float32)
        + b_ref[...])

    def step(s, carry):
        row = s * B
        h = h_scr[...]
        c = c_scr[...]
        gates = gx_scr[pl.ds(row, B), :] + jnp.dot(
            h.astype(mxu_dtype), whh_ref[...],
            preferred_element_type=jnp.float32)
        i_g = jax.nn.sigmoid(gates[:, 0 * Hp:1 * Hp])
        f_g = jax.nn.sigmoid(gates[:, 1 * Hp:2 * Hp])
        g_g = jnp.tanh(gates[:, 2 * Hp:3 * Hp])
        o_g = jax.nn.sigmoid(gates[:, 3 * Hp:4 * Hp])
        c_new = f_g * c + i_g * g_g
        h_new = o_g * jnp.tanh(c_new)
        h_scr[...] = h_new
        c_scr[...] = c_new
        return carry

    lax.fori_loop(0, Tc, step, 0, unroll=unroll)

    # Classifier fused into the final time block. Dropout(0.5) is identity at
    # inference. VPU multiply + lane reduction instead of a (B,Hp)x(Hp,1) MXU
    # pass; padded h lanes are exactly 0 so the padded w_cls rows are harmless.
    @pl.when(tb == pl.num_programs(0) - 1)
    def _():
        h = h_scr[...]                                        # (B, Hp) f32
        w = wcls_ref[...].astype(jnp.float32)                 # (1, Hp)
        logits = jnp.sum(h * w, axis=-1, keepdims=True) + bcls_ref[0]
        prob_ref[...] = jax.nn.sigmoid(logits).astype(prob_ref.dtype)


# --------------------------- VMEM-budget time blocking --------------------------
def _pick_time_block(T, B, IN, Hp, x_bytes, out_bytes, w_bytes,
                     budget_bytes=32 * 1024 * 1024):
    """Largest Tc dividing T (with sublane-legal Tc*B) whose working set fits."""
    fixed = 2 * (IN + Hp) * 4 * Hp * w_bytes          # W_ih + W_hh (double-buffered)
    fixed += 2 * (4 * Hp + Hp) * 4                    # bias row + classifier row
    fixed += 2 * B * Hp * 4                           # h, c state
    per_tc = B * (2 * IN * x_bytes + 2 * Hp * out_bytes + 4 * Hp * 4)
    cap = max(1, (budget_bytes - fixed) // per_tc)
    valid = [tc for tc in range(1, T + 1)
             if T % tc == 0 and ((tc * B) % 8 == 0 or tc == T)]
    within = [tc for tc in valid if tc <= cap]
    tc = max(within) if within else min(valid)
    vmem_est = fixed + per_tc * tc
    return tc, vmem_est


def _vmem_limit(vmem_est):
    return int(min(max(vmem_est + (4 << 20), 32 << 20), 64 << 20))


# ----------------------------------- wrappers -----------------------------------
def lstm_layer_hidden(x2d, w_ih, w_hh, b_row, *, T, B, unroll=8):
    """x2d: (T*B, IN) time-major -> (T*B, Hp) hidden sequence (time-major)."""
    IN = x2d.shape[1]
    Hp = w_hh.shape[0]
    xb = jnp.dtype(x2d.dtype).itemsize
    wb = jnp.dtype(w_hh.dtype).itemsize
    Tc, vmem_est = _pick_time_block(T, B, IN, Hp, xb, xb, wb)
    kernel = functools.partial(_lstm_layer_kernel, B=B, Hp=Hp, Tc=Tc,
                               unroll=min(unroll, Tc), mxu_dtype=w_hh.dtype)
    return pl.pallas_call(
        kernel,
        out_shape=jax.ShapeDtypeStruct((T * B, Hp), x2d.dtype),
        grid_spec=pltpu.PrefetchScalarGridSpec(
            num_scalar_prefetch=0,
            grid=(T // Tc,),
            in_specs=[
                pl.BlockSpec((Tc * B, IN), lambda tb: (tb, 0)),
                # Constant-index weight tiles.  TODO(synk): pl.Buffered(1) /
                # per-layer bf16 weights at production H so v7x's 64 MiB holds.
                pl.BlockSpec((IN, 4 * Hp), lambda tb: (0, 0)),
                pl.BlockSpec((Hp, 4 * Hp), lambda tb: (0, 0)),
                pl.BlockSpec((1, 4 * Hp), lambda tb: (0, 0)),
            ],
            out_specs=pl.BlockSpec((Tc * B, Hp), lambda tb: (tb, 0)),
            scratch_shapes=[
                pltpu.VMEM((Tc * B, 4 * Hp), jnp.float32),   # gates_x block
                pltpu.VMEM((B, Hp), jnp.float32),            # h state
                pltpu.VMEM((B, Hp), jnp.float32),            # c state
            ],
        ),
        compiler_params=pltpu.CompilerParams(
            dimension_semantics=("arbitrary",),               # serial recurrence
            vmem_limit_bytes=_vmem_limit(vmem_est)),
    )(x2d, w_ih, w_hh, b_row)


def lstm_layer_last(x2d, w_ih, w_hh, b_row, w_cls_row, b_cls, *, T, B, unroll=8):
    """Last LSTM layer + fused classifier: returns sigmoid(h_{T-1} W + b), (B, 1)."""
    IN = x2d.shape[1]
    Hp = w_hh.shape[0]
    xb = jnp.dtype(x2d.dtype).itemsize
    wb = jnp.dtype(w_hh.dtype).itemsize
    Tc, vmem_est = _pick_time_block(T, B, IN, Hp, xb, 0, wb)
    kernel = functools.partial(_lstm_last_layer_kernel, B=B, Hp=Hp, Tc=Tc,
                               unroll=min(unroll, Tc), mxu_dtype=w_hh.dtype)
    return pl.pallas_call(
        kernel,
        out_shape=jax.ShapeDtypeStruct((B, 1), jnp.float32),
        grid_spec=pltpu.PrefetchScalarGridSpec(
            num_scalar_prefetch=0,
            grid=(T // Tc,),
            in_specs=[
                pl.BlockSpec((Tc * B, IN), lambda tb: (tb, 0)),
                pl.BlockSpec((IN, 4 * Hp), lambda tb: (0, 0)),
                pl.BlockSpec((Hp, 4 * Hp), lambda tb: (0, 0)),
                pl.BlockSpec((1, 4 * Hp), lambda tb: (0, 0)),
                pl.BlockSpec((1, Hp), lambda tb: (0, 0)),
                pl.BlockSpec(memory_space=pltpu.MemorySpace.SMEM),   # b_cls
            ],
            out_specs=pl.BlockSpec((B, 1), lambda tb: (0, 0)),
            scratch_shapes=[
                pltpu.VMEM((Tc * B, 4 * Hp), jnp.float32),
                pltpu.VMEM((B, Hp), jnp.float32),
                pltpu.VMEM((B, Hp), jnp.float32),
            ],
        ),
        compiler_params=pltpu.CompilerParams(
            dimension_semantics=("arbitrary",),
            vmem_limit_bytes=_vmem_limit(vmem_est)),
    )(x2d, w_ih, w_hh, b_row, w_cls_row, b_cls)


# ------------------------------- forward (glue) ---------------------------------
def lstm_net_forward(kp, token_ids):
    B, T = token_ids.shape
    # Embedding gather (fixed table) is a data-dependent lookup done in plain
    # JAX; indexing with token_ids.T yields a time-major (T, B, E) slab so no
    # separate transpose pass is needed.
    x = kp["embedding"][token_ids.T].astype(kp["dtype"]).reshape(T * B, -1)
    n = len(kp["lstm"])
    for li, layer in enumerate(kp["lstm"]):
        if li == n - 1:
            return lstm_layer_last(x, layer["w_ih"], layer["w_hh"], layer["b"],
                                   kp["w_cls_row"], kp["b_cls"], T=T, B=B)
        # TODO(synk): for L >= 3 a wavefront-fused multi-layer kernel would keep
        # this (T*B, Hp) hand-off in VMEM instead of HBM.
        x = lstm_layer_hidden(x, layer["w_ih"], layer["w_hh"], layer["b"],
                              T=T, B=B)


# --------------------------------- param prep ------------------------------------
def _round_up(x, m):
    return (x + m - 1) // m * m


def _pad_gate_cols(w, H, Hp):
    """(..., 4H) -> (..., 4Hp): each gate block starts on a 128-lane boundary."""
    parts = jnp.split(w, 4, axis=-1)
    pad = [(0, 0)] * (w.ndim - 1) + [(0, Hp - H)]
    return jnp.concatenate([jnp.pad(p, pad) for p in parts], axis=-1)


def prepare_kernel_params(params, dtype=jnp.float32):
    """Pad every gate/hidden block to Hp = round_up(H, 128) lanes and cast MXU
    operands to `dtype`. Padded lanes stay exactly 0 through the recurrence, so
    results match the unpadded computation."""
    H = params["lstm"][0]["w_hh"].shape[0]
    Hp = _round_up(H, 128)
    kp = {"embedding": params["embedding"], "dtype": dtype, "lstm": []}
    for li, layer in enumerate(params["lstm"]):
        w_ih = _pad_gate_cols(layer["w_ih"], H, Hp)                 # (in, 4Hp)
        if li > 0:                         # input is the padded h of prev layer
            w_ih = jnp.pad(w_ih, ((0, Hp - H), (0, 0)))
        w_hh = jnp.pad(_pad_gate_cols(layer["w_hh"], H, Hp),
                       ((0, Hp - H), (0, 0)))                       # (Hp, 4Hp)
        b = _pad_gate_cols(layer["b"][None, :], H, Hp)              # (1, 4Hp)
        kp["lstm"].append({"w_ih": w_ih.astype(dtype),
                           "w_hh": w_hh.astype(dtype),
                           "b": b.astype(jnp.float32)})
        del w_ih, w_hh, b
    w_cls_row = jnp.pad(params["w_cls"][:, 0], (0, Hp - H))[None, :]  # (1, Hp)
    kp["w_cls_row"] = w_cls_row.astype(jnp.float32)
    kp["b_cls"] = params["b_cls"].astype(jnp.float32)
    return kp


def init_params(key, embedding, E, H, L):
    """Logical (PyTorch-layout) parameters."""
    params = {"embedding": embedding, "lstm": []}
    scale = float(1.0 / (H ** 0.5))
    keys = jax.random.split(key, 4 * L + 2)
    in_dim = E
    for l in range(L):
        k0, k1, k2, k3 = keys[4 * l:4 * l + 4]
        w_ih = jax.random.uniform(k0, (in_dim, 4 * H), jnp.float32, -scale, scale)
        w_hh = jax.random.uniform(k1, (H, 4 * H), jnp.float32, -scale, scale)
        b_ih = jax.random.uniform(k2, (4 * H,), jnp.float32, -scale, scale)
        b_hh = jax.random.uniform(k3, (4 * H,), jnp.float32, -scale, scale)
        params["lstm"].append({"w_ih": w_ih, "w_hh": w_hh, "b": b_ih + b_hh})
        in_dim = H
    kw, kb = keys[4 * L:4 * L + 2]
    params["w_cls"] = jax.random.uniform(kw, (H, 1), jnp.float32, -scale, scale)
    params["b_cls"] = jax.random.uniform(kb, (1,), jnp.float32, -scale, scale)
    return params


# ------------------------------ pure-JAX reference -------------------------------
def reference_forward(params, token_ids):
    emb = params["embedding"][token_ids].astype(jnp.float32)        # (B, T, E)
    x = jnp.transpose(emb, (1, 0, 2))                               # (T, B, E)
    B = x.shape[1]
    for layer in params["lstm"]:
        H = layer["w_hh"].shape[0]

        def step(carry, x_t, layer=layer):
            h, c = carry
            gates = x_t @ layer["w_ih"] + h @ layer["w_hh"] + layer["b"]
            i_g, f_g, g_g, o_g = jnp.split(gates, 4, axis=-1)
            i_g = jax.nn.sigmoid(i_g)
            f_g = jax.nn.sigmoid(f_g)
            g_g = jnp.tanh(g_g)
            o_g = jax.nn.sigmoid(o_g)
            c = f_g * c + i_g * g_g
            h = o_g * jnp.tanh(c)
            return (h, c), h

        init = (jnp.zeros((B, H), jnp.float32), jnp.zeros((B, H), jnp.float32))
        _, x = lax.scan(step, init, x)
    h_last = x[-1]
    return jax.nn.sigmoid(h_last @ params["w_cls"] + params["b_cls"])


if __name__ == "__main__":
    key = jax.random.PRNGKey(0)
    k_emb, k_tok, k_param = jax.random.split(key, 3)

    vocab_size, embedding_dim, hidden_dim, num_layers = 100, 32, 32, 2
    batch, seq_len = 2, 8

    embedding = jax.random.normal(k_emb, (vocab_size, embedding_dim),
                                  jnp.float32) * 0.1
    params = init_params(k_param, embedding, embedding_dim, hidden_dim, num_layers)
    token_ids = jax.random.randint(k_tok, (batch, seq_len), 0, vocab_size, jnp.int32)

    ref = reference_forward(params, token_ids)

    # f32 run: tight check against the pure-JAX reference.
    kp32 = prepare_kernel_params(params, dtype=jnp.float32)
    out32 = jax.block_until_ready(lstm_net_forward(kp32, token_ids))
    assert out32.shape == (batch, 1)
    assert jnp.allclose(out32, ref, atol=1e-3), (out32, ref)

    # bf16 storage / MXU-operand run (f32 accumulation + f32 gate math in-kernel).
    kp16 = prepare_kernel_params(params, dtype=jnp.bfloat16)
    out16 = jax.block_until_ready(lstm_net_forward(kp16, token_ids))
    assert out16.shape == (batch, 1)
    assert float(jnp.max(jnp.abs(out16.astype(jnp.float32) - ref))) < 1e-1, (out16, ref)

    print("KERNEL_OK")
</pallas_src>

<mosaic_0001>
module attributes {stable_mosaic.version = 11 : i64} {
  func.func @_lstm_layer_kernel(%arg0: i32, %arg1: memref<16x32xf32, #tpu.memory_space<vmem>>, %arg2: memref<32x512xf32, #tpu.memory_space<vmem>>, %arg3: memref<128x512xf32, #tpu.memory_space<vmem>>, %arg4: memref<1x512xf32, #tpu.memory_space<vmem>>, %arg5: memref<16x128xf32, #tpu.memory_space<vmem>>, %arg6: memref<16x512xf32, #tpu.memory_space<vmem>>, %arg7: memref<2x128xf32, #tpu.memory_space<vmem>>, %arg8: memref<2x128xf32, #tpu.memory_space<vmem>>) attributes {dimension_semantics = [#tpu.dimension_semantics<arbitrary>], iteration_bounds = array<i64: 1>, scalar_prefetch = 0 : i64, scratch_operands = 3 : i64, tpu.core_type = #tpu.core_type<tc>, window_params = [{transform_indices = @transform_0, window_bounds = array<i64: 16, 32>}, {pipeline_mode = #tpu.pipeline_mode<synchronous>, transform_indices = @transform_1, window_bounds = array<i64: 32, 512>}, {pipeline_mode = #tpu.pipeline_mode<synchronous>, transform_indices = @transform_2, window_bounds = array<i64: 128, 512>}, {pipeline_mode = #tpu.pipeline_mode<synchronous>, transform_indices = @transform_3, window_bounds = array<i64: 1, 512>}, {transform_indices = @transform_4, window_bounds = array<i64: 16, 128>}]} {
    %c0_i32 = arith.constant 0 : i32
    %0 = arith.cmpi eq, %arg0, %c0_i32 : i32
    %1 = arith.extui %0 : i1 to i32
    %c0_i32_0 = arith.constant 0 : i32
    %2 = arith.cmpi ne, %1, %c0_i32_0 : i32
    scf.if %2 {
      %cst_145 = arith.constant 0.000000e+00 : f32
      %306 = vector.broadcast %cst_145 : f32 to vector<2x128xf32>
      %c0_146 = arith.constant 0 : index
      %c0_147 = arith.constant 0 : index
      %307 = vector.load %arg7[%c0_146, %c0_147] : memref<2x128xf32, #tpu.memory_space<vmem>>, vector<2x128xf32>
      tpu.vector_store %arg7[%c0_146, %c0_147], %306 {strides = array<i32>} : memref<2x128xf32, #tpu.memory_space<vmem>>, vector<2x128xf32>,
      %cst_148 = arith.constant 0.000000e+00 : f32
      %308 = vector.broadcast %cst_148 : f32 to vector<2x128xf32>
      %c0_149 = arith.constant 0 : index
      %c0_150 = arith.constant 0 : index
      %309 = vector.load %arg8[%c0_149, %c0_150] : memref<2x128xf32, #tpu.memory_space<vmem>>, vector<2x128xf32>
      tpu.vector_store %arg8[%c0_149, %c0_150], %308 {strides = array<i32>} : memref<2x128xf32, #tpu.memory_space<vmem>>, vector<2x128xf32>,
    } else {
    }
    %c0 = arith.constant 0 : index
    %c0_1 = arith.constant 0 : index
    %3 = vector.load %arg1[%c0, %c0_1] : memref<16x32xf32, #tpu.memory_space<vmem>>, vector<16x32xf32>
    %c0_2 = arith.constant 0 : index
    %c0_3 = arith.constant 0 : index
    %4 = vector.load %arg2[%c0_2, %c0_3] : memref<32x512xf32, #tpu.memory_space<vmem>>, vector<32x512xf32>
    %cst = arith.constant dense<0.000000e+00> : vector<16x512xf32>
    %5 = tpu.matmul %3, %4, %cst {dimension_numbers = #tpu.dot_dimension_numbers<[1], [0], [0], [1], [0, 0, 1, 1], [], []>} : vector<16x32xf32>, vector<32x512xf32>, vector<16x512xf32> -> vector<16x512xf32>
    %c0_4 = arith.constant 0 : index
    %c0_5 = arith.constant 0 : index
    %6 = vector.load %arg4[%c0_4, %c0_5] : memref<1x512xf32, #tpu.memory_space<vmem>>, vector<1x512xf32>
    %7 = vector.broadcast %6 : vector<1x512xf32> to vector<16x512xf32>
    %8 = arith.addf %5, %7 : vector<16x512xf32>
    %c0_6 = arith.constant 0 : index
    %c0_7 = arith.constant 0 : index
    %9 = vector.load %arg6[%c0_6, %c0_7] : memref<16x512xf32, #tpu.memory_space<vmem>>, vector<16x512xf32>
    tpu.vector_store %arg6[%c0_6, %c0_7], %8 {strides = array<i32>} : memref<16x512xf32, #tpu.memory_space<vmem>>, vector<16x512xf32>,
    %c0_i32_8 = arith.constant 0 : i32
    %c2_i32 = arith.constant 2 : i32
    %10 = arith.muli %c0_i32_8, %c2_i32 : i32
    %c0_9 = arith.constant 0 : index
    %c0_10 = arith.constant 0 : index
    %11 = vector.load %arg7[%c0_9, %c0_10] : memref<2x128xf32, #tpu.memory_space<vmem>>, vector<2x128xf32>
    %c0_11 = arith.constant 0 : index
    %c0_12 = arith.constant 0 : index
    %12 = vector.load %arg8[%c0_11, %c0_12] : memref<2x128xf32, #tpu.memory_space<vmem>>, vector<2x128xf32>
    %13 = arith.index_cast %10 : i32 to index
    %c0_13 = arith.constant 0 : index
    %14 = vector.load %arg6[%13, %c0_13] : memref<16x512xf32, #tpu.memory_space<vmem>>, vector<2x512xf32>
    %c0_14 = arith.constant 0 : index
    %c0_15 = arith.constant 0 : index
    %15 = vector.load %arg3[%c0_14, %c0_15] : memref<128x512xf32, #tpu.memory_space<vmem>>, vector<128x512xf32>
    %cst_16 = arith.constant dense<0.000000e+00> : vector<2x512xf32>
    %16 = tpu.matmul %11, %15, %cst_16 {dimension_numbers = #tpu.dot_dimension_numbers<[1], [0], [0], [1], [0, 0, 1, 1], [], []>} : vector<2x128xf32>, vector<128x512xf32>, vector<2x512xf32> -> vector<2x512xf32>
    %17 = arith.addf %14, %16 : vector<2x512xf32>
    %18 = vector.extract_strided_slice %17 {offsets = [0, 0], sizes = [2, 128], strides = [1, 1]} : vector<2x512xf32> to vector<2x128xf32>
    %19 = arith.negf %18 : vector<2x128xf32>
    %20 = math.exp %19 : vector<2x128xf32>
    %cst_17 = arith.constant 1.000000e+00 : f32
    %21 = vector.broadcast %cst_17 : f32 to vector<2x128xf32>
    %22 = arith.addf %21, %20 : vector<2x128xf32>
    %23 = arith.divf %21, %22 : vector<2x128xf32>
    %24 = vector.extract_strided_slice %17 {offsets = [0, 128], sizes = [2, 128], strides = [1, 1]} : vector<2x512xf32> to vector<2x128xf32>
    %25 = arith.negf %24 : vector<2x128xf32>
    %26 = math.exp %25 : vector<2x128xf32>
    %cst_18 = arith.constant 1.000000e+00 : f32
    %27 = vector.broadcast %cst_18 : f32 to vector<2x128xf32>
    %28 = arith.addf %27, %26 : vector<2x128xf32>
    %29 = arith.divf %27, %28 : vector<2x128xf32>
    %30 = vector.extract_strided_slice %17 {offsets = [0, 256], sizes = [2, 128], strides = [1, 1]} : vector<2x512xf32> to vector<2x128xf32>
    %31 = math.tanh %30 : vector<2x128xf32>
    %32 = vector.extract_strided_slice %17 {offsets = [0, 384], sizes = [2, 128], strides = [1, 1]} : vector<2x512xf32> to vector<2x128xf32>
    %33 = arith.negf %32 : vector<2x128xf32>
    %34 = math.exp %33 : vector<2x128xf32>
    %cst_19 = arith.constant 1.000000e+00 : f32
    %35 = vector.broadcast %cst_19 : f32 to vector<2x128xf32>
    %36 = arith.addf %35, %34 : vector<2x128xf32>
    %37 = arith.divf %35, %36 : vector<2x128xf32>
    %38 = arith.mulf %29, %12 : vector<2x128xf32>
    %39 = arith.mulf %23, %31 : vector<2x128xf32>
    %40 = arith.addf %38, %39 : vector<2x128xf32>
    %41 = math.tanh %40 : vector<2x128xf32>
    %42 = arith.mulf %37, %41 : vector<2x128xf32>
    %c0_20 = arith.constant 0 : index
    %c0_21 = arith.constant 0 : index
    %43 = vector.load %arg7[%c0_20, %c0_21] : memref<2x128xf32, #tpu.memory_space<vmem>>, vector<2x128xf32>
    tpu.vector_store %arg7[%c0_20, %c0_21], %42 {strides = array<i32>} : memref<2x128xf32, #tpu.memory_space<vmem>>, vector<2x128xf32>,
    %c0_22 = arith.constant 0 : index
    %c0_23 = arith.constant 0 : index
    %44 = vector.load %arg8[%c0_22, %c0_23] : memref<2x128xf32, #tpu.memory_space<vmem>>, vector<2x128xf32>
    tpu.vector_store %arg8[%c0_22, %c0_23], %40 {strides = array<i32>} : memref<2x128xf32, #tpu.memory_space<vmem>>, vector<2x128xf32>,
    %45 = arith.index_cast %10 : i32 to index
    %c0_24 = arith.constant 0 : index
    %46 = vector.load %arg5[%45, %c0_24] : memref<16x128xf32, #tpu.memory_space<vmem>>, vector<2x128xf32>
    tpu.vector_store %arg5[%45, %c0_24], %42 {strides = array<i32>} : memref<16x128xf32, #tpu.memory_space<vmem>>, vector<2x128xf32>,
    %c1_i32 = arith.constant 1 : i32
    %c2_i32_25 = arith.constant 2 : i32
    %47 = arith.muli %c1_i32, %c2_i32_25 : i32
    %c0_26 = arith.constant 0 : index
    %c0_27 = arith.constant 0 : index
    %48 = vector.load %arg7[%c0_26, %c0_27] : memref<2x128xf32, #tpu.memory_space<vmem>>, vector<2x128xf32>
    %c0_28 = arith.constant 0 : index
    %c0_29 = arith.constant 0 : index
    %49 = vector.load %arg8[%c0_28, %c0_29] : memref<2x128xf32, #tpu.memory_space<vmem>>, vector<2x128xf32>
    %50 = arith.index_cast %47 : i32 to index
    %c0_30 = arith.constant 0 : index
    %51 = vector.load %arg6[%50, %c0_30] : memref<16x512xf32, #tpu.memory_space<vmem>>, vector<2x512xf32>
    %c0_31 = arith.constant 0 : index
    %c0_32 = arith.constant 0 : index
    %52 = vector.load %arg3[%c0_31, %c0_32] : memref<128x512xf32, #tpu.memory_space<vmem>>, vector<128x512xf32>
    %cst_33 = arith.constant dense<0.000000e+00> : vector<2x512xf32>
    %53 = tpu.matmul %48, %52, %cst_33 {dimension_numbers = #tpu.dot_dimension_numbers<[1], [0], [0], [1], [0, 0, 1, 1], [], []>} : vector<2x128xf32>, vector<128x512xf32>, vector<2x512xf32> -> vector<2x512xf32>
    %54 = arith.addf %51, %53 : vector<2x512xf32>
    %55 = vector.extract_strided_slice %54 {offsets = [0, 0], sizes = [2, 128], strides = [1, 1]} : vector<2x512xf32> to vector<2x128xf32>
    %56 = arith.negf %55 : vector<2x128xf32>
    %57 = math.exp %56 : vector<2x128xf32>
    %cst_34 = arith.constant 1.000000e+00 : f32
    %58 = vector.broadcast %cst_34 : f32 to vector<2x128xf32>
    %59 = arith.addf %58, %57 : vector<2x128xf32>
    %60 = arith.divf %58, %59 : vector<2x128xf32>
    %61 = vector.extract_strided_slice %54 {offsets = [0, 128], sizes = [2, 128], strides = [1, 1]} : vector<2x512xf32> to vector<2x128xf32>
    %62 = arith.negf %61 : vector<2x128xf32>
    %63 = math.exp %62 : vector<2x128xf32>
    %cst_35 = arith.constant 1.000000e+00 : f32
    %64 = vector.broadcast %cst_35 : f32 to vector<2x128xf32>
    %65 = arith.addf %64, %63 : vector<2x128xf32>
    %66 = arith.divf %64, %65 : vector<2x128xf32>
    %67 = vector.extract_strided_slice %54 {offsets = [0, 256], sizes = [2, 128], strides = [1, 1]} : vector<2x512xf32> to vector<2x128xf32>
    %68 = math.tanh %67 : vector<2x128xf32>
    %69 = vector.extract_strided_slice %54 {offsets = [0, 384], sizes = [2, 128], strides = [1, 1]} : vector<2x512xf32> to vector<2x128xf32>
    %70 = arith.negf %69 : vector<2x128xf32>
    %71 = math.exp %70 : vector<2x128xf32>
    %cst_36 = arith.constant 1.000000e+00 : f32
    %72 = vector.broadcast %cst_36 : f32 to vector<2x128xf32>
    %73 = arith.addf %72, %71 : vector<2x128xf32>
    %74 = arith.divf %72, %73 : vector<2x128xf32>
    %75 = arith.mulf %66, %49 : vector<2x128xf32>
    %76 = arith.mulf %60, %68 : vector<2x128xf32>
    %77 = arith.addf %75, %76 : vector<2x128xf32>
    %78 = math.tanh %77 : vector<2x128xf32>
    %79 = arith.mulf %74, %78 : vector<2x128xf32>
    %c0_37 = arith.constant 0 : index
    %c0_38 = arith.constant 0 : index
    %80 = vector.load %arg7[%c0_37, %c0_38] : memref<2x128xf32, #tpu.memory_space<vmem>>, vector<2x128xf32>
    tpu.vector_store %arg7[%c0_37, %c0_38], %79 {strides = array<i32>} : memref<2x128xf32, #tpu.memory_space<vmem>>, vector<2x128xf32>,
    %c0_39 = arith.constant 0 : index
    %c0_40 = arith.constant 0 : index
    %81 = vector.load %arg8[%c0_39, %c0_40] : memref<2x128xf32, #tpu.memory_space<vmem>>, vector<2x128xf32>
    tpu.vector_store %arg8[%c0_39, %c0_40], %77 {strides = array<i32>} : memref<2x128xf32, #tpu.memory_space<vmem>>, vector<2x128xf32>,
    %82 = arith.index_cast %47 : i32 to index
    %c0_41 = arith.constant 0 : index
    %83 = vector.load %arg5[%82, %c0_41] : memref<16x128xf32, #tpu.memory_space<vmem>>, vector<2x128xf32>
    tpu.vector_store %arg5[%82, %c0_41], %79 {strides = array<i32>} : memref<16x128xf32, #tpu.memory_space<vmem>>, vector<2x128xf32>,
    %c2_i32_42 = arith.constant 2 : i32
    %c2_i32_43 = arith.constant 2 : i32
    %84 = arith.muli %c2_i32_42, %c2_i32_43 : i32
    %c0_44 = arith.constant 0 : index
    %c0_45 = arith.constant 0 : index
    %85 = vector.load %arg7[%c0_44, %c0_45] : memref<2x128xf32, #tpu.memory_space<vmem>>, vector<2x128xf32>
    %c0_46 = arith.constant 0 : index
    %c0_47 = arith.constant 0 : index
    %86 = vector.load %arg8[%c0_46, %c0_47] : memref<2x128xf32, #tpu.memory_space<vmem>>, vector<2x128xf32>
    %87 = arith.index_cast %84 : i32 to index
    %c0_48 = arith.constant 0 : index
    %88 = vector.load %arg6[%87, %c0_48] : memref<16x512xf32, #tpu.memory_space<vmem>>, vector<2x512xf32>
    %c0_49 = arith.constant 0 : index
    %c0_50 = arith.constant 0 : index
    %89 = vector.load %arg3[%c0_49, %c0_50] : memref<128x512xf32, #tpu.memory_space<vmem>>, vector<128x512xf32>
    %cst_51 = arith.constant dense<0.000000e+00> : vector<2x512xf32>
    %90 = tpu.matmul %85, %89, %cst_51 {dimension_numbers = #tpu.dot_dimension_numbers<[1], [0], [0], [1], [0, 0, 1, 1], [], []>} : vector<2x128xf32>, vector<128x512xf32>, vector<2x512xf32> -> vector<2x512xf32>
    %91 = arith.addf %88, %90 : vector<2x512xf32>
    %92 = vector.extract_strided_slice %91 {offsets = [0, 0], sizes = [2, 128], strides = [1, 1]} : vector<2x512xf32> to vector<2x128xf32>
    %93 = arith.negf %92 : vector<2x128xf32>
    %94 = math.exp %93 : vector<2x128xf32>
    %cst_52 = arith.constant 1.000000e+00 : f32
    %95 = vector.broadcast %cst_52 : f32 to vector<2x128xf32>
    %96 = arith.addf %95, %94 : vector<2x128xf32>
    %97 = arith.divf %95, %96 : vector<2x128xf32>
    %98 = vector.extract_strided_slice %91 {offsets = [0, 128], sizes = [2, 128], strides = [1, 1]} : vector<2x512xf32> to vector<2x128xf32>
    %99 = arith.negf %98 : vector<2x128xf32>
    %100 = math.exp %99 : vector<2x128xf32>
    %cst_53 = arith.constant 1.000000e+00 : f32
    %101 = vector.broadcast %cst_53 : f32 to vector<2x128xf32>
    %102 = arith.addf %101, %100 : vector<2x128xf32>
    %103 = arith.divf %101, %102 : vector<2x128xf32>
    %104 = vector.extract_strided_slice %91 {offsets = [0, 256], sizes = [2, 128], strides = [1, 1]} : vector<2x512xf32> to vector<2x128xf32>
    %105 = math.tanh %104 : vector<2x128xf32>
    %106 = vector.extract_strided_slice %91 {offsets = [0, 384], sizes = [2, 128], strides = [1, 1]} : vector<2x512xf32> to vector<2x128xf32>
    %107 = arith.negf %106 : vector<2x128xf32>
    %108 = math.exp %107 : vector<2x128xf32>
    %cst_54 = arith.constant 1.000000e+00 : f32
    %109 = vector.broadcast %cst_54 : f32 to vector<2x128xf32>
    %110 = arith.addf %109, %108 : vector<2x128xf32>
    %111 = arith.divf %109, %110 : vector<2x128xf32>
    %112 = arith.mulf %103, %86 : vector<2x128xf32>
    %113 = arith.mulf %97, %105 : vector<2x128xf32>
    %114 = arith.addf %112, %113 : vector<2x128xf32>
    %115 = math.tanh %114 : vector<2x128xf32>
    %116 = arith.mulf %111, %115 : vector<2x128xf32>
    %c0_55 = arith.constant 0 : index
    %c0_56 = arith.constant 0 : index
    %117 = vector.load %arg7[%c0_55, %c0_56] : memref<2x128xf32, #tpu.memory_space<vmem>>, vector<2x128xf32>
    tpu.vector_store %arg7[%c0_55, %c0_56], %116 {strides = array<i32>} : memref<2x128xf32, #tpu.memory_space<vmem>>, vector<2x128xf32>,
    %c0_57 = arith.constant 0 : index
    %c0_58 = arith.constant 0 : index
    %118 = vector.load %arg8[%c0_57, %c0_58] : memref<2x128xf32, #tpu.memory_space<vmem>>, vector<2x128xf32>
    tpu.vector_store %arg8[%c0_57, %c0_58], %114 {strides = array<i32>} : memref<2x128xf32, #tpu.memory_space<vmem>>, vector<2x128xf32>,
    %119 = arith.index_cast %84 : i32 to index
    %c0_59 = arith.constant 0 : index
    %120 = vector.load %arg5[%119, %c0_59] : memref<16x128xf32, #tpu.memory_space<vmem>>, vector<2x128xf32>
    tpu.vector_store %arg5[%119, %c0_59], %116 {strides = array<i32>} : memref<16x128xf32, #tpu.memory_space<vmem>>, vector<2x128xf32>,
    %c3_i32 = arith.constant 3 : i32
    %c2_i32_60 = arith.constant 2 : i32
    %121 = arith.muli %c3_i32, %c2_i32_60 : i32
    %c0_61 = arith.constant 0 : index
    %c0_62 = arith.constant 0 : index
    %122 = vector.load %arg7[%c0_61, %c0_62] : memref<2x128xf32, #tpu.memory_space<vmem>>, vector<2x128xf32>
    %c0_63 = arith.constant 0 : index
    %c0_64 = arith.constant 0 : index
    %123 = vector.load %arg8[%c0_63, %c0_64] : memref<2x128xf32, #tpu.memory_space<vmem>>, vector<2x128xf32>
    %124 = arith.index_cast %121 : i32 to index
    %c0_65 = arith.constant 0 : index
    %125 = vector.load %arg6[%124, %c0_65] : memref<16x512xf32, #tpu.memory_space<vmem>>, vector<2x512xf32>
    %c0_66 = arith.constant 0 : index
    %c0_67 = arith.constant 0 : index
    %126 = vector.load %arg3[%c0_66, %c0_67] : memref<128x512xf32, #tpu.memory_space<vmem>>, vector<128x512xf32>
    %cst_68 = arith.constant dense<0.000000e+00> : vector<2x512xf32>
    %127 = tpu.matmul %122, %126, %cst_68 {dimension_numbers = #tpu.dot_dimension_numbers<[1], [0], [0], [1], [0, 0, 1, 1], [], []>} : vector<2x128xf32>, vector<128x512xf32>, vector<2x512xf32> -> vector<2x512xf32>
    %128 = arith.addf %125, %127 : vector<2x512xf32>
    %129 = vector.extract_strided_slice %128 {offsets = [0, 0], sizes = [2, 128], strides = [1, 1]} : vector<2x512xf32> to vector<2x128xf32>
    %130 = arith.negf %129 : vector<2x128xf32>
    %131 = math.exp %130 : vector<2x128xf32>
    %cst_69 = arith.constant 1.000000e+00 : f32
    %132 = vector.broadcast %cst_69 : f32 to vector<2x128xf32>
    %133 = arith.addf %132, %131 : vector<2x128xf32>
    %134 = arith.divf %132, %133 : vector<2x128xf32>
    %135 = vector.extract_strided_slice %128 {offsets = [0, 128], sizes = [2, 128], strides = [1, 1]} : vector<2x512xf32> to vector<2x128xf32>
    %136 = arith.negf %135 : vector<2x128xf32>
    %137 = math.exp %136 : vector<2x128xf32>
    %cst_70 = arith.constant 1.000000e+00 : f32
    %138 = vector.broadcast %cst_70 : f32 to vector<2x128xf32>
    %139 = arith.addf %138, %137 : vector<2x128xf32>
    %140 = arith.divf %138, %139 : vector<2x128xf32>
    %141 = vector.extract_strided_slice %128 {offsets = [0, 256], sizes = [2, 128], strides = [1, 1]} : vector<2x512xf32> to vector<2x128xf32>
    %142 = math.tanh %141 : vector<2x128xf32>
    %143 = vector.extract_strided_slice %128 {offsets = [0, 384], sizes = [2, 128], strides = [1, 1]} : vector<2x512xf32> to vector<2x128xf32>
    %144 = arith.negf %143 : vector<2x128xf32>
    %145 = math.exp %144 : vector<2x128xf32>
    %cst_71 = arith.constant 1.000000e+00 : f32
    %146 = vector.broadcast %cst_71 : f32 to vector<2x128xf32>
    %147 = arith.addf %146, %145 : vector<2x128xf32>
    %148 = arith.divf %146, %147 : vector<2x128xf32>
    %149 = arith.mulf %140, %123 : vector<2x128xf32>
    %150 = arith.mulf %134, %142 : vector<2x128xf32>
    %151 = arith.addf %149, %150 : vector<2x128xf32>
    %152 = math.tanh %151 : vector<2x128xf32>
    %153 = arith.mulf %148, %152 : vector<2x128xf32>
    %c0_72 = arith.constant 0 : index
    %c0_73 = arith.constant 0 : index
    %154 = vector.load %arg7[%c0_72, %c0_73] : memref<2x128xf32, #tpu.memory_space<vmem>>, vector<2x128xf32>
    tpu.vector_store %arg7[%c0_72, %c0_73], %153 {strides = array<i32>} : memref<2x128xf32, #tpu.memory_space<vmem>>, vector<2x128xf32>,
    %c0_74 = arith.constant 0 : index
    %c0_75 = arith.constant 0 : index
    %155 = vector.load %arg8[%c0_74, %c0_75] : memref<2x128xf32, #tpu.memory_space<vmem>>, vector<2x128xf32>
    tpu.vector_store %arg8[%c0_74, %c0_75], %151 {strides = array<i32>} : memref<2x128xf32, #tpu.memory_space<vmem>>, vector<2x128xf32>,
    %156 = arith.index_cast %121 : i32 to index
    %c0_76 = arith.constant 0 : index
    %157 = vector.load %arg5[%156, %c0_76] : memref<16x128xf32, #tpu.memory_space<vmem>>, vector<2x128xf32>
    tpu.vector_store %arg5[%156, %c0_76], %153 {strides = array<i32>} : memref<16x128xf32, #tpu.memory_space<vmem>>, vector<2x128xf32>,
    %c4_i32 = arith.constant 4 : i32
    %c2_i32_77 = arith.constant 2 : i32
    %158 = arith.muli %c4_i32, %c2_i32_77 : i32
    %c0_78 = arith.constant 0 : index
    %c0_79 = arith.constant 0 : index
    %159 = vector.load %arg7[%c0_78, %c0_79] : memref<2x128xf32, #tpu.memory_space<vmem>>, vector<2x128xf32>
    %c0_80 = arith.constant 0 : index
    %c0_81 = arith.constant 0 : index
    %160 = vector.load %arg8[%c0_80, %c0_81] : memref<2x128xf32, #tpu.memory_space<vmem>>, vector<2x128xf32>
    %161 = arith.index_cast %158 : i32 to index
    %c0_82 = arith.constant 0 : index
    %162 = vector.load %arg6[%161, %c0_82] : memref<16x512xf32, #tpu.memory_space<vmem>>, vector<2x512xf32>
    %c0_83 = arith.constant 0 : index
    %c0_84 = arith.constant 0 : index
    %163 = vector.load %arg3[%c0_83, %c0_84] : memref<128x512xf32, #tpu.memory_space<vmem>>, vector<128x512xf32>
    %cst_85 = arith.constant dense<0.000000e+00> : vector<2x512xf32>
    %164 = tpu.matmul %159, %163, %cst_85 {dimension_numbers = #tpu.dot_dimension_numbers<[1], [0], [0], [1], [0, 0, 1, 1], [], []>} : vector<2x128xf32>, vector<128x512xf32>, vector<2x512xf32> -> vector<2x512xf32>
    %165 = arith.addf %162, %164 : vector<2x512xf32>
    %166 = vector.extract_strided_slice %165 {offsets = [0, 0], sizes = [2, 128], strides = [1, 1]} : vector<2x512xf32> to vector<2x128xf32>
    %167 = arith.negf %166 : vector<2x128xf32>
    %168 = math.exp %167 : vector<2x128xf32>
    %cst_86 = arith.constant 1.000000e+00 : f32
    %169 = vector.broadcast %cst_86 : f32 to vector<2x128xf32>
    %170 = arith.addf %169, %168 : vector<2x128xf32>
    %171 = arith.divf %169, %170 : vector<2x128xf32>
    %172 = vector.extract_strided_slice %165 {offsets = [0, 128], sizes = [2, 128], strides = [1, 1]} : vector<2x512xf32> to vector<2x128xf32>
    %173 = arith.negf %172 : vector<2x128xf32>
    %174 = math.exp %173 : vector<2x128xf32>
    %cst_87 = arith.constant 1.000000e+00 : f32
    %175 = vector.broadcast %cst_87 : f32 to vector<2x128xf32>
    %176 = arith.addf %175, %174 : vector<2x128xf32>
    %177 = arith.divf %175, %176 : vector<2x128xf32>
    %178 = vector.extract_strided_slice %165 {offsets = [0, 256], sizes = [2, 128], strides = [1, 1]} : vector<2x512xf32> to vector<2x128xf32>
    %179 = math.tanh %178 : vector<2x128xf32>
    %180 = vector.extract_strided_slice %165 {offsets = [0, 384], sizes = [2, 128], strides = [1, 1]} : vector<2x512xf32> to vector<2x128xf32>
    %181 = arith.negf %180 : vector<2x128xf32>
    %182 = math.exp %181 : vector<2x128xf32>
    %cst_88 = arith.constant 1.000000e+00 : f32
    %183 = vector.broadcast %cst_88 : f32 to vector<2x128xf32>
    %184 = arith.addf %183, %182 : vector<2x128xf32>
    %185 = arith.divf %183, %184 : vector<2x128xf32>
    %186 = arith.mulf %177, %160 : vector<2x128xf32>
    %187 = arith.mulf %171, %179 : vector<2x128xf32>
    %188 = arith.addf %186, %187 : vector<2x128xf32>
    %189 = math.tanh %188 : vector<2x128xf32>
    %190 = arith.mulf %185, %189 : vector<2x128xf32>
    %c0_89 = arith.constant 0 : index
    %c0_90 = arith.constant 0 : index
    %191 = vector.load %arg7[%c0_89, %c0_90] : memref<2x128xf32, #tpu.memory_space<vmem>>, vector<2x128xf32>
    tpu.vector_store %arg7[%c0_89, %c0_90], %190 {strides = array<i32>} : memref<2x128xf32, #tpu.memory_space<vmem>>, vector<2x128xf32>,
    %c0_91 = arith.constant 0 : index
    %c0_92 = arith.constant 0 : index
    %192 = vector.load %arg8[%c0_91, %c0_92] : memref<2x128xf32, #tpu.memory_space<vmem>>, vector<2x128xf32>
    tpu.vector_store %arg8[%c0_91, %c0_92], %188 {strides = array<i32>} : memref<2x128xf32, #tpu.memory_space<vmem>>, vector<2x128xf32>,
    %193 = arith.index_cast %158 : i32 to index
    %c0_93 = arith.constant 0 : index
    %194 = vector.load %arg5[%193, %c0_93] : memref<16x128xf32, #tpu.memory_space<vmem>>, vector<2x128xf32>
    tpu.vector_store %arg5[%193, %c0_93], %190 {strides = array<i32>} : memref<16x128xf32, #tpu.memory_space<vmem>>, vector<2x128xf32>,
    %c5_i32 = arith.constant 5 : i32
    %c2_i32_94 = arith.constant 2 : i32
    %195 = arith.muli %c5_i32, %c2_i32_94 : i32
    %c0_95 = arith.constant 0 : index
    %c0_96 = arith.constant 0 : index
    %196 = vector.load %arg7[%c0_95, %c0_96] : memref<2x128xf32, #tpu.memory_space<vmem>>, vector<2x128xf32>
    %c0_97 = arith.constant 0 : index
    %c0_98 = arith.constant 0 : index
    %197 = vector.load %arg8[%c0_97, %c0_98] : memref<2x128xf32, #tpu.memory_space<vmem>>, vector<2x128xf32>
    %198 = arith.index_cast %195 : i32 to index
    %c0_99 = arith.constant 0 : index
    %199 = vector.load %arg6[%198, %c0_99] : memref<16x512xf32, #tpu.memory_space<vmem>>, vector<2x512xf32>
    %c0_100 = arith.constant 0 : index
    %c0_101 = arith.constant 0 : index
    %200 = vector.load %arg3[%c0_100, %c0_101] : memref<128x512xf32, #tpu.memory_space<vmem>>, vector<128x512xf32>
    %cst_102 = arith.constant dense<0.000000e+00> : vector<2x512xf32>
    %201 = tpu.matmul %196, %200, %cst_102 {dimension_numbers = #tpu.dot_dimension_numbers<[1], [0], [0], [1], [0, 0, 1, 1], [], []>} : vector<2x128xf32>, vector<128x512xf32>, vector<2x512xf32> -> vector<2x512xf32>
    %202 = arith.addf %199, %201 : vector<2x512xf32>
    %203 = vector.extract_strided_slice %202 {offsets = [0, 0], sizes = [2, 128], strides = [1, 1]} : vector<2x512xf32> to vector<2x128xf32>
    %204 = arith.negf %203 : vector<2x128xf32>
    %205 = math.exp %204 : vector<2x128xf32>
    %cst_103 = arith.constant 1.000000e+00 : f32
    %206 = vector.broadcast %cst_103 : f32 to vector<2x128xf32>
    %207 = arith.addf %206, %205 : vector<2x128xf32>
    %208 = arith.divf %206, %207 : vector<2x128xf32>
    %209 = vector.extract_strided_slice %202 {offsets = [0, 128], sizes = [2, 128], strides = [1, 1]} : vector<2x512xf32> to vector<2x128xf32>
    %210 = arith.negf %209 : vector<2x128xf32>
    %211 = math.exp %210 : vector<2x128xf32>
    %cst_104 = arith.constant 1.000000e+00 : f32
    %212 = vector.broadcast %cst_104 : f32 to vector<2x128xf32>
    %213 = arith.addf %212, %211 : vector<2x128xf32>
    %214 = arith.divf %212, %213 : vector<2x128xf32>
    %215 = vector.extract_strided_slice %202 {offsets = [0, 256], sizes = [2, 128], strides = [1, 1]} : vector<2x512xf32> to vector<2x128xf32>
    %216 = math.tanh %215 : vector<2x128xf32>
    %217 = vector.extract_strided_slice %202 {offsets = [0, 384], sizes = [2, 128], strides = [1, 1]} : vector<2x512xf32> to vector<2x128xf32>
    %218 = arith.negf %217 : vector<2x128xf32>
    %219 = math.exp %218 : vector<2x128xf32>
    %cst_105 = arith.constant 1.000000e+00 : f32
    %220 = vector.broadcast %cst_105 : f32 to vector<2x128xf32>
    %221 = arith.addf %220, %219 : vector<2x128xf32>
    %222 = arith.divf %220, %221 : vector<2x128xf32>
    %223 = arith.mulf %214, %197 : vector<2x128xf32>
    %224 = arith.mulf %208, %216 : vector<2x128xf32>
    %225 = arith.addf %223, %224 : vector<2x128xf32>
    %226 = math.tanh %225 : vector<2x128xf32>
    %227 = arith.mulf %222, %226 : vector<2x128xf32>
    %c0_106 = arith.constant 0 : index
    %c0_107 = arith.constant 0 : index
    %228 = vector.load %arg7[%c0_106, %c0_107] : memref<2x128xf32, #tpu.memory_space<vmem>>, vector<2x128xf32>
    tpu.vector_store %arg7[%c0_106, %c0_107], %227 {strides = array<i32>} : memref<2x128xf32, #tpu.memory_space<vmem>>, vector<2x128xf32>,
    %c0_108 = arith.constant 0 : index
    %c0_109 = arith.constant 0 : index
    %229 = vector.load %arg8[%c0_108, %c0_109] : memref<2x128xf32, #tpu.memory_space<vmem>>, vector<2x128xf32>
    tpu.vector_store %arg8[%c0_108, %c0_109], %225 {strides = array<i32>} : memref<2x128xf32, #tpu.memory_space<vmem>>, vector<2x128xf32>,
    %230 = arith.index_cast %195 : i32 to index
    %c0_110 = arith.constant 0 : index
    %231 = vector.load %arg5[%230, %c0_110] : memref<16x128xf32, #tpu.memory_space<vmem>>, vector<2x128xf32>
    tpu.vector_store %arg5[%230, %c0_110], %227 {strides = array<i32>} : memref<16x128xf32, #tpu.memory_space<vmem>>, vector<2x128xf32>,
    %c6_i32 = arith.constant 6 : i32
    %c2_i32_111 = arith.constant 2 : i32
    %232 = arith.muli %c6_i32, %c2_i32_111 : i32
    %c0_112 = arith.constant 0 : index
    %c0_113 = arith.constant 0 : index
    %233 = vector.load %arg7[%c0_112, %c0_113] : memref<2x128xf32, #tpu.memory_space<vmem>>, vector<2x128xf32>
    %c0_114 = arith.constant 0 : index
    %c0_115 = arith.constant 0 : index
    %234 = vector.load %arg8[%c0_114, %c0_115] : memref<2x128xf32, #tpu.memory_space<vmem>>, vector<2x128xf32>
    %235 = arith.index_cast %232 : i32 to index
    %c0_116 = arith.constant 0 : index
    %236 = vector.load %arg6[%235, %c0_116] : memref<16x512xf32, #tpu.memory_space<vmem>>, vector<2x512xf32>
    %c0_117 = arith.constant 0 : index
    %c0_118 = arith.constant 0 : index
    %237 = vector.load %arg3[%c0_117, %c0_118] : memref<128x512xf32, #tpu.memory_space<vmem>>, vector<128x512xf32>
    %cst_119 = arith.constant dense<0.000000e+00> : vector<2x512xf32>
    %238 = tpu.matmul %233, %237, %cst_119 {dimension_numbers = #tpu.dot_dimension_numbers<[1], [0], [0], [1], [0, 0, 1, 1], [], []>} : vector<2x128xf32>, vector<128x512xf32>, vector<2x512xf32> -> vector<2x512xf32>
    %239 = arith.addf %236, %238 : vector<2x512xf32>
    %240 = vector.extract_strided_slice %239 {offsets = [0, 0], sizes = [2, 128], strides = [1, 1]} : vector<2x512xf32> to vector<2x128xf32>
    %241 = arith.negf %240 : vector<2x128xf32>
    %242 = math.exp %241 : vector<2x128xf32>
    %cst_120 = arith.constant 1.000000e+00 : f32
    %243 = vector.broadcast %cst_120 : f32 to vector<2x128xf32>
    %244 = arith.addf %243, %242 : vector<2x128xf32>
    %245 = arith.divf %243, %244 : vector<2x128xf32>
    %246 = vector.extract_strided_slice %239 {offsets = [0, 128], sizes = [2, 128], strides = [1, 1]} : vector<2x512xf32> to vector<2x128xf32>
    %247 = arith.negf %246 : vector<2x128xf32>
    %248 = math.exp %247 : vector<2x128xf32>
    %cst_121 = arith.constant 1.000000e+00 : f32
    %249 = vector.broadcast %cst_121 : f32 to vector<2x128xf32>
    %250 = arith.addf %249, %248 : vector<2x128xf32>
    %251 = arith.divf %249, %250 : vector<2x128xf32>
    %252 = vector.extract_strided_slice %239 {offsets = [0, 256], sizes = [2, 128], strides = [1, 1]} : vector<2x512xf32> to vector<2x128xf32>
    %253 = math.tanh %252 : vector<2x128xf32>
    %254 = vector.extract_strided_slice %239 {offsets = [0, 384], sizes = [2, 128], strides = [1, 1]} : vector<2x512xf32> to vector<2x128xf32>
    %255 = arith.negf %254 : vector<2x128xf32>
    %256 = math.exp %255 : vector<2x128xf32>
    %cst_122 = arith.constant 1.000000e+00 : f32
    %257 = vector.broadcast %cst_122 : f32 to vector<2x128xf32>
    %258 = arith.addf %257, %256 : vector<2x128xf32>
    %259 = arith.divf %257, %258 : vector<2x128xf32>
    %260 = arith.mulf %251, %234 : vector<2x128xf32>
    %261 = arith.mulf %245, %253 : vector<2x128xf32>
    %262 = arith.addf %260, %261 : vector<2x128xf32>
    %263 = math.tanh %262 : vector<2x128xf32>
    %264 = arith.mulf %259, %263 : vector<2x128xf32>
    %c0_123 = arith.constant 0 : index
    %c0_124 = arith.constant 0 : index
    %265 = vector.load %arg7[%c0_123, %c0_124] : memref<2x128xf32, #tpu.memory_space<vmem>>, vector<2x128xf32>
    tpu.vector_store %arg7[%c0_123, %c0_124], %264 {strides = array<i32>} : memref<2x128xf32, #tpu.memory_space<vmem>>, vector<2x128xf32>,
    %c0_125 = arith.constant 0 : index
    %c0_126 = arith.constant 0 : index
    %266 = vector.load %arg8[%c0_125, %c0_126] : memref<2x128xf32, #tpu.memory_space<vmem>>, vector<2x128xf32>
    tpu.vector_store %arg8[%c0_125, %c0_126], %262 {strides = array<i32>} : memref<2x128xf32, #tpu.memory_space<vmem>>, vector<2x128xf32>,
    %267 = arith.index_cast %232 : i32 to index
    %c0_127 = arith.constant 0 : index
    %268 = vector.load %arg5[%267, %c0_127] : memref<16x128xf32, #tpu.memory_space<vmem>>, vector<2x128xf32>
    tpu.vector_store %arg5[%267, %c0_127], %264 {strides = array<i32>} : memref<16x128xf32, #tpu.memory_space<vmem>>, vector<2x128xf32>,
    %c7_i32 = arith.constant 7 : i32
    %c2_i32_128 = arith.constant 2 : i32
    %269 = arith.muli %c7_i32, %c2_i32_128 : i32
    %c0_129 = arith.constant 0 : index
    %c0_130 = arith.constant 0 : index
    %270 = vector.load %arg7[%c0_129, %c0_130] : memref<2x128xf32, #tpu.memory_space<vmem>>, vector<2x128xf32>
    %c0_131 = arith.constant 0 : index
    %c0_132 = arith.constant 0 : index
    %271 = vector.load %arg8[%c0_131, %c0_132] : memref<2x128xf32, #tpu.memory_space<vmem>>, vector<2x128xf32>
    %272 = arith.index_cast %269 : i32 to index
    %c0_133 = arith.constant 0 : index
    %273 = vector.load %arg6[%272, %c0_133] : memref<16x512xf32, #tpu.memory_space<vmem>>, vector<2x512xf32>
    %c0_134 = arith.constant 0 : index
    %c0_135 = arith.constant 0 : index
    %274 = vector.load %arg3[%c0_134, %c0_135] : memref<128x512xf32, #tpu.memory_space<vmem>>, vector<128x512xf32>
    %cst_136 = arith.constant dense<0.000000e+00> : vector<2x512xf32>
    %275 = tpu.matmul %270, %274, %cst_136 {dimension_numbers = #tpu.dot_dimension_numbers<[1], [0], [0], [1], [0, 0, 1, 1], [], []>} : vector<2x128xf32>, vector<128x512xf32>, vector<2x512xf32> -> vector<2x512xf32>
    %276 = arith.addf %273, %275 : vector<2x512xf32>
    %277 = vector.extract_strided_slice %276 {offsets = [0, 0], sizes = [2, 128], strides = [1, 1]} : vector<2x512xf32> to vector<2x128xf32>
    %278 = arith.negf %277 : vector<2x128xf32>
    %279 = math.exp %278 : vector<2x128xf32>
    %cst_137 = arith.constant 1.000000e+00 : f32
    %280 = vector.broadcast %cst_137 : f32 to vector<2x128xf32>
    %281 = arith.addf %280, %279 : vector<2x128xf32>
    %282 = arith.divf %280, %281 : vector<2x128xf32>
    %283 = vector.extract_strided_slice %276 {offsets = [0, 128], sizes = [2, 128], strides = [1, 1]} : vector<2x512xf32> to vector<2x128xf32>
    %284 = arith.negf %283 : vector<2x128xf32>
    %285 = math.exp %284 : vector<2x128xf32>
    %cst_138 = arith.constant 1.000000e+00 : f32
    %286 = vector.broadcast %cst_138 : f32 to vector<2x128xf32>
    %287 = arith.addf %286, %285 : vector<2x128xf32>
    %288 = arith.divf %286, %287 : vector<2x128xf32>
    %289 = vector.extract_strided_slice %276 {offsets = [0, 256], sizes = [2, 128], strides = [1, 1]} : vector<2x512xf32> to vector<2x128xf32>
    %290 = math.tanh %289 : vector<2x128xf32>
    %291 = vector.extract_strided_slice %276 {offsets = [0, 384], sizes = [2, 128], strides = [1, 1]} : vector<2x512xf32> to vector<2x128xf32>
    %292 = arith.negf %291 : vector<2x128xf32>
    %293 = math.exp %292 : vector<2x128xf32>
    %cst_139 = arith.constant 1.000000e+00 : f32
    %294 = vector.broadcast %cst_139 : f32 to vector<2x128xf32>
    %295 = arith.addf %294, %293 : vector<2x128xf32>
    %296 = arith.divf %294, %295 : vector<2x128xf32>
    %297 = arith.mulf %288, %271 : vector<2x128xf32>
    %298 = arith.mulf %282, %290 : vector<2x128xf32>
    %299 = arith.addf %297, %298 : vector<2x128xf32>
    %300 = math.tanh %299 : vector<2x128xf32>
    %301 = arith.mulf %296, %300 : vector<2x128xf32>
    %c0_140 = arith.constant 0 : index
    %c0_141 = arith.constant 0 : index
    %302 = vector.load %arg7[%c0_140, %c0_141] : memref<2x128xf32, #tpu.memory_space<vmem>>, vector<2x128xf32>
    tpu.vector_store %arg7[%c0_140, %c0_141], %301 {strides = array<i32>} : memref<2x128xf32, #tpu.memory_space<vmem>>, vector<2x128xf32>,
    %c0_142 = arith.constant 0 : index
    %c0_143 = arith.constant 0 : index
    %303 = vector.load %arg8[%c0_142, %c0_143] : memref<2x128xf32, #tpu.memory_space<vmem>>, vector<2x128xf32>
    tpu.vector_store %arg8[%c0_142, %c0_143], %299 {strides = array<i32>} : memref<2x128xf32, #tpu.memory_space<vmem>>, vector<2x128xf32>,
    %304 = arith.index_cast %269 : i32 to index
    %c0_144 = arith.constant 0 : index
    %305 = vector.load %arg5[%304, %c0_144] : memref<16x128xf32, #tpu.memory_space<vmem>>, vector<2x128xf32>
    tpu.vector_store %arg5[%304, %c0_144], %301 {strides = array<i32>} : memref<16x128xf32, #tpu.memory_space<vmem>>, vector<2x128xf32>,
    %c8_i32 = arith.constant 8 : i32
    return
  }
  func.func @transform_0(%arg0: i32) -> (i32, i32) {
    %c0_i32 = arith.constant 0 : i32
    %c0_i32_0 = arith.constant 0 : i32
    return %arg0, %c0_i32 : i32, i32
  }
  func.func @transform_1(%arg0: i32) -> (i32, i32) {
    %c0_i32 = arith.constant 0 : i32
    %c0_i32_0 = arith.constant 0 : i32
    %c0_i32_1 = arith.constant 0 : i32
    return %c0_i32, %c0_i32_0 : i32, i32
  }
  func.func @transform_2(%arg0: i32) -> (i32, i32) {
    %c0_i32 = arith.constant 0 : i32
    %c0_i32_0 = arith.constant 0 : i32
    %c0_i32_1 = arith.constant 0 : i32
    return %c0_i32, %c0_i32_0 : i32, i32
  }
  func.func @transform_3(%arg0: i32) -> (i32, i32) {
    %c0_i32 = arith.constant 0 : i32
    %c0_i32_0 = arith.constant 0 : i32
    %c0_i32_1 = arith.constant 0 : i32
    return %c0_i32, %c0_i32_0 : i32, i32
  }
  func.func @transform_4(%arg0: i32) -> (i32, i32) {
    %c0_i32 = arith.constant 0 : i32
    %c0_i32_0 = arith.constant 0 : i32
    return %arg0, %c0_i32 : i32, i32
  }
}

</mosaic_0001>

<llo_original>
// kernel: tpu_custom_call.1
$region0: #{tpu_custom_call.1}
  #allocation0 [shape = 'u32[]', space=smem, size = 0x4, offset = 0x4, fixed_abs, tag = 'smem constant byte address 0x4 - core index']
  #allocation1 [shape = 'u32[144,128]{1,0:T(1,128)}', space=vmem, size = 0x12000, scoped, tag = 'internal scratch']
  #allocation2 [shape = 'f32[16,512]{1,0:T(8,128)}', space=vmem, size = 0x8000, scoped, tag = 'scratch operand']
  #allocation3 [shape = 'f32[2,128]{1,0:T(2,128)}', space=vmem, size = 0x400, scoped, tag = 'scratch operand']
  #allocation4 [shape = 'f32[2,128]{1,0:T(2,128)}', space=vmem, size = 0x400, scoped, tag = 'scratch operand']
  %s0 = inlined_call_operand.hbm [shape: f32[16,32], index: 0, kind: input, shape index: {}]
  %s1 = inlined_call_operand.hbm [shape: f32[32,512], index: 1, kind: input, shape index: {}]
  %s2 = inlined_call_operand.hbm [shape: f32[128,512], index: 2, kind: input, shape index: {}]
  %s3 = inlined_call_operand.vmem [shape: f32[1,512], index: 3, kind: input, shape index: {}]
  %s4 = inlined_call_operand.hbm [shape: f32[16,128], index: 4, kind: output, shape index: {}]
  %s5 = sld [smem:[#allocation0]]
  $region42: #{tpu_custom_call.1} parent=0
    _
  %s7 = ssub.s32 1, %s5
  %s8 = scalar_select 0, %s7, %s5
  $region1: #{tpu_custom_call.1} parent=0
    #allocation5 [shape = 'u8[8192]{0}', space=vmem, size = 0x2000, scoped, tag = 'input window, operand 0, single buffered']
    #allocation6 [shape = 's32[1]{0}', space=sflag, size = 0x4, scoped, tag = 'scoped memory for tpu_custom_call.1']
    #allocation7 [shape = 's32[1]{0}', space=sflag, size = 0x4, scoped, tag = 'scoped memory for tpu_custom_call.1']
    #allocation8 [shape = 'u8[65536]{0}', space=vmem, size = 0x10000, scoped, tag = 'input window, operand 1, single buffered']
    #allocation9 [shape = 's32[1]{0}', space=sflag, size = 0x4, scoped, tag = 'scoped memory for tpu_custom_call.1']
    #allocation10 [shape = 'u8[262144]{0}', space=vmem, size = 0x40000, scoped, tag = 'input window, operand 2, single buffered']
    #allocation11 [shape = 'u8[8192]{0}', space=vmem, size = 0x2000, scoped, tag = 'output window, operand 0, single buffered']
    %9 = vsyncpa [#allocation6], 0
    %10 = vsyncpa [#allocation9], 0
    %11 = vsyncpa [#allocation7], 0
    // Predicated region
    $region2: #{tpu_custom_call.1} parent=1 // pred_check
      _
    $region3: #{tpu_custom_call.1} parent=1 // pred_check_branch
      %13 = sbr.rel (0) target = $region5
    $region4: #{tpu_custom_call.1} parent=1 // pred_region
      %s15 = ssub.s32 256, 256
      %16 = vsyncadd [#allocation6], %s15
      %s17 = sshll.u32 [#allocation5], 4
      %s18 = int_to_ptr.vmem [resolvable:$true] %s17
      %23 = dma.hbm_to_vmem [thread:$0]  %s0, 256, %s18, [#allocation6], 128, 128, 8
    $region5: #{tpu_custom_call.1} parent=1 // pred_fallthru
      _
    // Predicated region
    $region6: #{tpu_custom_call.1} parent=1 // pred_check
      _
    $region7: #{tpu_custom_call.1} parent=1 // pred_check_branch
      %25 = sbr.rel (0) target = $region9
    $region8: #{tpu_custom_call.1} parent=1 // pred_region
      %s27 = ssub.s32 2048, 2048
      %28 = vsyncadd [#allocation9], %s27
      %s29 = sshll.u32 [#allocation8], 4
      %s30 = int_to_ptr.vmem [resolvable:$true] %s29
      %35 = dma.hbm_to_vmem [thread:$0]  %s1, 2048, %s30, [#allocation9], 512, 512, 32
    $region9: #{tpu_custom_call.1} parent=1 // pred_fallthru
      _
    // Predicated region
    $region10: #{tpu_custom_call.1} parent=1 // pred_check
      _
    $region11: #{tpu_custom_call.1} parent=1 // pred_check_branch
      %37 = sbr.rel (0) target = $region13
    $region12: #{tpu_custom_call.1} parent=1 // pred_region
      %s39 = ssub.s32 8192, 8192
      %40 = vsyncadd [#allocation9], %s39
      %s41 = sshll.u32 [#allocation10], 4
      %s42 = int_to_ptr.vmem [resolvable:$true] %s41
      %47 = dma.hbm_to_vmem [thread:$0]  %s2, 8192, %s42, [#allocation9], 512, 512, 32
    $region13: #{tpu_custom_call.1} parent=1 // pred_fallthru
      _
    // Predicated region
    $region14: #{tpu_custom_call.1} parent=1 // pred_check
      _
    $region15: #{tpu_custom_call.1} parent=1 // pred_check_branch
      %49 = sbr.rel (0) target = $region17
    $region16: #{tpu_custom_call.1} parent=1 // pred_region
      _
    $region17: #{tpu_custom_call.1} parent=1 // pred_fallthru
      _
    // Predicated region
    $region18: #{tpu_custom_call.1} parent=1 // pred_check
      _
    $region19: #{tpu_custom_call.1} parent=1 // pred_check_branch
      %51 = sbr.rel (0) target = $region21
    $region20: #{tpu_custom_call.1} parent=1 // pred_region
      %52 = dma.done [#allocation6], 256
    $region21: #{tpu_custom_call.1} parent=1 // pred_fallthru
      _
    // Predicated region
    $region22: #{tpu_custom_call.1} parent=1 // pred_check
      _
    $region23: #{tpu_custom_call.1} parent=1 // pred_check_branch
      %54 = sbr.rel (0) target = $region25
    $region24: #{tpu_custom_call.1} parent=1 // pred_region
      %55 = dma.done [#allocation9], 2048
    $region25: #{tpu_custom_call.1} parent=1 // pred_fallthru
      _
    // Predicated region
    $region26: #{tpu_custom_call.1} parent=1 // pred_check
      _
    $region27: #{tpu_custom_call.1} parent=1 // pred_check_branch
      %57 = sbr.rel (0) target = $region29
    $region28: #{tpu_custom_call.1} parent=1 // pred_region
      %58 = dma.done [#allocation9], 8192
    $region29: #{tpu_custom_call.1} parent=1 // pred_fallthru
      _
    %p59 = scmp.eq.s32.totalorder 0, 0
    // Predicated region
    $region30: #{tpu_custom_call.1} parent=1 // pred_check
      %p60 = pneg %p59
    $region31: #{tpu_custom_call.1} parent=1 // pred_check_branch
      %62 = sbr.rel (%p60) target = $region33
    $region32: #{tpu_custom_call.1} parent=1 // pred_region
      %63 = vst [vmem:[#allocation3] sm:$0x3] 0.0
      %64 = vst [vmem:[#allocation4] sm:$0x3] 0.0
    $region33: #{tpu_custom_call.1} parent=1 // pred_fallthru
      _
    %v65 = vld [vmem:[#allocation5] sm:$0xff]
    %v66 = vld [vmem:[#allocation5 + $0x8] sm:$0xff]
    %v67 = vld [vmem:[#allocation8] sm:$0xff]
    %v68 = vld [vmem:[#allocation8 + $0x8] sm:$0xff]
    %v69 = vld [vmem:[#allocation8 + $0x10] sm:$0xff]
    %v70 = vld [vmem:[#allocation8 + $0x18] sm:$0xff]
    %v71 = vld [vmem:[#allocation8 + $0x20] sm:$0xff]
    %v72 = vld [vmem:[#allocation8 + $0x28] sm:$0xff]
    %v73 = vld [vmem:[#allocation8 + $0x30] sm:$0xff]
    %v74 = vld [vmem:[#allocation8 + $0x38] sm:$0xff]
    %v75 = vld [vmem:[#allocation8 + $0x40] sm:$0xff]
    %v76 = vld [vmem:[#allocation8 + $0x48] sm:$0xff]
    %v77 = vld [vmem:[#allocation8 + $0x50] sm:$0xff]
    %v78 = vld [vmem:[#allocation8 + $0x58] sm:$0xff]
    %v79 = vld [vmem:[#allocation8 + $0x60] sm:$0xff]
    %v80 = vld [vmem:[#allocation8 + $0x68] sm:$0xff]
    %v81 = vld [vmem:[#allocation8 + $0x70] sm:$0xff]
    %v82 = vld [vmem:[#allocation8 + $0x78] sm:$0xff]
    %v83 = vld [vmem:[%s3] sm:$0xf]
    %v85 = vlaneseq
    %v86 = vshrl.u32 %v85, 7
    %v87 = vsub.s32 0, %v86
    %v88 = vrot.slane %v83, %v87
    %v89 = vlaneseq
    %v90 = vshrl.u32 %v89, 7
    %v91 = vsub.s32 1, %v90
    %v92 = vrot.slane %v83, %v91
    %v93 = vlaneseq
    %v94 = vshrl.u32 %v93, 7
    %v95 = vsub.s32 2, %v94
    %v96 = vrot.slane %v83, %v95
    %v97 = vlaneseq
    %v98 = vshrl.u32 %v97, 7
    %v99 = vsub.s32 3, %v98
    %v100 = vrot.slane %v83, %v99
    %vm105 = vcmask 261120
    %v107 = vsel %vm105, %v65, 0
    %v110 = vsel %vm105, %v66, 0
    %112 = vmatprep.subr.mxu0 %v68
    %113 = vmatpush1.msra.mxu0 %v67
    %114 = vmatprep.subr.mxu0 %v72
    %115 = vmatpush1.msra.mxu0 %v71
    %116 = vmatprep.subr.mxu0 %v76
    %117 = vmatpush1.msra.mxu0 %v75
    %118 = vmatprep.subr.mxu0 %v80
    %119 = vmatpush1.msra.mxu0 %v79
    %120 = vmatprep.subr.mxu0 0.0
    %121 = vmatpush1.msra.mxu0 0.0
    %122 = vmatprep.subr.mxu0 0.0
    %123 = vmatpush1.msra.mxu0 0.0
    %124 = vmatprep.subr.mxu0 0.0
    %125 = vmatpush1.msra.mxu0 0.0
    %126 = vmatprep.subr.mxu0 0.0
    %127 = vmatpush1.msra.mxu0 0.0
    %128 = vmatprep.subr.mxu0 0.0
    %129 = vmatpush1.msra.mxu0 0.0
    %130 = vmatprep.subr.mxu0 0.0
    %131 = vmatpush1.msra.mxu0 0.0
    %132 = vmatprep.subr.mxu0 0.0
    %133 = vmatpush1.msra.mxu0 0.0
    %134 = vmatprep.subr.mxu0 0.0
    %135 = vmatpush1.msra.mxu0 0.0
    %136 = vmatprep.subr.mxu0 0.0
    %137 = vmatpush1.msra.mxu0 0.0
    %138 = vmatprep.subr.mxu0 0.0
    %139 = vmatpush1.msra.mxu0 0.0
    %140 = vmatprep.subr.mxu0 0.0
    %141 = vmatpush1.msra.mxu0 0.0
    %142 = vmatprep.subr.mxu0 0.0
    %143 = vmatpush1.msra.mxu0 0.0
    %144 = vmatprep.subr.mxu0 0.0
    %145 = vmatpush1.msra.mxu0 0.0
    %146 = vmatprep.subr.mxu0 0.0
    %147 = vmatpush1.msra.mxu0 0.0
    %148 = vmatprep.subr.mxu0 0.0
    %149 = vmatpush1.msra.mxu0 0.0
    %150 = vmatprep.subr.mxu0 0.0
    %151 = vmatpush1.msra.mxu0 0.0
    %152 = vmatprep.subr.mxu0 0.0
    %153 = vmatpush1.msra.mxu0 0.0
    %154 = vmatprep.subr.mxu0 0.0
    %155 = vmatpush1.msra.mxu0 0.0
    %156 = vmatprep.subr.mxu0 0.0
    %157 = vmatpush1.msra.mxu0 0.0
    %158 = vmatprep.subr.mxu0 0.0
    %159 = vmatpush1.msra.mxu0 0.0
    %160 = vmatprep.subr.mxu0 0.0
    %161 = vmatpush1.msra.mxu0 0.0
    %162 = vmatprep.subr.mxu0 0.0
    %163 = vmatpush1.msra.mxu0 0.0
    %164 = vmatprep.subr.mxu0 0.0
    %165 = vmatpush1.msra.mxu0 0.0
    %166 = vmatprep.subr.mxu0 0.0
    %167 = vmatpush1.msra.mxu0 0.0
    %168 = vmatprep.subr.mxu0 0.0
    %169 = vmatpush1.msra.mxu0 0.0
    %170 = vmatprep.subr.mxu0 0.0
    %171 = vmatpush1.msra.mxu0 0.0
    %172 = vmatprep.subr.mxu0 0.0
    %173 = vmatpush1.msra.mxu0 0.0
    %174 = vmatprep.subr.mxu0 0.0
    %175 = vmatpush1.msra.mxu0 0.0
    %176 = vmatprep.mubr.f32.mxu0 0.0
    %177 = vmatmul.mubr.f32.gmra.mrb[0].mxu0 %v107
    %v178 = vpop.f32.mrb[0].mxu0
    %v179 = vadd.f32 %v88, %v178
    %v180 = vpop.f32.mrb[0].mxu0
    %v181 = vadd.f32 %v92, %v180
    %182 = vmatprep.mubr.f32.mxu0 0.0
    %183 = vmatmul.mubr.f32.gmra.mrb[0].mxu0 %v110
    %v184 = vpop.f32.mrb[0].mxu0
    %v185 = vadd.f32 %v88, %v184
    %v186 = vpop.f32.mrb[0].mxu0
    %v187 = vadd.f32 %v92, %v186
    %188 = vdwg.mxu0
    %189 = vmatprep.subr.mxu0 %v70
    %190 = vmatpush1.msra.mxu0 %v69
    %191 = vmatprep.subr.mxu0 %v74
    %192 = vmatpush1.msra.mxu0 %v73
    %193 = vmatprep.subr.mxu0 %v78
    %194 = vmatpush1.msra.mxu0 %v77
    %195 = vmatprep.subr.mxu0 %v82
    %196 = vmatpush1.msra.mxu0 %v81
    %197 = vmatprep.subr.mxu0 0.0
    %198 = vmatpush1.msra.mxu0 0.0
    %199 = vmatprep.subr.mxu0 0.0
    %200 = vmatpush1.msra.mxu0 0.0
    %201 = vmatprep.subr.mxu0 0.0
    %202 = vmatpush1.msra.mxu0 0.0
    %203 = vmatprep.subr.mxu0 0.0
    %204 = vmatpush1.msra.mxu0 0.0
    %205 = vmatprep.subr.mxu0 0.0
    %206 = vmatpush1.msra.mxu0 0.0
    %207 = vmatprep.subr.mxu0 0.0
    %208 = vmatpush1.msra.mxu0 0.0
    %209 = vmatprep.subr.mxu0 0.0
    %210 = vmatpush1.msra.mxu0 0.0
    %211 = vmatprep.subr.mxu0 0.0
    %212 = vmatpush1.msra.mxu0 0.0
    %213 = vmatprep.subr.mxu0 0.0
    %214 = vmatpush1.msra.mxu0 0.0
    %215 = vmatprep.subr.mxu0 0.0
    %216 = vmatpush1.msra.mxu0 0.0
    %217 = vmatprep.subr.mxu0 0.0
    %218 = vmatpush1.msra.mxu0 0.0
    %219 = vmatprep.subr.mxu0 0.0
    %220 = vmatpush1.msra.mxu0 0.0
    %221 = vmatprep.subr.mxu0 0.0
    %222 = vmatpush1.msra.mxu0 0.0
    %223 = vmatprep.subr.mxu0 0.0
    %224 = vmatpush1.msra.mxu0 0.0
    %225 = vmatprep.subr.mxu0 0.0
    %226 = vmatpush1.msra.mxu0 0.0
    %227 = vmatprep.subr.mxu0 0.0
    %228 = vmatpush1.msra.mxu0 0.0
    %229 = vmatprep.subr.mxu0 0.0
    %230 = vmatpush1.msra.mxu0 0.0
    %231 = vmatprep.subr.mxu0 0.0
    %232 = vmatpush1.msra.mxu0 0.0
    %233 = vmatprep.subr.mxu0 0.0
    %234 = vmatpush1.msra.mxu0 0.0
    %235 = vmatprep.subr.mxu0 0.0
    %236 = vmatpush1.msra.mxu0 0.0
    %237 = vmatprep.subr.mxu0 0.0
    %238 = vmatpush1.msra.mxu0 0.0
    %239 = vmatprep.subr.mxu0 0.0
    %240 = vmatpush1.msra.mxu0 0.0
    %241 = vmatprep.subr.mxu0 0.0
    %242 = vmatpush1.msra.mxu0 0.0
    %243 = vmatprep.subr.mxu0 0.0
    %244 = vmatpush1.msra.mxu0 0.0
    %245 = vmatprep.subr.mxu0 0.0
    %246 = vmatpush1.msra.mxu0 0.0
    %247 = vmatprep.subr.mxu0 0.0
    %248 = vmatpush1.msra.mxu0 0.0
    %249 = vmatprep.subr.mxu0 0.0
    %250 = vmatpush1.msra.mxu0 0.0
    %251 = vmatprep.subr.mxu0 0.0
    %252 = vmatpush1.msra.mxu0 0.0
    %253 = vmatprep.mubr.f32.mxu0 0.0
    %254 = vmatmul.mubr.f32.gmra.mrb[0].mxu0 %v107
    %v255 = vpop.f32.mrb[0].mxu0
    %v256 = vadd.f32 %v96, %v255
    %v257 = vpop.f32.mrb[0].mxu0
    %v258 = vadd.f32 %v100, %v257
    %259 = vmatprep.mubr.f32.mxu0 0.0
    %260 = vmatmul.mubr.f32.gmra.mrb[0].mxu0 %v110
    %v261 = vpop.f32.mrb[0].mxu0
    %v262 = vadd.f32 %v96, %v261
    %v263 = vpop.f32.mrb[0].mxu0
    %v264 = vadd.f32 %v100, %v263
    %265 = vdwg.mxu0
    %266 = vst [vmem:[#allocation2] sm:$0xff] %v179
    %267 = vst [vmem:[#allocation2 + $0x8] sm:$0xff] %v181
    %268 = vst [vmem:[#allocation2 + $0x10] sm:$0xff] %v256
    %269 = vst [vmem:[#allocation2 + $0x18] sm:$0xff] %v258
    %270 = vst [vmem:[#allocation2 + $0x20] sm:$0xff] %v185
    %271 = vst [vmem:[#allocation2 + $0x28] sm:$0xff] %v187
    %272 = vst [vmem:[#allocation2 + $0x30] sm:$0xff] %v262
    %273 = vst [vmem:[#allocation2 + $0x38] sm:$0xff] %v264
    %v274 = vld [vmem:[#allocation3] sm:$0x3]
    %v275 = vld [vmem:[#allocation4] sm:$0x3]
    %v276 = vld [vmem:[#allocation2] sm:$0x3]
    %v277 = vld [vmem:[#allocation2 + $0x8] sm:$0x3]
    %v278 = vld [vmem:[#allocation2 + $0x10] sm:$0x3]
    %v279 = vld [vmem:[#allocation2 + $0x18] sm:$0x3]
    %v280 = vld [vmem:[#allocation10] sm:$0xff]
    %v281 = vld [vmem:[#allocation10 + $0x8] sm:$0xff]
    %v282 = vld [vmem:[#allocation10 + $0x10] sm:$0xff]
    %v283 = vld [vmem:[#allocation10 + $0x18] sm:$0xff]
    %v284 = vld [vmem:[#allocation10 + $0x20] sm:$0xff]
    %v285 = vld [vmem:[#allocation10 + $0x28] sm:$0xff]
    %v286 = vld [vmem:[#allocation10 + $0x30] sm:$0xff]
    %v287 = vld [vmem:[#allocation10 + $0x38] sm:$0xff]
    %v288 = vld [vmem:[#allocation10 + $0x40] sm:$0xff]
    %v289 = vld [vmem:[#allocation10 + $0x48] sm:$0xff]
    %v290 = vld [vmem:[#allocation10 + $0x50] sm:$0xff]
    %v291 = vld [vmem:[#allocation10 + $0x58] sm:$0xff]
    %v292 = vld [vmem:[#allocation10 + $0x60] sm:$0xff]
    %v293 = vld [vmem:[#allocation10 + $0x68] sm:$0xff]
    %v294 = vld [vmem:[#allocation10 + $0x70] sm:$0xff]
    %v295 = vld [vmem:[#allocation10 + $0x78] sm:$0xff]
    %v296 = vld [vmem:[#allocation10 + $0x80] sm:$0xff]
    %v297 = vld [vmem:[#allocation10 + $0x88] sm:$0xff]
    %v298 = vld [vmem:[#allocation10 + $0x90] sm:$0xff]
    %v299 = vld [vmem:[#allocation10 + $0x98] sm:$0xff]
    %v300 = vld [vmem:[#allocation10 + $0xa0] sm:$0xff]
    %v301 = vld [vmem:[#allocation10 + $0xa8] sm:$0xff]
    %v302 = vld [vmem:[#allocation10 + $0xb0] sm:$0xff]
    %v303 = vld [vmem:[#allocation10 + $0xb8] sm:$0xff]
    %v304 = vld [vmem:[#allocation10 + $0xc0] sm:$0xff]
    %v305 = vld [vmem:[#allocation10 + $0xc8] sm:$0xff]
    %v306 = vld [vmem:[#allocation10 + $0xd0] sm:$0xff]
    %v307 = vld [vmem:[#allocation10 + $0xd8] sm:$0xff]
    %v308 = vld [vmem:[#allocation10 + $0xe0] sm:$0xff]
    %v309 = vld [vmem:[#allocation10 + $0xe8] sm:$0xff]
    %v310 = vld [vmem:[#allocation10 + $0xf0] sm:$0xff]
    %v311 = vld [vmem:[#allocation10 + $0xf8] sm:$0xff]
    %v312 = vld [vmem:[#allocation10 + $0x100] sm:$0xff]
    %v313 = vld [vmem:[#allocation10 + $0x108] sm:$0xff]
    %v314 = vld [vmem:[#allocation10 + $0x110] sm:$0xff]
    %v315 = vld [vmem:[#allocation10 + $0x118] sm:$0xff]
    %v316 = vld [vmem:[#allocation10 + $0x120] sm:$0xff]
    %v317 = vld [vmem:[#allocation10 + $0x128] sm:$0xff]
    %v318 = vld [vmem:[#allocation10 + $0x130] sm:$0xff]
    %v319 = vld [vmem:[#allocation10 + $0x138] sm:$0xff]
    %v320 = vld [vmem:[#allocation10 + $0x140] sm:$0xff]
    %v321 = vld [vmem:[#allocation10 + $0x148] sm:$0xff]
    %v322 = vld [vmem:[#allocation10 + $0x150] sm:$0xff]
    %v323 = vld [vmem:[#allocation10 + $0x158] sm:$0xff]
    %v324 = vld [vmem:[#allocation10 + $0x160] sm:$0xff]
    %v325 = vld [vmem:[#allocation10 + $0x168] sm:$0xff]
    %v326 = vld [vmem:[#allocation10 + $0x170] sm:$0xff]
    %v327 = vld [vmem:[#allocation10 + $0x178] sm:$0xff]
    %v328 = vld [vmem:[#allocation10 + $0x180] sm:$0xff]
    %v329 = vld [vmem:[#allocation10 + $0x188] sm:$0xff]
    %v330 = vld [vmem:[#allocation10 + $0x190] sm:$0xff]
    %v331 = vld [vmem:[#allocation10 + $0x198] sm:$0xff]
    %v332 = vld [vmem:[#allocation10 + $0x1a0] sm:$0xff]
    %v333 = vld [vmem:[#allocation10 + $0x1a8] sm:$0xff]
    %v334 = vld [vmem:[#allocation10 + $0x1b0] sm:$0xff]
    %v335 = vld [vmem:[#allocation10 + $0x1b8] sm:$0xff]
    %v336 = vld [vmem:[#allocation10 + $0x1c0] sm:$0xff]
    %v337 = vld [vmem:[#allocation10 + $0x1c8] sm:$0xff]
    %v338 = vld [vmem:[#allocation10 + $0x1d0] sm:$0xff]
    %v339 = vld [vmem:[#allocation10 + $0x1d8] sm:$0xff]
    %v340 = vld [vmem:[#allocation10 + $0x1e0] sm:$0xff]
    %v341 = vld [vmem:[#allocation10 + $0x1e8] sm:$0xff]
    %v342 = vld [vmem:[#allocation10 + $0x1f0] sm:$0xff]
    %v343 = vld [vmem:[#allocation10 + $0x1f8] sm:$0xff]
    %344 = vmatprep.subr.mxu0 %v281
    %345 = vmatpush1.msra.mxu0 %v280
    %346 = vmatprep.subr.mxu0 %v285
    %347 = vmatpush1.msra.mxu0 %v284
    %348 = vmatprep.subr.mxu0 %v289
    %349 = vmatpush1.msra.mxu0 %v288
    %350 = vmatprep.subr.mxu0 %v293
    %351 = vmatpush1.msra.mxu0 %v292
    %352 = vmatprep.subr.mxu0 %v297
    %353 = vmatpush1.msra.mxu0 %v296
    %354 = vmatprep.subr.mxu0 %v301
    %355 = vmatpush1.msra.mxu0 %v300
    %356 = vmatprep.subr.mxu0 %v305
    %357 = vmatpush1.msra.mxu0 %v304
    %358 = vmatprep.subr.mxu0 %v309
    %359 = vmatpush1.msra.mxu0 %v308
    %360 = vmatprep.subr.mxu0 %v313
    %361 = vmatpush1.msra.mxu0 %v312
    %362 = vmatprep.subr.mxu0 %v317
    %363 = vmatpush1.msra.mxu0 %v316
    %364 = vmatprep.subr.mxu0 %v321
    %365 = vmatpush1.msra.mxu0 %v320
    %366 = vmatprep.subr.mxu0 %v325
    %367 = vmatpush1.msra.mxu0 %v324
    %368 = vmatprep.subr.mxu0 %v329
    %369 = vmatpush1.msra.mxu0 %v328
    %370 = vmatprep.subr.mxu0 %v333
    %371 = vmatpush1.msra.mxu0 %v332
    %372 = vmatprep.subr.mxu0 %v337
    %373 = vmatpush1.msra.mxu0 %v336
    %374 = vmatprep.subr.mxu0 %v341
    %375 = vmatpush1.msra.mxu0 %v340
    %376 = vmatprep.subr.mxu0 0.0
    %377 = vmatpush1.msra.mxu0 0.0
    %378 = vmatprep.subr.mxu0 0.0
    %379 = vmatpush1.msra.mxu0 0.0
    %380 = vmatprep.subr.mxu0 0.0
    %381 = vmatpush1.msra.mxu0 0.0
    %382 = vmatprep.subr.mxu0 0.0
    %383 = vmatpush1.msra.mxu0 0.0
    %384 = vmatprep.subr.mxu0 0.0
    %385 = vmatpush1.msra.mxu0 0.0
    %386 = vmatprep.subr.mxu0 0.0
    %387 = vmatpush1.msra.mxu0 0.0
    %388 = vmatprep.subr.mxu0 0.0
    %389 = vmatpush1.msra.mxu0 0.0
    %390 = vmatprep.subr.mxu0 0.0
    %391 = vmatpush1.msra.mxu0 0.0
    %392 = vmatprep.subr.mxu0 0.0
    %393 = vmatpush1.msra.mxu0 0.0
    %394 = vmatprep.subr.mxu0 0.0
    %395 = vmatpush1.msra.mxu0 0.0
    %396 = vmatprep.subr.mxu0 0.0
    %397 = vmatpush1.msra.mxu0 0.0
    %398 = vmatprep.subr.mxu0 0.0
    %399 = vmatpush1.msra.mxu0 0.0
    %400 = vmatprep.subr.mxu0 0.0
    %401 = vmatpush1.msra.mxu0 0.0
    %402 = vmatprep.subr.mxu0 0.0
    %403 = vmatpush1.msra.mxu0 0.0
    %404 = vmatprep.subr.mxu0 0.0
    %405 = vmatpush1.msra.mxu0 0.0
    %406 = vmatprep.subr.mxu0 0.0
    %407 = vmatpush1.msra.mxu0 0.0
    %408 = vmatprep.mubr.f32.mxu0 0.0
    %409 = vmatmul.mubr.f32.gmra.mrb[0].mxu0 %v274
    %v410 = vpop.f32.mrb[0].mxu0
    %v411 = vadd.f32 0.0, %v410
    %v412 = vpop.f32.mrb[0].mxu0
    %v413 = vadd.f32 0.0, %v412
    %414 = vdwg.mxu0
    %415 = vmatprep.subr.mxu0 %v283
    %416 = vmatpush1.msra.mxu0 %v282
    %417 = vmatprep.subr.mxu0 %v287
    %418 = vmatpush1.msra.mxu0 %v286
    %419 = vmatprep.subr.mxu0 %v291
    %420 = vmatpush1.msra.mxu0 %v290
    %421 = vmatprep.subr.mxu0 %v295
    %422 = vmatpush1.msra.mxu0 %v294
    %423 = vmatprep.subr.mxu0 %v299
    %424 = vmatpush1.msra.mxu0 %v298
    %425 = vmatprep.subr.mxu0 %v303
    %426 = vmatpush1.msra.mxu0 %v302
    %427 = vmatprep.subr.mxu0 %v307
    %428 = vmatpush1.msra.mxu0 %v306
    %429 = vmatprep.subr.mxu0 %v311
    %430 = vmatpush1.msra.mxu0 %v310
    %431 = vmatprep.subr.mxu0 %v315
    %432 = vmatpush1.msra.mxu0 %v314
    %433 = vmatprep.subr.mxu0 %v319
    %434 = vmatpush1.msra.mxu0 %v318
    %435 = vmatprep.subr.mxu0 %v323
    %436 = vmatpush1.msra.mxu0 %v322
    %437 = vmatprep.subr.mxu0 %v327
    %438 = vmatpush1.msra.mxu0 %v326
    %439 = vmatprep.subr.mxu0 %v331
    %440 = vmatpush1.msra.mxu0 %v330
    %441 = vmatprep.subr.mxu0 %v335
    %442 = vmatpush1.msra.mxu0 %v334
    %443 = vmatprep.subr.mxu0 %v339
    %444 = vmatpush1.msra.mxu0 %v338
    %445 = vmatprep.subr.mxu0 %v343
    %446 = vmatpush1.msra.mxu0 %v342
    %447 = vmatprep.subr.mxu0 0.0
    %448 = vmatpush1.msra.mxu0 0.0
    %449 = vmatprep.subr.mxu0 0.0
    %450 = vmatpush1.msra.mxu0 0.0
    %451 = vmatprep.subr.mxu0 0.0
    %452 = vmatpush1.msra.mxu0 0.0
    %453 = vmatprep.subr.mxu0 0.0
    %454 = vmatpush1.msra.mxu0 0.0
    %455 = vmatprep.subr.mxu0 0.0
    %456 = vmatpush1.msra.mxu0 0.0
    %457 = vmatprep.subr.mxu0 0.0
    %458 = vmatpush1.msra.mxu0 0.0
    %459 = vmatprep.subr.mxu0 0.0
    %460 = vmatpush1.msra.mxu0 0.0
    %461 = vmatprep.subr.mxu0 0.0
    %462 = vmatpush1.msra.mxu0 0.0
    %463 = vmatprep.subr.mxu0 0.0
    %464 = vmatpush1.msra.mxu0 0.0
    %465 = vmatprep.subr.mxu0 0.0
    %466 = vmatpush1.msra.mxu0 0.0
    %467 = vmatprep.subr.mxu0 0.0
    %468 = vmatpush1.msra.mxu0 0.0
    %469 = vmatprep.subr.mxu0 0.0
    %470 = vmatpush1.msra.mxu0 0.0
    %471 = vmatprep.subr.mxu0 0.0
    %472 = vmatpush1.msra.mxu0 0.0
    %473 = vmatprep.subr.mxu0 0.0
    %474 = vmatpush1.msra.mxu0 0.0
    %475 = vmatprep.subr.mxu0 0.0
    %476 = vmatpush1.msra.mxu0 0.0
    %477 = vmatprep.subr.mxu0 0.0
    %478 = vmatpush1.msra.mxu0 0.0
    %479 = vmatprep.mubr.f32.mxu0 0.0
    %480 = vmatmul.mubr.f32.gmra.mrb[0].mxu0 %v274
    %v481 = vpop.f32.mrb[0].mxu0
    %v482 = vadd.f32 0.0, %v481
    %v483 = vpop.f32.mrb[0].mxu0
    %v484 = vadd.f32 0.0, %v483
    %485 = vdwg.mxu0
    %v486 = vadd.f32 %v276, %v411
    %v487 = vadd.f32 %v277, %v413
    %v488 = vadd.f32 %v278, %v482
    %v489 = vadd.f32 %v279, %v484
    %v490 = vxor.u32 %v486, 2147483648
    %v491 = vmul.f32 %v490, 1.442695
    %v492 = vpow.pop %v491
    %v493 = vadd.f32 %v492, 1.0
    %v494 = vrcp.pop %v493
    %v495 = vmul.f32 1.0, %v494
    %v496 = vxor.u32 %v487, 2147483648
    %v497 = vmul.f32 %v496, 1.442695
    %v498 = vpow.pop %v497
    %v499 = vadd.f32 %v498, 1.0
    %v500 = vrcp.pop %v499
    %v501 = vmul.f32 1.0, %v500
    %v502 = vtanh.pop %v488
    %v503 = vxor.u32 %v489, 2147483648
    %v504 = vmul.f32 %v503, 1.442695
    %v505 = vpow.pop %v504
    %v506 = vadd.f32 %v505, 1.0
    %v507 = vrcp.pop %v506
    %v508 = vmul.f32 1.0, %v507
    %v509 = vmul.f32 %v501, %v275
    %v510 = vmul.f32 %v495, %v502
    %v511 = vadd.f32 %v509, %v510
    %v512 = vtanh.pop %v511
    %v513 = vmul.f32 %v508, %v512
    %514 = vst [vmem:[#allocation3] sm:$0x3] %v513
    %515 = vst [vmem:[#allocation4] sm:$0x3] %v511
    %516 = vst [vmem:[#allocation11] sm:$0x3] %v513
    %v517 = vld [vmem:[#allocation3] sm:$0x3]
    %v518 = vld [vmem:[#allocation4] sm:$0x3]
    %v519 = vld [vmem:[#allocation2] sm:$0xc]
    %v520 = vld [vmem:[#allocation2 + $0x8] sm:$0xc]
    %v521 = vld [vmem:[#allocation2 + $0x10] sm:$0xc]
    %v522 = vld [vmem:[#allocation2 + $0x18] sm:$0xc]
    %v523 = vld [vmem:[#allocation10] sm:$0xff]
    %v524 = vld [vmem:[#allocation10 + $0x8] sm:$0xff]
    %v525 = vld [vmem:[#allocation10 + $0x10] sm:$0xff]
    %v526 = vld [vmem:[#allocation10 + $0x18] sm:$0xff]
    %v527 = vld [vmem:[#allocation10 + $0x20] sm:$0xff]
    %v528 = vld [vmem:[#allocation10 + $0x28] sm:$0xff]
    %v529 = vld [vmem:[#allocation10 + $0x30] sm:$0xff]
    %v530 = vld [vmem:[#allocation10 + $0x38] sm:$0xff]
    %v531 = vld [vmem:[#allocation10 + $0x40] sm:$0xff]
    %v532 = vld [vmem:[#allocation10 + $0x48] sm:$0xff]
    %v533 = vld [vmem:[#allocation10 + $0x50] sm:$0xff]
    %v534 = vld [vmem:[#allocation10 + $0x58] sm:$0xff]
    %v535 = vld [vmem:[#allocation10 + $0x60] sm:$0xff]
    %v536 = vld [vmem:[#allocation10 + $0x68] sm:$0xff]
    %v537 = vld [vmem:[#allocation10 + $0x70] sm:$0xff]
    %v538 = vld [vmem:[#allocation10 + $0x78] sm:$0xff]
    %v539 = vld [vmem:[#allocation10 + $0x80] sm:$0xff]
    %v540 = vld [vmem:[#allocation10 + $0x88] sm:$0xff]
    %v541 = vld [vmem:[#allocation10 + $0x90] sm:$0xff]
    %v542 = vld [vmem:[#allocation10 + $0x98] sm:$0xff]
    %v543 = vld [vmem:[#allocation10 + $0xa0] sm:$0xff]
    %v544 = vld [vmem:[#allocation10 + $0xa8] sm:$0xff]
    %v545 = vld [vmem:[#allocation10 + $0xb0] sm:$0xff]
    %v546 = vld [vmem:[#allocation10 + $0xb8] sm:$0xff]
    %v547 = vld [vmem:[#allocation10 + $0xc0] sm:$0xff]
    %v548 = vld [vmem:[#allocation10 + $0xc8] sm:$0xff]
    %v549 = vld [vmem:[#allocation10 + $0xd0] sm:$0xff]
    %v550 = vld [vmem:[#allocation10 + $0xd8] sm:$0xff]
    %v551 = vld [vmem:[#allocation10 + $0xe0] sm:$0xff]
    %v552 = vld [vmem:[#allocation10 + $0xe8] sm:$0xff]
    %v553 = vld [vmem:[#allocation10 + $0xf0] sm:$0xff]
    %v554 = vld [vmem:[#allocation10 + $0xf8] sm:$0xff]
    %v555 = vld [vmem:[#allocation10 + $0x100] sm:$0xff]
    %v556 = vld [vmem:[#allocation10 + $0x108] sm:$0xff]
    %v557 = vld [vmem:[#allocation10 + $0x110] sm:$0xff]
    %v558 = vld [vmem:[#allocation10 + $0x118] sm:$0xff]
    %v559 = vld [vmem:[#allocation10 + $0x120] sm:$0xff]
    %v560 = vld [vmem:[#allocation10 + $0x128] sm:$0xff]
    %v561 = vld [vmem:[#allocation10 + $0x130] sm:$0xff]
    %v562 = vld [vmem:[#allocation10 + $0x138] sm:$0xff]
    %v563 = vld [vmem:[#allocation10 + $0x140] sm:$0xff]
    %v564 = vld [vmem:[#allocation10 + $0x148] sm:$0xff]
    %v565 = vld [vmem:[#allocation10 + $0x150] sm:$0xff]
    %v566 = vld [vmem:[#allocation10 + $0x158] sm:$0xff]
    %v567 = vld [vmem:[#allocation10 + $0x160] sm:$0xff]
    %v568 = vld [vmem:[#allocation10 + $0x168] sm:$0xff]
    %v569 = vld [vmem:[#allocation10 + $0x170] sm:$0xff]
    %v570 = vld [vmem:[#allocation10 + $0x178] sm:$0xff]
    %v571 = vld [vmem:[#allocation10 + $0x180] sm:$0xff]
    %v572 = vld [vmem:[#allocation10 + $0x188] sm:$0xff]
    %v573 = vld [vmem:[#allocation10 + $0x190] sm:$0xff]
    %v574 = vld [vmem:[#allocation10 + $0x198] sm:$0xff]
    %v575 = vld [vmem:[#allocation10 + $0x1a0] sm:$0xff]
    %v576 = vld [vmem:[#allocation10 + $0x1a8] sm:$0xff]
    %v577 = vld [vmem:[#allocation10 + $0x1b0] sm:$0xff]
    %v578 = vld [vmem:[#allocation10 + $0x1b8] sm:$0xff]
    %v579 = vld [vmem:[#allocation10 + $0x1c0] sm:$0xff]
    %v580 = vld [vmem:[#allocation10 + $0x1c8] sm:$0xff]
    %v581 = vld [vmem:[#allocation10 + $0x1d0] sm:$0xff]
    %v582 = vld [vmem:[#allocation10 + $0x1d8] sm:$0xff]
    %v583 = vld [vmem:[#allocation10 + $0x1e0] sm:$0xff]
    %v584 = vld [vmem:[#allocation10 + $0x1e8] sm:$0xff]
    %v585 = vld [vmem:[#allocation10 + $0x1f0] sm:$0xff]
    %v586 = vld [vmem:[#allocation10 + $0x1f8] sm:$0xff]
    %587 = vmatprep.subr.mxu0 %v524
    %588 = vmatpush1.msra.mxu0 %v523
    %589 = vmatprep.subr.mxu0 %v528
    %590 = vmatpush1.msra.mxu0 %v527
    %591 = vmatprep.subr.mxu0 %v532
    %592 = vmatpush1.msra.mxu0 %v531
    %593 = vmatprep.subr.mxu0 %v536
    %594 = vmatpush1.msra.mxu0 %v535
    %595 = vmatprep.subr.mxu0 %v540
    %596 = vmatpush1.msra.mxu0 %v539
    %597 = vmatprep.subr.mxu0 %v544
    %598 = vmatpush1.msra.mxu0 %v543
    %599 = vmatprep.subr.mxu0 %v548
    %600 = vmatpush1.msra.mxu0 %v547
    %601 = vmatprep.subr.mxu0 %v552
    %602 = vmatpush1.msra.mxu0 %v551
    %603 = vmatprep.subr.mxu0 %v556
    %604 = vmatpush1.msra.mxu0 %v555
    %605 = vmatprep.subr.mxu0 %v560
    %606 = vmatpush1.msra.mxu0 %v559
    %607 = vmatprep.subr.mxu0 %v564
    %608 = vmatpush1.msra.mxu0 %v563
    %609 = vmatprep.subr.mxu0 %v568
    %610 = vmatpush1.msra.mxu0 %v567
    %611 = vmatprep.subr.mxu0 %v572
    %612 = vmatpush1.msra.mxu0 %v571
    %613 = vmatprep.subr.mxu0 %v576
    %614 = vmatpush1.msra.mxu0 %v575
    %615 = vmatprep.subr.mxu0 %v580
    %616 = vmatpush1.msra.mxu0 %v579
    %617 = vmatprep.subr.mxu0 %v584
    %618 = vmatpush1.msra.mxu0 %v583
    %619 = vmatprep.subr.mxu0 0.0
    %620 = vmatpush1.msra.mxu0 0.0
    %621 = vmatprep.subr.mxu0 0.0
    %622 = vmatpush1.msra.mxu0 0.0
    %623 = vmatprep.subr.mxu0 0.0
    %624 = vmatpush1.msra.mxu0 0.0
    %625 = vmatprep.subr.mxu0 0.0
    %626 = vmatpush1.msra.mxu0 0.0
    %627 = vmatprep.subr.mxu0 0.0
    %628 = vmatpush1.msra.mxu0 0.0
    %629 = vmatprep.subr.mxu0 0.0
    %630 = vmatpush1.msra.mxu0 0.0
    %631 = vmatprep.subr.mxu0 0.0
    %632 = vmatpush1.msra.mxu0 0.0
    %633 = vmatprep.subr.mxu0 0.0
    %634 = vmatpush1.msra.mxu0 0.0
    %635 = vmatprep.subr.mxu0 0.0
    %636 = vmatpush1.msra.mxu0 0.0
    %637 = vmatprep.subr.mxu0 0.0
    %638 = vmatpush1.msra.mxu0 0.0
    %639 = vmatprep.subr.mxu0 0.0
    %640 = vmatpush1.msra.mxu0 0.0
    %641 = vmatprep.subr.mxu0 0.0
    %642 = vmatpush1.msra.mxu0 0.0
    %643 = vmatprep.subr.mxu0 0.0
    %644 = vmatpush1.msra.mxu0 0.0
    %645 = vmatprep.subr.mxu0 0.0
    %646 = vmatpush1.msra.mxu0 0.0
    %647 = vmatprep.subr.mxu0 0.0
    %648 = vmatpush1.msra.mxu0 0.0
    %649 = vmatprep.subr.mxu0 0.0
    %650 = vmatpush1.msra.mxu0 0.0
    %651 = vmatprep.mubr.f32.mxu0 0.0
    %652 = vmatmul.mubr.f32.gmra.mrb[0].mxu0 %v517
    %v653 = vpop.f32.mrb[0].mxu0
    %v654 = vadd.f32 0.0, %v653
    %v655 = vpop.f32.mrb[0].mxu0
    %v656 = vadd.f32 0.0, %v655
    %657 = vdwg.mxu0
    %658 = vmatprep.subr.mxu0 %v526
    %659 = vmatpush1.msra.mxu0 %v525
    %660 = vmatprep.subr.mxu0 %v530
    %661 = vmatpush1.msra.mxu0 %v529
    %662 = vmatprep.subr.mxu0 %v534
    %663 = vmatpush1.msra.mxu0 %v533
    %664 = vmatprep.subr.mxu0 %v538
    %665 = vmatpush1.msra.mxu0 %v537
    %666 = vmatprep.subr.mxu0 %v542
    %667 = vmatpush1.msra.mxu0 %v541
    %668 = vmatprep.subr.mxu0 %v546
    %669 = vmatpush1.msra.mxu0 %v545
    %670 = vmatprep.subr.mxu0 %v550
    %671 = vmatpush1.msra.mxu0 %v549
    %672 = vmatprep.subr.mxu0 %v554
    %673 = vmatpush1.msra.mxu0 %v553
    %674 = vmatprep.subr.mxu0 %v558
    %675 = vmatpush1.msra.mxu0 %v557
    %676 = vmatprep.subr.mxu0 %v562
    %677 = vmatpush1.msra.mxu0 %v561
    %678 = vmatprep.subr.mxu0 %v566
    %679 = vmatpush1.msra.mxu0 %v565
    %680 = vmatprep.subr.mxu0 %v570
    %681 = vmatpush1.msra.mxu0 %v569
    %682 = vmatprep.subr.mxu0 %v574
    %683 = vmatpush1.msra.mxu0 %v573
    %684 = vmatprep.subr.mxu0 %v578
    %685 = vmatpush1.msra.mxu0 %v577
    %686 = vmatprep.subr.mxu0 %v582
    %687 = vmatpush1.msra.mxu0 %v581
    %688 = vmatprep.subr.mxu0 %v586
    %689 = vmatpush1.msra.mxu0 %v585
    %690 = vmatprep.subr.mxu0 0.0
    %691 = vmatpush1.msra.mxu0 0.0
    %692 = vmatprep.subr.mxu0 0.0
    %693 = vmatpush1.msra.mxu0 0.0
    %694 = vmatprep.subr.mxu0 0.0
    %695 = vmatpush1.msra.mxu0 0.0
    %696 = vmatprep.subr.mxu0 0.0
    %697 = vmatpush1.msra.mxu0 0.0
    %698 = vmatprep.subr.mxu0 0.0
    %699 = vmatpush1.msra.mxu0 0.0
    %700 = vmatprep.subr.mxu0 0.0
    %701 = vmatpush1.msra.mxu0 0.0
    %702 = vmatprep.subr.mxu0 0.0
    %703 = vmatpush1.msra.mxu0 0.0
    %704 = vmatprep.subr.mxu0 0.0
    %705 = vmatpush1.msra.mxu0 0.0
    %706 = vmatprep.subr.mxu0 0.0
    %707 = vmatpush1.msra.mxu0 0.0
    %708 = vmatprep.subr.mxu0 0.0
    %709 = vmatpush1.msra.mxu0 0.0
    %710 = vmatprep.subr.mxu0 0.0
    %711 = vmatpush1.msra.mxu0 0.0
    %712 = vmatprep.subr.mxu0 0.0
    %713 = vmatpush1.msra.mxu0 0.0
    %714 = vmatprep.subr.mxu0 0.0
    %715 = vmatpush1.msra.mxu0 0.0
    %716 = vmatprep.subr.mxu0 0.0
    %717 = vmatpush1.msra.mxu0 0.0
    %718 = vmatprep.subr.mxu0 0.0
    %719 = vmatpush1.msra.mxu0 0.0
    %720 = vmatprep.subr.mxu0 0.0
    %721 = vmatpush1.msra.mxu0 0.0
    %722 = vmatprep.mubr.f32.mxu0 0.0
    %723 = vmatmul.mubr.f32.gmra.mrb[0].mxu0 %v517
    %v724 = vpop.f32.mrb[0].mxu0
    %v725 = vadd.f32 0.0, %v724
    %v726 = vpop.f32.mrb[0].mxu0
    %v727 = vadd.f32 0.0, %v726
    %728 = vdwg.mxu0
    %v733 = vrot.slane %v654, 6
    %v734 = vrot.slane %v656, 6
    %v735 = vrot.slane %v725, 6
    %v736 = vrot.slane %v727, 6
    %v741 = vadd.f32 %v519, %v733
    %v742 = vadd.f32 %v520, %v734
    %v743 = vadd.f32 %v521, %v735
    %v744 = vadd.f32 %v522, %v736
    %v745 = vxor.u32 %v741, 2147483648
    %v746 = vmul.f32 %v745, 1.442695
    %v747 = vpow.pop %v746
    %v748 = vadd.f32 %v747, 1.0
    %v749 = vrcp.pop %v748
    %v750 = vmul.f32 1.0, %v749
    %v751 = vxor.u32 %v742, 2147483648
    %v752 = vmul.f32 %v751, 1.442695
    %v753 = vpow.pop %v752
    %v754 = vadd.f32 %v753, 1.0
    %v755 = vrcp.pop %v754
    %v756 = vmul.f32 1.0, %v755
    %v757 = vtanh.pop %v743
    %v758 = vxor.u32 %v744, 2147483648
    %v759 = vmul.f32 %v758, 1.442695
    %v760 = vpow.pop %v759
    %v761 = vadd.f32 %v760, 1.0
    %v762 = vrcp.pop %v761
    %v763 = vmul.f32 1.0, %v762
    %v765 = vrot.slane %v518, 6
    %v767 = vmul.f32 %v756, %v765
    %v768 = vmul.f32 %v750, %v757
    %v769 = vadd.f32 %v767, %v768
    %v770 = vtanh.pop %v769
    %v771 = vmul.f32 %v763, %v770
    %772 = vst [vmem:[#allocation3 - $0x2] sm:$0xc] %v771
    %773 = vst [vmem:[#allocation4 - $0x2] sm:$0xc] %v769
    %774 = vst [vmem:[#allocation11] sm:$0xc] %v771
    %v775 = vld [vmem:[#allocation3] sm:$0x3]
    %v776 = vld [vmem:[#allocation4] sm:$0x3]
    %v777 = vld [vmem:[#allocation2] sm:$0x30]
    %v778 = vld [vmem:[#allocation2 + $0x8] sm:$0x30]
    %v779 = vld [vmem:[#allocation2 + $0x10] sm:$0x30]
    %v780 = vld [vmem:[#allocation2 + $0x18] sm:$0x30]
    %v781 = vld [vmem:[#allocation10] sm:$0xff]
    %v782 = vld [vmem:[#allocation10 + $0x8] sm:$0xff]
    %v783 = vld [vmem:[#allocation10 + $0x10] sm:$0xff]
    %v784 = vld [vmem:[#allocation10 + $0x18] sm:$0xff]
    %v785 = vld [vmem:[#allocation10 + $0x20] sm:$0xff]
    %v786 = vld [vmem:[#allocation10 + $0x28] sm:$0xff]
    %v787 = vld [vmem:[#allocation10 + $0x30] sm:$0xff]
    %v788 = vld [vmem:[#allocation10 + $0x38] sm:$0xff]
    %v789 = vld [vmem:[#allocation10 + $0x40] sm:$0xff]
    %v790 = vld [vmem:[#allocation10 + $0x48] sm:$0xff]
    %v791 = vld [vmem:[#allocation10 + $0x50] sm:$0xff]
    %v792 = vld [vmem:[#allocation10 + $0x58] sm:$0xff]
    %v793 = vld [vmem:[#allocation10 + $0x60] sm:$0xff]
    %v794 = vld [vmem:[#allocation10 + $0x68] sm:$0xff]
    %v795 = vld [vmem:[#allocation10 + $0x70] sm:$0xff]
    %v796 = vld [vmem:[#allocation10 + $0x78] sm:$0xff]
    %v797 = vld [vmem:[#allocation10 + $0x80] sm:$0xff]
    %v798 = vld [vmem:[#allocation10 + $0x88] sm:$0xff]
    %v799 = vld [vmem:[#allocation10 + $0x90] sm:$0xff]
    %v800 = vld [vmem:[#allocation10 + $0x98] sm:$0xff]
    %v801 = vld [vmem:[#allocation10 + $0xa0] sm:$0xff]
    %v802 = vld [vmem:[#allocation10 + $0xa8] sm:$0xff]
    %v803 = vld [vmem:[#allocation10 + $0xb0] sm:$0xff]
    %v804 = vld [vmem:[#allocation10 + $0xb8] sm:$0xff]
    %v805 = vld [vmem:[#allocation10 + $0xc0] sm:$0xff]
    %v806 = vld [vmem:[#allocation10 + $0xc8] sm:$0xff]
    %v807 = vld [vmem:[#allocation10 + $0xd0] sm:$0xff]
    %v808 = vld [vmem:[#allocation10 + $0xd8] sm:$0xff]
    %v809 = vld [vmem:[#allocation10 + $0xe0] sm:$0xff]
    %v810 = vld [vmem:[#allocation10 + $0xe8] sm:$0xff]
    %v811 = vld [vmem:[#allocation10 + $0xf0] sm:$0xff]
    %v812 = vld [vmem:[#allocation10 + $0xf8] sm:$0xff]
    %v813 = vld [vmem:[#allocation10 + $0x100] sm:$0xff]
    %v814 = vld [vmem:[#allocation10 + $0x108] sm:$0xff]
    %v815 = vld [vmem:[#allocation10 + $0x110] sm:$0xff]
    %v816 = vld [vmem:[#allocation10 + $0x118] sm:$0xff]
    %v817 = vld [vmem:[#allocation10 + $0x120] sm:$0xff]
    %v818 = vld [vmem:[#allocation10 + $0x128] sm:$0xff]
    %v819 = vld [vmem:[#allocation10 + $0x130] sm:$0xff]
    %v820 = vld [vmem:[#allocation10 + $0x138] sm:$0xff]
    %v821 = vld [vmem:[#allocation10 + $0x140] sm:$0xff]
    %v822 = vld [vmem:[#allocation10 + $0x148] sm:$0xff]
    %v823 = vld [vmem:[#allocation10 + $0x150] sm:$0xff]
    %v824 = vld [vmem:[#allocation10 + $0x158] sm:$0xff]
    %v825 = vld [vmem:[#allocation10 + $0x160] sm:$0xff]
    %v826 = vld [vmem:[#allocation10 + $0x168] sm:$0xff]
    %v827 = vld [vmem:[#allocation10 + $0x170] sm:$0xff]
    %v828 = vld [vmem:[#allocation10 + $0x178] sm:$0xff]
    %v829 = vld [vmem:[#allocation10 + $0x180] sm:$0xff]
    %v830 = vld [vmem:[#allocation10 + $0x188] sm:$0xff]
    %v831 = vld [vmem:[#allocation10 + $0x190] sm:$0xff]
    %v832 = vld [vmem:[#allocation10 + $0x198] sm:$0xff]
    %v833 = vld [vmem:[#allocation10 + $0x1a0] sm:$0xff]
    %v834 = vld [vmem:[#allocation10 + $0x1a8] sm:$0xff]
    %v835 = vld [vmem:[#allocation10 + $0x1b0] sm:$0xff]
    %v836 = vld [vmem:[#allocation10 + $0x1b8] sm:$0xff]
    %v837 = vld [vmem:[#allocation10 + $0x1c0] sm:$0xff]
    %v838 = vld [vmem:[#allocation10 + $0x1c8] sm:$0xff]
    %v839 = vld [vmem:[#allocation10 + $0x1d0] sm:$0xff]
    %v840 = vld [vmem:[#allocation10 + $0x1d8] sm:$0xff]
    %v841 = vld [vmem:[#allocation10 + $0x1e0] sm:$0xff]
    %v842 = vld [vmem:[#allocation10 + $0x1e8] sm:$0xff]
    %v843 = vld [vmem:[#allocation10 + $0x1f0] sm:$0xff]
    %v844 = vld [vmem:[#allocation10 + $0x1f8] sm:$0xff]
    %845 = vmatprep.subr.mxu0 %v782
    %846 = vmatpush1.msra.mxu0 %v781
    %847 = vmatprep.subr.mxu0 %v786
    %848 = vmatpush1.msra.mxu0 %v785
    %849 = vmatprep.subr.mxu0 %v790
    %850 = vmatpush1.msra.mxu0 %v789
    %851 = vmatprep.subr.mxu0 %v794
    %852 = vmatpush1.msra.mxu0 %v793
    %853 = vmatprep.subr.mxu0 %v798
    %854 = vmatpush1.msra.mxu0 %v797
    %855 = vmatprep.subr.mxu0 %v802
    %856 = vmatpush1.msra.mxu0 %v801
    %857 = vmatprep.subr.mxu0 %v806
    %858 = vmatpush1.msra.mxu0 %v805
    %859 = vmatprep.subr.mxu0 %v810
    %860 = vmatpush1.msra.mxu0 %v809
    %861 = vmatprep.subr.mxu0 %v814
    %862 = vmatpush1.msra.mxu0 %v813
    %863 = vmatprep.subr.mxu0 %v818
    %864 = vmatpush1.msra.mxu0 %v817
    %865 = vmatprep.subr.mxu0 %v822
    %866 = vmatpush1.msra.mxu0 %v821
    %867 = vmatprep.subr.mxu0 %v826
    %868 = vmatpush1.msra.mxu0 %v825
    %869 = vmatprep.subr.mxu0 %v830
    %870 = vmatpush1.msra.mxu0 %v829
    %871 = vmatprep.subr.mxu0 %v834
    %872 = vmatpush1.msra.mxu0 %v833
    %873 = vmatprep.subr.mxu0 %v838
    %874 = vmatpush1.msra.mxu0 %v837
    %875 = vmatprep.subr.mxu0 %v842
    %876 = vmatpush1.msra.mxu0 %v841
    %877 = vmatprep.subr.mxu0 0.0
    %878 = vmatpush1.msra.mxu0 0.0
    %879 = vmatprep.subr.mxu0 0.0
    %880 = vmatpush1.msra.mxu0 0.0
    %881 = vmatprep.subr.mxu0 0.0
    %882 = vmatpush1.msra.mxu0 0.0
    %883 = vmatprep.subr.mxu0 0.0
    %884 = vmatpush1.msra.mxu0 0.0
    %885 = vmatprep.subr.mxu0 0.0
    %886 = vmatpush1.msra.mxu0 0.0
    %887 = vmatprep.subr.mxu0 0.0
    %888 = vmatpush1.msra.mxu0 0.0
    %889 = vmatprep.subr.mxu0 0.0
    %890 = vmatpush1.msra.mxu0 0.0
    %891 = vmatprep.subr.mxu0 0.0
    %892 = vmatpush1.msra.mxu0 0.0
    %893 = vmatprep.subr.mxu0 0.0
    %894 = vmatpush1.msra.mxu0 0.0
    %895 = vmatprep.subr.mxu0 0.0
    %896 = vmatpush1.msra.mxu0 0.0
    %897 = vmatprep.subr.mxu0 0.0
    %898 = vmatpush1.msra.mxu0 0.0
    %899 = vmatprep.subr.mxu0 0.0
    %900 = vmatpush1.msra.mxu0 0.0
    %901 = vmatprep.subr.mxu0 0.0
    %902 = vmatpush1.msra.mxu0 0.0
    %903 = vmatprep.subr.mxu0 0.0
    %904 = vmatpush1.msra.mxu0 0.0
    %905 = vmatprep.subr.mxu0 0.0
    %906 = vmatpush1.msra.mxu0 0.0
    %907 = vmatprep.subr.mxu0 0.0
    %908 = vmatpush1.msra.mxu0 0.0
    %909 = vmatprep.mubr.f32.mxu0 0.0
    %910 = vmatmul.mubr.f32.gmra.mrb[0].mxu0 %v775
    %v911 = vpop.f32.mrb[0].mxu0
    %v912 = vadd.f32 0.0, %v911
    %v913 = vpop.f32.mrb[0].mxu0
    %v914 = vadd.f32 0.0, %v913
    %915 = vdwg.mxu0
    %916 = vmatprep.subr.mxu0 %v784
    %917 = vmatpush1.msra.mxu0 %v783
    %918 = vmatprep.subr.mxu0 %v788
    %919 = vmatpush1.msra.mxu0 %v787
    %920 = vmatprep.subr.mxu0 %v792
    %921 = vmatpush1.msra.mxu0 %v791
    %922 = vmatprep.subr.mxu0 %v796
    %923 = vmatpush1.msra.mxu0 %v795
    %924 = vmatprep.subr.mxu0 %v800
    %925 = vmatpush1.msra.mxu0 %v799
    %926 = vmatprep.subr.mxu0 %v804
    %927 = vmatpush1.msra.mxu0 %v803
    %928 = vmatprep.subr.mxu0 %v808
    %929 = vmatpush1.msra.mxu0 %v807
    %930 = vmatprep.subr.mxu0 %v812
    %931 = vmatpush1.msra.mxu0 %v811
    %932 = vmatprep.subr.mxu0 %v816
    %933 = vmatpush1.msra.mxu0 %v815
    %934 = vmatprep.subr.mxu0 %v820
    %935 = vmatpush1.msra.mxu0 %v819
    %936 = vmatprep.subr.mxu0 %v824
    %937 = vmatpush1.msra.mxu0 %v823
    %938 = vmatprep.subr.mxu0 %v828
    %939 = vmatpush1.msra.mxu0 %v827
    %940 = vmatprep.subr.mxu0 %v832
    %941 = vmatpush1.msra.mxu0 %v831
    %942 = vmatprep.subr.mxu0 %v836
    %943 = vmatpush1.msra.mxu0 %v835
    %944 = vmatprep.subr.mxu0 %v840
    %945 = vmatpush1.msra.mxu0 %v839
    %946 = vmatprep.subr.mxu0 %v844
    %947 = vmatpush1.msra.mxu0 %v843
    %948 = vmatprep.subr.mxu0 0.0
    %949 = vmatpush1.msra.mxu0 0.0
    %950 = vmatprep.subr.mxu0 0.0
    %951 = vmatpush1.msra.mxu0 0.0
    %952 = vmatprep.subr.mxu0 0.0
    %953 = vmatpush1.msra.mxu0 0.0
    %954 = vmatprep.subr.mxu0 0.0
    %955 = vmatpush1.msra.mxu0 0.0
    %956 = vmatprep.subr.mxu0 0.0
    %957 = vmatpush1.msra.mxu0 0.0
    %958 = vmatprep.subr.mxu0 0.0
    %959 = vmatpush1.msra.mxu0 0.0
    %960 = vmatprep.subr.mxu0 0.0
    %961 = vmatpush1.msra.mxu0 0.0
    %962 = vmatprep.subr.mxu0 0.0
    %963 = vmatpush1.msra.mxu0 0.0
    %964 = vmatprep.subr.mxu0 0.0
    %965 = vmatpush1.msra.mxu0 0.0
    %966 = vmatprep.subr.mxu0 0.0
    %967 = vmatpush1.msra.mxu0 0.0
    %968 = vmatprep.subr.mxu0 0.0
    %969 = vmatpush1.msra.mxu0 0.0
    %970 = vmatprep.subr.mxu0 0.0
    %971 = vmatpush1.msra.mxu0 0.0
    %972 = vmatprep.subr.mxu0 0.0
    %973 = vmatpush1.msra.mxu0 0.0
    %974 = vmatprep.subr.mxu0 0.0
    %975 = vmatpush1.msra.mxu0 0.0
    %976 = vmatprep.subr.mxu0 0.0
    %977 = vmatpush1.msra.mxu0 0.0
    %978 = vmatprep.subr.mxu0 0.0
    %979 = vmatpush1.msra.mxu0 0.0
    %980 = vmatprep.mubr.f32.mxu0 0.0
    %981 = vmatmul.mubr.f32.gmra.mrb[0].mxu0 %v775
    %v982 = vpop.f32.mrb[0].mxu0
    %v983 = vadd.f32 0.0, %v982
    %v984 = vpop.f32.mrb[0].mxu0
    %v985 = vadd.f32 0.0, %v984
    %986 = vdwg.mxu0
    %v991 = vrot.slane %v912, 4
    %v992 = vrot.slane %v914, 4
    %v993 = vrot.slane %v983, 4
    %v994 = vrot.slane %v985, 4
    %v999 = vadd.f32 %v777, %v991
    %v1000 = vadd.f32 %v778, %v992
    %v1001 = vadd.f32 %v779, %v993
    %v1002 = vadd.f32 %v780, %v994
    %v1003 = vxor.u32 %v999, 2147483648
    %v1004 = vmul.f32 %v1003, 1.442695
    %v1005 = vpow.pop %v1004
    %v1006 = vadd.f32 %v1005, 1.0
    %v1007 = vrcp.pop %v1006
    %v1008 = vmul.f32 1.0, %v1007
    %v1009 = vxor.u32 %v1000, 2147483648
    %v1010 = vmul.f32 %v1009, 1.442695
    %v1011 = vpow.pop %v1010
    %v1012 = vadd.f32 %v1011, 1.0
    %v1013 = vrcp.pop %v1012
    %v1014 = vmul.f32 1.0, %v1013
    %v1015 = vtanh.pop %v1001
    %v1016 = vxor.u32 %v1002, 2147483648
    %v1017 = vmul.f32 %v1016, 1.442695
    %v1018 = vpow.pop %v1017
    %v1019 = vadd.f32 %v1018, 1.0
    %v1020 = vrcp.pop %v1019
    %v1021 = vmul.f32 1.0, %v1020
    %v1023 = vrot.slane %v776, 4
    %v1025 = vmul.f32 %v1014, %v1023
    %v1026 = vmul.f32 %v1008, %v1015
    %v1027 = vadd.f32 %v1025, %v1026
    %v1028 = vtanh.pop %v1027
    %v1029 = vmul.f32 %v1021, %v1028
    %1030 = vst [vmem:[#allocation3 - $0x4] sm:$0x30] %v1029
    %1031 = vst [vmem:[#allocation4 - $0x4] sm:$0x30] %v1027
    %1032 = vst [vmem:[#allocation11] sm:$0x30] %v1029
    %v1033 = vld [vmem:[#allocation3] sm:$0x3]
    %v1034 = vld [vmem:[#allocation4] sm:$0x3]
    %v1035 = vld [vmem:[#allocation2] sm:$0xc0]
    %v1036 = vld [vmem:[#allocation2 + $0x8] sm:$0xc0]
    %v1037 = vld [vmem:[#allocation2 + $0x10] sm:$0xc0]
    %v1038 = vld [vmem:[#allocation2 + $0x18] sm:$0xc0]
    %v1039 = vld [vmem:[#allocation10] sm:$0xff]
    %v1040 = vld [vmem:[#allocation10 + $0x8] sm:$0xff]
    %v1041 = vld [vmem:[#allocation10 + $0x10] sm:$0xff]
    %v1042 = vld [vmem:[#allocation10 + $0x18] sm:$0xff]
    %v1043 = vld [vmem:[#allocation10 + $0x20] sm:$0xff]
    %v1044 = vld [vmem:[#allocation10 + $0x28] sm:$0xff]
    %v1045 = vld [vmem:[#allocation10 + $0x30] sm:$0xff]
    %v1046 = vld [vmem:[#allocation10 + $0x38] sm:$0xff]
    %v1047 = vld [vmem:[#allocation10 + $0x40] sm:$0xff]
    %v1048 = vld [vmem:[#allocation10 + $0x48] sm:$0xff]
    %v1049 = vld [vmem:[#allocation10 + $0x50] sm:$0xff]
    %v1050 = vld [vmem:[#allocation10 + $0x58] sm:$0xff]
    %v1051 = vld [vmem:[#allocation10 + $0x60] sm:$0xff]
    %v1052 = vld [vmem:[#allocation10 + $0x68] sm:$0xff]
    %v1053 = vld [vmem:[#allocation10 + $0x70] sm:$0xff]
    %v1054 = vld [vmem:[#allocation10 + $0x78] sm:$0xff]
    %v1055 = vld [vmem:[#allocation10 + $0x80] sm:$0xff]
    %v1056 = vld [vmem:[#allocation10 + $0x88] sm:$0xff]
    %v1057 = vld [vmem:[#allocation10 + $0x90] sm:$0xff]
    %v1058 = vld [vmem:[#allocation10 + $0x98] sm:$0xff]
    %v1059 = vld [vmem:[#allocation10 + $0xa0] sm:$0xff]
    %v1060 = vld [vmem:[#allocation10 + $0xa8] sm:$0xff]
    %v1061 = vld [vmem:[#allocation10 + $0xb0] sm:$0xff]
    %v1062 = vld [vmem:[#allocation10 + $0xb8] sm:$0xff]
    %v1063 = vld [vmem:[#allocation10 + $0xc0] sm:$0xff]
    %v1064 = vld [vmem:[#allocation10 + $0xc8] sm:$0xff]
    %v1065 = vld [vmem:[#allocation10 + $0xd0] sm:$0xff]
    %v1066 = vld [vmem:[#allocation10 + $0xd8] sm:$0xff]
    %v1067 = vld [vmem:[#allocation10 + $0xe0] sm:$0xff]
    %v1068 = vld [vmem:[#allocation10 + $0xe8] sm:$0xff]
    %v1069 = vld [vmem:[#allocation10 + $0xf0] sm:$0xff]
    %v1070 = vld [vmem:[#allocation10 + $0xf8] sm:$0xff]
    %v1071 = vld [vmem:[#allocation10 + $0x100] sm:$0xff]
    %v1072 = vld [vmem:[#allocation10 + $0x108] sm:$0xff]
    %v1073 = vld [vmem:[#allocation10 + $0x110] sm:$0xff]
    %v1074 = vld [vmem:[#allocation10 + $0x118] sm:$0xff]
    %v1075 = vld [vmem:[#allocation10 + $0x120] sm:$0xff]
    %v1076 = vld [vmem:[#allocation10 + $0x128] sm:$0xff]
    %v1077 = vld [vmem:[#allocation10 + $0x130] sm:$0xff]
    %v1078 = vld [vmem:[#allocation10 + $0x138] sm:$0xff]
    %v1079 = vld [vmem:[#allocation10 + $0x140] sm:$0xff]
    %v1080 = vld [vmem:[#allocation10 + $0x148] sm:$0xff]
    %v1081 = vld [vmem:[#allocation10 + $0x150] sm:$0xff]
    %v1082 = vld [vmem:[#allocation10 + $0x158] sm:$0xff]
    %v1083 = vld [vmem:[#allocation10 + $0x160] sm:$0xff]
    %v1084 = vld [vmem:[#allocation10 + $0x168] sm:$0xff]
    %v1085 = vld [vmem:[#allocation10 + $0x170] sm:$0xff]
    %v1086 = vld [vmem:[#allocation10 + $0x178] sm:$0xff]
    %v1087 = vld [vmem:[#allocation10 + $0x180] sm:$0xff]
    %v1088 = vld [vmem:[#allocation10 + $0x188] sm:$0xff]
    %v1089 = vld [vmem:[#allocation10 + $0x190] sm:$0xff]
    %v1090 = vld [vmem:[#allocation10 + $0x198] sm:$0xff]
    %v1091 = vld [vmem:[#allocation10 + $0x1a0] sm:$0xff]
    %v1092 = vld [vmem:[#allocation10 + $0x1a8] sm:$0xff]
    %v1093 = vld [vmem:[#allocation10 + $0x1b0] sm:$0xff]
    %v1094 = vld [vmem:[#allocation10 + $0x1b8] sm:$0xff]
    %v1095 = vld [vmem:[#allocation10 + $0x1c0] sm:$0xff]
    %v1096 = vld [vmem:[#allocation10 + $0x1c8] sm:$0xff]
    %v1097 = vld [vmem:[#allocation10 + $0x1d0] sm:$0xff]
    %v1098 = vld [vmem:[#allocation10 + $0x1d8] sm:$0xff]
    %v1099 = vld [vmem:[#allocation10 + $0x1e0] sm:$0xff]
    %v1100 = vld [vmem:[#allocation10 + $0x1e8] sm:$0xff]
    %v1101 = vld [vmem:[#allocation10 + $0x1f0] sm:$0xff]
    %v1102 = vld [vmem:[#allocation10 + $0x1f8] sm:$0xff]
    %1103 = vmatprep.subr.mxu0 %v1040
    %1104 = vmatpush1.msra.mxu0 %v1039
    %1105 = vmatprep.subr.mxu0 %v1044
    %1106 = vmatpush1.msra.mxu0 %v1043
    %1107 = vmatprep.subr.mxu0 %v1048
    %1108 = vmatpush1.msra.mxu0 %v1047
    %1109 = vmatprep.subr.mxu0 %v1052
    %1110 = vmatpush1.msra.mxu0 %v1051
    %1111 = vmatprep.subr.mxu0 %v1056
    %1112 = vmatpush1.msra.mxu0 %v1055
    %1113 = vmatprep.subr.mxu0 %v1060
    %1114 = vmatpush1.msra.mxu0 %v1059
    %1115 = vmatprep.subr.mxu0 %v1064
    %1116 = vmatpush1.msra.mxu0 %v1063
    %1117 = vmatprep.subr.mxu0 %v1068
    %1118 = vmatpush1.msra.mxu0 %v1067
    %1119 = vmatprep.subr.mxu0 %v1072
    %1120 = vmatpush1.msra.mxu0 %v1071
    %1121 = vmatprep.subr.mxu0 %v1076
    %1122 = vmatpush1.msra.mxu0 %v1075
    %1123 = vmatprep.subr.mxu0 %v1080
    %1124 = vmatpush1.msra.mxu0 %v1079
    %1125 = vmatprep.subr.mxu0 %v1084
    %1126 = vmatpush1.msra.mxu0 %v1083
    %1127 = vmatprep.subr.mxu0 %v1088
    %1128 = vmatpush1.msra.mxu0 %v1087
    %1129 = vmatprep.subr.mxu0 %v1092
    %1130 = vmatpush1.msra.mxu0 %v1091
    %1131 = vmatprep.subr.mxu0 %v1096
    %1132 = vmatpush1.msra.mxu0 %v1095
    %1133 = vmatprep.subr.mxu0 %v1100
    %1134 = vmatpush1.msra.mxu0 %v1099
    %1135 = vmatprep.subr.mxu0 0.0
    %1136 = vmatpush1.msra.mxu0 0.0
    %1137 = vmatprep.subr.mxu0 0.0
    %1138 = vmatpush1.msra.mxu0 0.0
    %1139 = vmatprep.subr.mxu0 0.0
    %1140 = vmatpush1.msra.mxu0 0.0
    %1141 = vmatprep.subr.mxu0 0.0
    %1142 = vmatpush1.msra.mxu0 0.0
    %1143 = vmatprep.subr.mxu0 0.0
    %1144 = vmatpush1.msra.mxu0 0.0
    %1145 = vmatprep.subr.mxu0 0.0
    %1146 = vmatpush1.msra.mxu0 0.0
    %1147 = vmatprep.subr.mxu0 0.0
    %1148 = vmatpush1.msra.mxu0 0.0
    %1149 = vmatprep.subr.mxu0 0.0
    %1150 = vmatpush1.msra.mxu0 0.0
    %1151 = vmatprep.subr.mxu0 0.0
    %1152 = vmatpush1.msra.mxu0 0.0
    %1153 = vmatprep.subr.mxu0 0.0
    %1154 = vmatpush1.msra.mxu0 0.0
    %1155 = vmatprep.subr.mxu0 0.0
    %1156 = vmatpush1.msra.mxu0 0.0
    %1157 = vmatprep.subr.mxu0 0.0
    %1158 = vmatpush1.msra.mxu0 0.0
    %1159 = vmatprep.subr.mxu0 0.0
    %1160 = vmatpush1.msra.mxu0 0.0
    %1161 = vmatprep.subr.mxu0 0.0
    %1162 = vmatpush1.msra.mxu0 0.0
    %1163 = vmatprep.subr.mxu0 0.0
    %1164 = vmatpush1.msra.mxu0 0.0
    %1165 = vmatprep.subr.mxu0 0.0
    %1166 = vmatpush1.msra.mxu0 0.0
    %1167 = vmatprep.mubr.f32.mxu0 0.0
    %1168 = vmatmul.mubr.f32.gmra.mrb[0].mxu0 %v1033
    %v1169 = vpop.f32.mrb[0].mxu0
    %v1170 = vadd.f32 0.0, %v1169
    %v1171 = vpop.f32.mrb[0].mxu0
    %v1172 = vadd.f32 0.0, %v1171
    %1173 = vdwg.mxu0
    %1174 = vmatprep.subr.mxu0 %v1042
    %1175 = vmatpush1.msra.mxu0 %v1041
    %1176 = vmatprep.subr.mxu0 %v1046
    %1177 = vmatpush1.msra.mxu0 %v1045
    %1178 = vmatprep.subr.mxu0 %v1050
    %1179 = vmatpush1.msra.mxu0 %v1049
    %1180 = vmatprep.subr.mxu0 %v1054
    %1181 = vmatpush1.msra.mxu0 %v1053
    %1182 = vmatprep.subr.mxu0 %v1058
    %1183 = vmatpush1.msra.mxu0 %v1057
    %1184 = vmatprep.subr.mxu0 %v1062
    %1185 = vmatpush1.msra.mxu0 %v1061
    %1186 = vmatprep.subr.mxu0 %v1066
    %1187 = vmatpush1.msra.mxu0 %v1065
    %1188 = vmatprep.subr.mxu0 %v1070
    %1189 = vmatpush1.msra.mxu0 %v1069
    %1190 = vmatprep.subr.mxu0 %v1074
    %1191 = vmatpush1.msra.mxu0 %v1073
    %1192 = vmatprep.subr.mxu0 %v1078
    %1193 = vmatpush1.msra.mxu0 %v1077
    %1194 = vmatprep.subr.mxu0 %v1082
    %1195 = vmatpush1.msra.mxu0 %v1081
    %1196 = vmatprep.subr.mxu0 %v1086
    %1197 = vmatpush1.msra.mxu0 %v1085
    %1198 = vmatprep.subr.mxu0 %v1090
    %1199 = vmatpush1.msra.mxu0 %v1089
    %1200 = vmatprep.subr.mxu0 %v1094
    %1201 = vmatpush1.msra.mxu0 %v1093
    %1202 = vmatprep.subr.mxu0 %v1098
    %1203 = vmatpush1.msra.mxu0 %v1097
    %1204 = vmatprep.subr.mxu0 %v1102
    %1205 = vmatpush1.msra.mxu0 %v1101
    %1206 = vmatprep.subr.mxu0 0.0
    %1207 = vmatpush1.msra.mxu0 0.0
    %1208 = vmatprep.subr.mxu0 0.0
    %1209 = vmatpush1.msra.mxu0 0.0
    %1210 = vmatprep.subr.mxu0 0.0
    %1211 = vmatpush1.msra.mxu0 0.0
    %1212 = vmatprep.subr.mxu0 0.0
    %1213 = vmatpush1.msra.mxu0 0.0
    %1214 = vmatprep.subr.mxu0 0.0
    %1215 = vmatpush1.msra.mxu0 0.0
    %1216 = vmatprep.subr.mxu0 0.0
    %1217 = vmatpush1.msra.mxu0 0.0
    %1218 = vmatprep.subr.mxu0 0.0
    %1219 = vmatpush1.msra.mxu0 0.0
    %1220 = vmatprep.subr.mxu0 0.0
    %1221 = vmatpush1.msra.mxu0 0.0
    %1222 = vmatprep.subr.mxu0 0.0
    %1223 = vmatpush1.msra.mxu0 0.0
    %1224 = vmatprep.subr.mxu0 0.0
    %1225 = vmatpush1.msra.mxu0 0.0
    %1226 = vmatprep.subr.mxu0 0.0
    %1227 = vmatpush1.msra.mxu0 0.0
    %1228 = vmatprep.subr.mxu0 0.0
    %1229 = vmatpush1.msra.mxu0 0.0
    %1230 = vmatprep.subr.mxu0 0.0
    %1231 = vmatpush1.msra.mxu0 0.0
    %1232 = vmatprep.subr.mxu0 0.0
    %1233 = vmatpush1.msra.mxu0 0.0
    %1234 = vmatprep.subr.mxu0 0.0
    %1235 = vmatpush1.msra.mxu0 0.0
    %1236 = vmatprep.subr.mxu0 0.0
    %1237 = vmatpush1.msra.mxu0 0.0
    %1238 = vmatprep.mubr.f32.mxu0 0.0
    %1239 = vmatmul.mubr.f32.gmra.mrb[0].mxu0 %v1033
    %v1240 = vpop.f32.mrb[0].mxu0
    %v1241 = vadd.f32 0.0, %v1240
    %v1242 = vpop.f32.mrb[0].mxu0
    %v1243 = vadd.f32 0.0, %v1242
    %1244 = vdwg.mxu0
    %v1249 = vrot.slane %v1170, 2
    %v1250 = vrot.slane %v1172, 2
    %v1251 = vrot.slane %v1241, 2
    %v1252 = vrot.slane %v1243, 2
    %v1257 = vadd.f32 %v1035, %v1249
    %v1258 = vadd.f32 %v1036, %v1250
    %v1259 = vadd.f32 %v1037, %v1251
    %v1260 = vadd.f32 %v1038, %v1252
    %v1261 = vxor.u32 %v1257, 2147483648
    %v1262 = vmul.f32 %v1261, 1.442695
    %v1263 = vpow.pop %v1262
    %v1264 = vadd.f32 %v1263, 1.0
    %v1265 = vrcp.pop %v1264
    %v1266 = vmul.f32 1.0, %v1265
    %v1267 = vxor.u32 %v1258, 2147483648
    %v1268 = vmul.f32 %v1267, 1.442695
    %v1269 = vpow.pop %v1268
    %v1270 = vadd.f32 %v1269, 1.0
    %v1271 = vrcp.pop %v1270
    %v1272 = vmul.f32 1.0, %v1271
    %v1273 = vtanh.pop %v1259
    %v1274 = vxor.u32 %v1260, 2147483648
    %v1275 = vmul.f32 %v1274, 1.442695
    %v1276 = vpow.pop %v1275
    %v1277 = vadd.f32 %v1276, 1.0
    %v1278 = vrcp.pop %v1277
    %v1279 = vmul.f32 1.0, %v1278
    %v1281 = vrot.slane %v1034, 2
    %v1283 = vmul.f32 %v1272, %v1281
    %v1284 = vmul.f32 %v1266, %v1273
    %v1285 = vadd.f32 %v1283, %v1284
    %v1286 = vtanh.pop %v1285
    %v1287 = vmul.f32 %v1279, %v1286
    %1288 = vst [vmem:[#allocation3 - $0x6] sm:$0xc0] %v1287
    %1289 = vst [vmem:[#allocation4 - $0x6] sm:$0xc0] %v1285
    %1290 = vst [vmem:[#allocation11] sm:$0xc0] %v1287
    %v1291 = vld [vmem:[#allocation3] sm:$0x3]
    %v1292 = vld [vmem:[#allocation4] sm:$0x3]
    %v1293 = vld [vmem:[#allocation2 + $0x20] sm:$0x3]
    %v1294 = vld [vmem:[#allocation2 + $0x28] sm:$0x3]
    %v1295 = vld [vmem:[#allocation2 + $0x30] sm:$0x3]
    %v1296 = vld [vmem:[#allocation2 + $0x38] sm:$0x3]
    %v1297 = vld [vmem:[#allocation10] sm:$0xff]
    %v1298 = vld [vmem:[#allocation10 + $0x8] sm:$0xff]
    %v1299 = vld [vmem:[#allocation10 + $0x10] sm:$0xff]
    %v1300 = vld [vmem:[#allocation10 + $0x18] sm:$0xff]
    %v1301 = vld [vmem:[#allocation10 + $0x20] sm:$0xff]
    %v1302 = vld [vmem:[#allocation10 + $0x28] sm:$0xff]
    %v1303 = vld [vmem:[#allocation10 + $0x30] sm:$0xff]
    %v1304 = vld [vmem:[#allocation10 + $0x38] sm:$0xff]
    %v1305 = vld [vmem:[#allocation10 + $0x40] sm:$0xff]
    %v1306 = vld [vmem:[#allocation10 + $0x48] sm:$0xff]
    %v1307 = vld [vmem:[#allocation10 + $0x50] sm:$0xff]
    %v1308 = vld [vmem:[#allocation10 + $0x58] sm:$0xff]
    %v1309 = vld [vmem:[#allocation10 + $0x60] sm:$0xff]
    %v1310 = vld [vmem:[#allocation10 + $0x68] sm:$0xff]
    %v1311 = vld [vmem:[#allocation10 + $0x70] sm:$0xff]
    %v1312 = vld [vmem:[#allocation10 + $0x78] sm:$0xff]
    %v1313 = vld [vmem:[#allocation10 + $0x80] sm:$0xff]
    %v1314 = vld [vmem:[#allocation10 + $0x88] sm:$0xff]
    %v1315 = vld [vmem:[#allocation10 + $0x90] sm:$0xff]
    %v1316 = vld [vmem:[#allocation10 + $0x98] sm:$0xff]
    %v1317 = vld [vmem:[#allocation10 + $0xa0] sm:$0xff]
    %v1318 = vld [vmem:[#allocation10 + $0xa8] sm:$0xff]
    %v1319 = vld [vmem:[#allocation10 + $0xb0] sm:$0xff]
    %v1320 = vld [vmem:[#allocation10 + $0xb8] sm:$0xff]
    %v1321 = vld [vmem:[#allocation10 + $0xc0] sm:$0xff]
    %v1322 = vld [vmem:[#allocation10 + $0xc8] sm:$0xff]
    %v1323 = vld [vmem:[#allocation10 + $0xd0] sm:$0xff]
    %v1324 = vld [vmem:[#allocation10 + $0xd8] sm:$0xff]
    %v1325 = vld [vmem:[#allocation10 + $0xe0] sm:$0xff]
    %v1326 = vld [vmem:[#allocation10 + $0xe8] sm:$0xff]
    %v1327 = vld [vmem:[#allocation10 + $0xf0] sm:$0xff]
    %v1328 = vld [vmem:[#allocation10 + $0xf8] sm:$0xff]
    %v1329 = vld [vmem:[#allocation10 + $0x100] sm:$0xff]
    %v1330 = vld [vmem:[#allocation10 + $0x108] sm:$0xff]
    %v1331 = vld [vmem:[#allocation10 + $0x110] sm:$0xff]
    %v1332 = vld [vmem:[#allocation10 + $0x118] sm:$0xff]
    %v1333 = vld [vmem:[#allocation10 + $0x120] sm:$0xff]
    %v1334 = vld [vmem:[#allocation10 + $0x128] sm:$0xff]
    %v1335 = vld [vmem:[#allocation10 + $0x130] sm:$0xff]
    %v1336 = vld [vmem:[#allocation10 + $0x138] sm:$0xff]
    %v1337 = vld [vmem:[#allocation10 + $0x140] sm:$0xff]
    %v1338 = vld [vmem:[#allocation10 + $0x148] sm:$0xff]
    %v1339 = vld [vmem:[#allocation10 + $0x150] sm:$0xff]
    %v1340 = vld [vmem:[#allocation10 + $0x158] sm:$0xff]
    %v1341 = vld [vmem:[#allocation10 + $0x160] sm:$0xff]
    %v1342 = vld [vmem:[#allocation10 + $0x168] sm:$0xff]
    %v1343 = vld [vmem:[#allocation10 + $0x170] sm:$0xff]
    %v1344 = vld [vmem:[#allocation10 + $0x178] sm:$0xff]
    %v1345 = vld [vmem:[#allocation10 + $0x180] sm:$0xff]
    %v1346 = vld [vmem:[#allocation10 + $0x188] sm:$0xff]
    %v1347 = vld [vmem:[#allocation10 + $0x190] sm:$0xff]
    %v1348 = vld [vmem:[#allocation10 + $0x198] sm:$0xff]
    %v1349 = vld [vmem:[#allocation10 + $0x1a0] sm:$0xff]
    %v1350 = vld [vmem:[#allocation10 + $0x1a8] sm:$0xff]
    %v1351 = vld [vmem:[#allocation10 + $0x1b0] sm:$0xff]
    %v1352 = vld [vmem:[#allocation10 + $0x1b8] sm:$0xff]
    %v1353 = vld [vmem:[#allocation10 + $0x1c0] sm:$0xff]
    %v1354 = vld [vmem:[#allocation10 + $0x1c8] sm:$0xff]
    %v1355 = vld [vmem:[#allocation10 + $0x1d0] sm:$0xff]
    %v1356 = vld [vmem:[#allocation10 + $0x1d8] sm:$0xff]
    %v1357 = vld [vmem:[#allocation10 + $0x1e0] sm:$0xff]
    %v1358 = vld [vmem:[#allocation10 + $0x1e8] sm:$0xff]
    %v1359 = vld [vmem:[#allocation10 + $0x1f0] sm:$0xff]
    %v1360 = vld [vmem:[#allocation10 + $0x1f8] sm:$0xff]
    %1361 = vmatprep.subr.mxu0 %v1298
    %1362 = vmatpush1.msra.mxu0 %v1297
    %1363 = vmatprep.subr.mxu0 %v1302
    %1364 = vmatpush1.msra.mxu0 %v1301
    %1365 = vmatprep.subr.mxu0 %v1306
    %1366 = vmatpush1.msra.mxu0 %v1305
    %1367 = vmatprep.subr.mxu0 %v1310
    %1368 = vmatpush1.msra.mxu0 %v1309
    %1369 = vmatprep.subr.mxu0 %v1314
    %1370 = vmatpush1.msra.mxu0 %v1313
    %1371 = vmatprep.subr.mxu0 %v1318
    %1372 = vmatpush1.msra.mxu0 %v1317
    %1373 = vmatprep.subr.mxu0 %v1322
    %1374 = vmatpush1.msra.mxu0 %v1321
    %1375 = vmatprep.subr.mxu0 %v1326
    %1376 = vmatpush1.msra.mxu0 %v1325
    %1377 = vmatprep.subr.mxu0 %v1330
    %1378 = vmatpush1.msra.mxu0 %v1329
    %1379 = vmatprep.subr.mxu0 %v1334
    %1380 = vmatpush1.msra.mxu0 %v1333
    %1381 = vmatprep.subr.mxu0 %v1338
    %1382 = vmatpush1.msra.mxu0 %v1337
    %1383 = vmatprep.subr.mxu0 %v1342
    %1384 = vmatpush1.msra.mxu0 %v1341
    %1385 = vmatprep.subr.mxu0 %v1346
    %1386 = vmatpush1.msra.mxu0 %v1345
    %1387 = vmatprep.subr.mxu0 %v1350
    %1388 = vmatpush1.msra.mxu0 %v1349
    %1389 = vmatprep.subr.mxu0 %v1354
    %1390 = vmatpush1.msra.mxu0 %v1353
    %1391 = vmatprep.subr.mxu0 %v1358
    %1392 = vmatpush1.msra.mxu0 %v1357
    %1393 = vmatprep.subr.mxu0 0.0
    %1394 = vmatpush1.msra.mxu0 0.0
    %1395 = vmatprep.subr.mxu0 0.0
    %1396 = vmatpush1.msra.mxu0 0.0
    %1397 = vmatprep.subr.mxu0 0.0
    %1398 = vmatpush1.msra.mxu0 0.0
    %1399 = vmatprep.subr.mxu0 0.0
    %1400 = vmatpush1.msra.mxu0 0.0
    %1401 = vmatprep.subr.mxu0 0.0
    %1402 = vmatpush1.msra.mxu0 0.0
    %1403 = vmatprep.subr.mxu0 0.0
    %1404 = vmatpush1.msra.mxu0 0.0
    %1405 = vmatprep.subr.mxu0 0.0
    %1406 = vmatpush1.msra.mxu0 0.0
    %1407 = vmatprep.subr.mxu0 0.0
    %1408 = vmatpush1.msra.mxu0 0.0
    %1409 = vmatprep.subr.mxu0 0.0
    %1410 = vmatpush1.msra.mxu0 0.0
    %1411 = vmatprep.subr.mxu0 0.0
    %1412 = vmatpush1.msra.mxu0 0.0
    %1413 = vmatprep.subr.mxu0 0.0
    %1414 = vmatpush1.msra.mxu0 0.0
    %1415 = vmatprep.subr.mxu0 0.0
    %1416 = vmatpush1.msra.mxu0 0.0
    %1417 = vmatprep.subr.mxu0 0.0
    %1418 = vmatpush1.msra.mxu0 0.0
    %1419 = vmatprep.subr.mxu0 0.0
    %1420 = vmatpush1.msra.mxu0 0.0
    %1421 = vmatprep.subr.mxu0 0.0
    %1422 = vmatpush1.msra.mxu0 0.0
    %1423 = vmatprep.subr.mxu0 0.0
    %1424 = vmatpush1.msra.mxu0 0.0
    %1425 = vmatprep.mubr.f32.mxu0 0.0
    %1426 = vmatmul.mubr.f32.gmra.mrb[0].mxu0 %v1291
    %v1427 = vpop.f32.mrb[0].mxu0
    %v1428 = vadd.f32 0.0, %v1427
    %v1429 = vpop.f32.mrb[0].mxu0
    %v1430 = vadd.f32 0.0, %v1429
    %1431 = vdwg.mxu0
    %1432 = vmatprep.subr.mxu0 %v1300
    %1433 = vmatpush1.msra.mxu0 %v1299
    %1434 = vmatprep.subr.mxu0 %v1304
    %1435 = vmatpush1.msra.mxu0 %v1303
    %1436 = vmatprep.subr.mxu0 %v1308
    %1437 = vmatpush1.msra.mxu0 %v1307
    %1438 = vmatprep.subr.mxu0 %v1312
    %1439 = vmatpush1.msra.mxu0 %v1311
    %1440 = vmatprep.subr.mxu0 %v1316
    %1441 = vmatpush1.msra.mxu0 %v1315
    %1442 = vmatprep.subr.mxu0 %v1320
    %1443 = vmatpush1.msra.mxu0 %v1319
    %1444 = vmatprep.subr.mxu0 %v1324
    %1445 = vmatpush1.msra.mxu0 %v1323
    %1446 = vmatprep.subr.mxu0 %v1328
    %1447 = vmatpush1.msra.mxu0 %v1327
    %1448 = vmatprep.subr.mxu0 %v1332
    %1449 = vmatpush1.msra.mxu0 %v1331
    %1450 = vmatprep.subr.mxu0 %v1336
    %1451 = vmatpush1.msra.mxu0 %v1335
    %1452 = vmatprep.subr.mxu0 %v1340
    %1453 = vmatpush1.msra.mxu0 %v1339
    %1454 = vmatprep.subr.mxu0 %v1344
    %1455 = vmatpush1.msra.mxu0 %v1343
    %1456 = vmatprep.subr.mxu0 %v1348
    %1457 = vmatpush1.msra.mxu0 %v1347
    %1458 = vmatprep.subr.mxu0 %v1352
    %1459 = vmatpush1.msra.mxu0 %v1351
    %1460 = vmatprep.subr.mxu0 %v1356
    %1461 = vmatpush1.msra.mxu0 %v1355
    %1462 = vmatprep.subr.mxu0 %v1360
    %1463 = vmatpush1.msra.mxu0 %v1359
    %1464 = vmatprep.subr.mxu0 0.0
    %1465 = vmatpush1.msra.mxu0 0.0
    %1466 = vmatprep.subr.mxu0 0.0
    %1467 = vmatpush1.msra.mxu0 0.0
    %1468 = vmatprep.subr.mxu0 0.0
    %1469 = vmatpush1.msra.mxu0 0.0
    %1470 = vmatprep.subr.mxu0 0.0
    %1471 = vmatpush1.msra.mxu0 0.0
    %1472 = vmatprep.subr.mxu0 0.0
    %1473 = vmatpush1.msra.mxu0 0.0
    %1474 = vmatprep.subr.mxu0 0.0
    %1475 = vmatpush1.msra.mxu0 0.0
    %1476 = vmatprep.subr.mxu0 0.0
    %1477 = vmatpush1.msra.mxu0 0.0
    %1478 = vmatprep.subr.mxu0 0.0
    %1479 = vmatpush1.msra.mxu0 0.0
    %1480 = vmatprep.subr.mxu0 0.0
    %1481 = vmatpush1.msra.mxu0 0.0
    %1482 = vmatprep.subr.mxu0 0.0
    %1483 = vmatpush1.msra.mxu0 0.0
    %1484 = vmatprep.subr.mxu0 0.0
    %1485 = vmatpush1.msra.mxu0 0.0
    %1486 = vmatprep.subr.mxu0 0.0
    %1487 = vmatpush1.msra.mxu0 0.0
    %1488 = vmatprep.subr.mxu0 0.0
    %1489 = vmatpush1.msra.mxu0 0.0
    %1490 = vmatprep.subr.mxu0 0.0
    %1491 = vmatpush1.msra.mxu0 0.0
    %1492 = vmatprep.subr.mxu0 0.0
    %1493 = vmatpush1.msra.mxu0 0.0
    %1494 = vmatprep.subr.mxu0 0.0
    %1495 = vmatpush1.msra.mxu0 0.0
    %1496 = vmatprep.mubr.f32.mxu0 0.0
    %1497 = vmatmul.mubr.f32.gmra.mrb[0].mxu0 %v1291
    %v1498 = vpop.f32.mrb[0].mxu0
    %v1499 = vadd.f32 0.0, %v1498
    %v1500 = vpop.f32.mrb[0].mxu0
    %v1501 = vadd.f32 0.0, %v1500
    %1502 = vdwg.mxu0
    %v1503 = vadd.f32 %v1293, %v1428
    %v1504 = vadd.f32 %v1294, %v1430
    %v1505 = vadd.f32 %v1295, %v1499
    %v1506 = vadd.f32 %v1296, %v1501
    %v1507 = vxor.u32 %v1503, 2147483648
    %v1508 = vmul.f32 %v1507, 1.442695
    %v1509 = vpow.pop %v1508
    %v1510 = vadd.f32 %v1509, 1.0
    %v1511 = vrcp.pop %v1510
    %v1512 = vmul.f32 1.0, %v1511
    %v1513 = vxor.u32 %v1504, 2147483648
    %v1514 = vmul.f32 %v1513, 1.442695
    %v1515 = vpow.pop %v1514
    %v1516 = vadd.f32 %v1515, 1.0
    %v1517 = vrcp.pop %v1516
    %v1518 = vmul.f32 1.0, %v1517
    %v1519 = vtanh.pop %v1505
    %v1520 = vxor.u32 %v1506, 2147483648
    %v1521 = vmul.f32 %v1520, 1.442695
    %v1522 = vpow.pop %v1521
    %v1523 = vadd.f32 %v1522, 1.0
    %v1524 = vrcp.pop %v1523
    %v1525 = vmul.f32 1.0, %v1524
    %v1526 = vmul.f32 %v1518, %v1292
    %v1527 = vmul.f32 %v1512, %v1519
    %v1528 = vadd.f32 %v1526, %v1527
    %v1529 = vtanh.pop %v1528
    %v1530 = vmul.f32 %v1525, %v1529
    %1531 = vst [vmem:[#allocation3] sm:$0x3] %v1530
    %1532 = vst [vmem:[#allocation4] sm:$0x3] %v1528
    %1533 = vst [vmem:[#allocation11 + $0x8] sm:$0x3] %v1530
    %v1534 = vld [vmem:[#allocation3] sm:$0x3]
    %v1535 = vld [vmem:[#allocation4] sm:$0x3]
    %v1536 = vld [vmem:[#allocation2 + $0x20] sm:$0xc]
    %v1537 = vld [vmem:[#allocation2 + $0x28] sm:$0xc]
    %v1538 = vld [vmem:[#allocation2 + $0x30] sm:$0xc]
    %v1539 = vld [vmem:[#allocation2 + $0x38] sm:$0xc]
    %v1540 = vld [vmem:[#allocation10] sm:$0xff]
    %v1541 = vld [vmem:[#allocation10 + $0x8] sm:$0xff]
    %v1542 = vld [vmem:[#allocation10 + $0x10] sm:$0xff]
    %v1543 = vld [vmem:[#allocation10 + $0x18] sm:$0xff]
    %v1544 = vld [vmem:[#allocation10 + $0x20] sm:$0xff]
    %v1545 = vld [vmem:[#allocation10 + $0x28] sm:$0xff]
    %v1546 = vld [vmem:[#allocation10 + $0x30] sm:$0xff]
    %v1547 = vld [vmem:[#allocation10 + $0x38] sm:$0xff]
    %v1548 = vld [vmem:[#allocation10 + $0x40] sm:$0xff]
    %v1549 = vld [vmem:[#allocation10 + $0x48] sm:$0xff]
    %v1550 = vld [vmem:[#allocation10 + $0x50] sm:$0xff]
    %v1551 = vld [vmem:[#allocation10 + $0x58] sm:$0xff]
    %v1552 = vld [vmem:[#allocation10 + $0x60] sm:$0xff]
    %v1553 = vld [vmem:[#allocation10 + $0x68] sm:$0xff]
    %v1554 = vld [vmem:[#allocation10 + $0x70] sm:$0xff]
    %v1555 = vld [vmem:[#allocation10 + $0x78] sm:$0xff]
    %v1556 = vld [vmem:[#allocation10 + $0x80] sm:$0xff]
    %v1557 = vld [vmem:[#allocation10 + $0x88] sm:$0xff]
    %v1558 = vld [vmem:[#allocation10 + $0x90] sm:$0xff]
    %v1559 = vld [vmem:[#allocation10 + $0x98] sm:$0xff]
    %v1560 = vld [vmem:[#allocation10 + $0xa0] sm:$0xff]
    %v1561 = vld [vmem:[#allocation10 + $0xa8] sm:$0xff]
    %v1562 = vld [vmem:[#allocation10 + $0xb0] sm:$0xff]
    %v1563 = vld [vmem:[#allocation10 + $0xb8] sm:$0xff]
    %v1564 = vld [vmem:[#allocation10 + $0xc0] sm:$0xff]
    %v1565 = vld [vmem:[#allocation10 + $0xc8] sm:$0xff]
    %v1566 = vld [vmem:[#allocation10 + $0xd0] sm:$0xff]
    %v1567 = vld [vmem:[#allocation10 + $0xd8] sm:$0xff]
    %v1568 = vld [vmem:[#allocation10 + $0xe0] sm:$0xff]
    %v1569 = vld [vmem:[#allocation10 + $0xe8] sm:$0xff]
    %v1570 = vld [vmem:[#allocation10 + $0xf0] sm:$0xff]
    %v1571 = vld [vmem:[#allocation10 + $0xf8] sm:$0xff]
    %v1572 = vld [vmem:[#allocation10 + $0x100] sm:$0xff]
    %v1573 = vld [vmem:[#allocation10 + $0x108] sm:$0xff]
    %v1574 = vld [vmem:[#allocation10 + $0x110] sm:$0xff]
    %v1575 = vld [vmem:[#allocation10 + $0x118] sm:$0xff]
    %v1576 = vld [vmem:[#allocation10 + $0x120] sm:$0xff]
    %v1577 = vld [vmem:[#allocation10 + $0x128] sm:$0xff]
    %v1578 = vld [vmem:[#allocation10 + $0x130] sm:$0xff]
    %v1579 = vld [vmem:[#allocation10 + $0x138] sm:$0xff]
    %v1580 = vld [vmem:[#allocation10 + $0x140] sm:$0xff]
    %v1581 = vld [vmem:[#allocation10 + $0x148] sm:$0xff]
    %v1582 = vld [vmem:[#allocation10 + $0x150] sm:$0xff]
    %v1583 = vld [vmem:[#allocation10 + $0x158] sm:$0xff]
    %v1584 = vld [vmem:[#allocation10 + $0x160] sm:$0xff]
    %v1585 = vld [vmem:[#allocation10 + $0x168] sm:$0xff]
    %v1586 = vld [vmem:[#allocation10 + $0x170] sm:$0xff]
    %v1587 = vld [vmem:[#allocation10 + $0x178] sm:$0xff]
    %v1588 = vld [vmem:[#allocation10 + $0x180] sm:$0xff]
    %v1589 = vld [vmem:[#allocation10 + $0x188] sm:$0xff]
    %v1590 = vld [vmem:[#allocation10 + $0x190] sm:$0xff]
    %v1591 = vld [vmem:[#allocation10 + $0x198] sm:$0xff]
    %v1592 = vld [vmem:[#allocation10 + $0x1a0] sm:$0xff]
    %v1593 = vld [vmem:[#allocation10 + $0x1a8] sm:$0xff]
    %v1594 = vld [vmem:[#allocation10 + $0x1b0] sm:$0xff]
    %v1595 = vld [vmem:[#allocation10 + $0x1b8] sm:$0xff]
    %v1596 = vld [vmem:[#allocation10 + $0x1c0] sm:$0xff]
    %v1597 = vld [vmem:[#allocation10 + $0x1c8] sm:$0xff]
    %v1598 = vld [vmem:[#allocation10 + $0x1d0] sm:$0xff]
    %v1599 = vld [vmem:[#allocation10 + $0x1d8] sm:$0xff]
    %v1600 = vld [vmem:[#allocation10 + $0x1e0] sm:$0xff]
    %v1601 = vld [vmem:[#allocation10 + $0x1e8] sm:$0xff]
    %v1602 = vld [vmem:[#allocation10 + $0x1f0] sm:$0xff]
    %v1603 = vld [vmem:[#allocation10 + $0x1f8] sm:$0xff]
    %1604 = vmatprep.subr.mxu0 %v1541
    %1605 = vmatpush1.msra.mxu0 %v1540
    %1606 = vmatprep.subr.mxu0 %v1545
    %1607 = vmatpush1.msra.mxu0 %v1544
    %1608 = vmatprep.subr.mxu0 %v1549
    %1609 = vmatpush1.msra.mxu0 %v1548
    %1610 = vmatprep.subr.mxu0 %v1553
    %1611 = vmatpush1.msra.mxu0 %v1552
    %1612 = vmatprep.subr.mxu0 %v1557
    %1613 = vmatpush1.msra.mxu0 %v1556
    %1614 = vmatprep.subr.mxu0 %v1561
    %1615 = vmatpush1.msra.mxu0 %v1560
    %1616 = vmatprep.subr.mxu0 %v1565
    %1617 = vmatpush1.msra.mxu0 %v1564
    %1618 = vmatprep.subr.mxu0 %v1569
    %1619 = vmatpush1.msra.mxu0 %v1568
    %1620 = vmatprep.subr.mxu0 %v1573
    %1621 = vmatpush1.msra.mxu0 %v1572
    %1622 = vmatprep.subr.mxu0 %v1577
    %1623 = vmatpush1.msra.mxu0 %v1576
    %1624 = vmatprep.subr.mxu0 %v1581
    %1625 = vmatpush1.msra.mxu0 %v1580
    %1626 = vmatprep.subr.mxu0 %v1585
    %1627 = vmatpush1.msra.mxu0 %v1584
    %1628 = vmatprep.subr.mxu0 %v1589
    %1629 = vmatpush1.msra.mxu0 %v1588
    %1630 = vmatprep.subr.mxu0 %v1593
    %1631 = vmatpush1.msra.mxu0 %v1592
    %1632 = vmatprep.subr.mxu0 %v1597
    %1633 = vmatpush1.msra.mxu0 %v1596
    %1634 = vmatprep.subr.mxu0 %v1601
    %1635 = vmatpush1.msra.mxu0 %v1600
    %1636 = vmatprep.subr.mxu0 0.0
    %1637 = vmatpush1.msra.mxu0 0.0
    %1638 = vmatprep.subr.mxu0 0.0
    %1639 = vmatpush1.msra.mxu0 0.0
    %1640 = vmatprep.subr.mxu0 0.0
    %1641 = vmatpush1.msra.mxu0 0.0
    %1642 = vmatprep.subr.mxu0 0.0
    %1643 = vmatpush1.msra.mxu0 0.0
    %1644 = vmatprep.subr.mxu0 0.0
    %1645 = vmatpush1.msra.mxu0 0.0
    %1646 = vmatprep.subr.mxu0 0.0
    %1647 = vmatpush1.msra.mxu0 0.0
    %1648 = vmatprep.subr.mxu0 0.0
    %1649 = vmatpush1.msra.mxu0 0.0
    %1650 = vmatprep.subr.mxu0 0.0
    %1651 = vmatpush1.msra.mxu0 0.0
    %1652 = vmatprep.subr.mxu0 0.0
    %1653 = vmatpush1.msra.mxu0 0.0
    %1654 = vmatprep.subr.mxu0 0.0
    %1655 = vmatpush1.msra.mxu0 0.0
    %1656 = vmatprep.subr.mxu0 0.0
    %1657 = vmatpush1.msra.mxu0 0.0
    %1658 = vmatprep.subr.mxu0 0.0
    %1659 = vmatpush1.msra.mxu0 0.0
    %1660 = vmatprep.subr.mxu0 0.0
    %1661 = vmatpush1.msra.mxu0 0.0
    %1662 = vmatprep.subr.mxu0 0.0
    %1663 = vmatpush1.msra.mxu0 0.0
    %1664 = vmatprep.subr.mxu0 0.0
    %1665 = vmatpush1.msra.mxu0 0.0
    %1666 = vmatprep.subr.mxu0 0.0
    %1667 = vmatpush1.msra.mxu0 0.0
    %1668 = vmatprep.mubr.f32.mxu0 0.0
    %1669 = vmatmul.mubr.f32.gmra.mrb[0].mxu0 %v1534
    %v1670 = vpop.f32.mrb[0].mxu0
    %v1671 = vadd.f32 0.0, %v1670
    %v1672 = vpop.f32.mrb[0].mxu0
    %v1673 = vadd.f32 0.0, %v1672
    %1674 = vdwg.mxu0
    %1675 = vmatprep.subr.mxu0 %v1543
    %1676 = vmatpush1.msra.mxu0 %v1542
    %1677 = vmatprep.subr.mxu0 %v1547
    %1678 = vmatpush1.msra.mxu0 %v1546
    %1679 = vmatprep.subr.mxu0 %v1551
    %1680 = vmatpush1.msra.mxu0 %v1550
    %1681 = vmatprep.subr.mxu0 %v1555
    %1682 = vmatpush1.msra.mxu0 %v1554
    %1683 = vmatprep.subr.mxu0 %v1559
    %1684 = vmatpush1.msra.mxu0 %v1558
    %1685 = vmatprep.subr.mxu0 %v1563
    %1686 = vmatpush1.msra.mxu0 %v1562
    %1687 = vmatprep.subr.mxu0 %v1567
    %1688 = vmatpush1.msra.mxu0 %v1566
    %1689 = vmatprep.subr.mxu0 %v1571
    %1690 = vmatpush1.msra.mxu0 %v1570
    %1691 = vmatprep.subr.mxu0 %v1575
    %1692 = vmatpush1.msra.mxu0 %v1574
    %1693 = vmatprep.subr.mxu0 %v1579
    %1694 = vmatpush1.msra.mxu0 %v1578
    %1695 = vmatprep.subr.mxu0 %v1583
    %1696 = vmatpush1.msra.mxu0 %v1582
    %1697 = vmatprep.subr.mxu0 %v1587
    %1698 = vmatpush1.msra.mxu0 %v1586
    %1699 = vmatprep.subr.mxu0 %v1591
    %1700 = vmatpush1.msra.mxu0 %v1590
    %1701 = vmatprep.subr.mxu0 %v1595
    %1702 = vmatpush1.msra.mxu0 %v1594
    %1703 = vmatprep.subr.mxu0 %v1599
    %1704 = vmatpush1.msra.mxu0 %v1598
    %1705 = vmatprep.subr.mxu0 %v1603
    %1706 = vmatpush1.msra.mxu0 %v1602
    %1707 = vmatprep.subr.mxu0 0.0
    %1708 = vmatpush1.msra.mxu0 0.0
    %1709 = vmatprep.subr.mxu0 0.0
    %1710 = vmatpush1.msra.mxu0 0.0
    %1711 = vmatprep.subr.mxu0 0.0
    %1712 = vmatpush1.msra.mxu0 0.0
    %1713 = vmatprep.subr.mxu0 0.0
    %1714 = vmatpush1.msra.mxu0 0.0
    %1715 = vmatprep.subr.mxu0 0.0
    %1716 = vmatpush1.msra.mxu0 0.0
    %1717 = vmatprep.subr.mxu0 0.0
    %1718 = vmatpush1.msra.mxu0 0.0
    %1719 = vmatprep.subr.mxu0 0.0
    %1720 = vmatpush1.msra.mxu0 0.0
    %1721 = vmatprep.subr.mxu0 0.0
    %1722 = vmatpush1.msra.mxu0 0.0
    %1723 = vmatprep.subr.mxu0 0.0
    %1724 = vmatpush1.msra.mxu0 0.0
    %1725 = vmatprep.subr.mxu0 0.0
    %1726 = vmatpush1.msra.mxu0 0.0
    %1727 = vmatprep.subr.mxu0 0.0
    %1728 = vmatpush1.msra.mxu0 0.0
    %1729 = vmatprep.subr.mxu0 0.0
    %1730 = vmatpush1.msra.mxu0 0.0
    %1731 = vmatprep.subr.mxu0 0.0
    %1732 = vmatpush1.msra.mxu0 0.0
    %1733 = vmatprep.subr.mxu0 0.0
    %1734 = vmatpush1.msra.mxu0 0.0
    %1735 = vmatprep.subr.mxu0 0.0
    %1736 = vmatpush1.msra.mxu0 0.0
    %1737 = vmatprep.subr.mxu0 0.0
    %1738 = vmatpush1.msra.mxu0 0.0
    %1739 = vmatprep.mubr.f32.mxu0 0.0
    %1740 = vmatmul.mubr.f32.gmra.mrb[0].mxu0 %v1534
    %v1741 = vpop.f32.mrb[0].mxu0
    %v1742 = vadd.f32 0.0, %v1741
    %v1743 = vpop.f32.mrb[0].mxu0
    %v1744 = vadd.f32 0.0, %v1743
    %1745 = vdwg.mxu0
    %v1750 = vrot.slane %v1671, 6
    %v1751 = vrot.slane %v1673, 6
    %v1752 = vrot.slane %v1742, 6
    %v1753 = vrot.slane %v1744, 6
    %v1758 = vadd.f32 %v1536, %v1750
    %v1759 = vadd.f32 %v1537, %v1751
    %v1760 = vadd.f32 %v1538, %v1752
    %v1761 = vadd.f32 %v1539, %v1753
    %v1762 = vxor.u32 %v1758, 2147483648
    %v1763 = vmul.f32 %v1762, 1.442695
    %v1764 = vpow.pop %v1763
    %v1765 = vadd.f32 %v1764, 1.0
    %v1766 = vrcp.pop %v1765
    %v1767 = vmul.f32 1.0, %v1766
    %v1768 = vxor.u32 %v1759, 2147483648
    %v1769 = vmul.f32 %v1768, 1.442695
    %v1770 = vpow.pop %v1769
    %v1771 = vadd.f32 %v1770, 1.0
    %v1772 = vrcp.pop %v1771
    %v1773 = vmul.f32 1.0, %v1772
    %v1774 = vtanh.pop %v1760
    %v1775 = vxor.u32 %v1761, 2147483648
    %v1776 = vmul.f32 %v1775, 1.442695
    %v1777 = vpow.pop %v1776
    %v1778 = vadd.f32 %v1777, 1.0
    %v1779 = vrcp.pop %v1778
    %v1780 = vmul.f32 1.0, %v1779
    %v1782 = vrot.slane %v1535, 6
    %v1784 = vmul.f32 %v1773, %v1782
    %v1785 = vmul.f32 %v1767, %v1774
    %v1786 = vadd.f32 %v1784, %v1785
    %v1787 = vtanh.pop %v1786
    %v1788 = vmul.f32 %v1780, %v1787
    %1789 = vst [vmem:[#allocation3 - $0x2] sm:$0xc] %v1788
    %1790 = vst [vmem:[#allocation4 - $0x2] sm:$0xc] %v1786
    %1791 = vst [vmem:[#allocation11 + $0x8] sm:$0xc] %v1788
    %v1792 = vld [vmem:[#allocation3] sm:$0x3]
    %v1793 = vld [vmem:[#allocation4] sm:$0x3]
    %v1794 = vld [vmem:[#allocation2 + $0x20] sm:$0x30]
    %v1795 = vld [vmem:[#allocation2 + $0x28] sm:$0x30]
    %v1796 = vld [vmem:[#allocation2 + $0x30] sm:$0x30]
    %v1797 = vld [vmem:[#allocation2 + $0x38] sm:$0x30]
    %v1798 = vld [vmem:[#allocation10] sm:$0xff]
    %v1799 = vld [vmem:[#allocation10 + $0x8] sm:$0xff]
    %v1800 = vld [vmem:[#allocation10 + $0x10] sm:$0xff]
    %v1801 = vld [vmem:[#allocation10 + $0x18] sm:$0xff]
    %v1802 = vld [vmem:[#allocation10 + $0x20] sm:$0xff]
    %v1803 = vld [vmem:[#allocation10 + $0x28] sm:$0xff]
    %v1804 = vld [vmem:[#allocation10 + $0x30] sm:$0xff]
    %v1805 = vld [vmem:[#allocation10 + $0x38] sm:$0xff]
    %v1806 = vld [vmem:[#allocation10 + $0x40] sm:$0xff]
    %v1807 = vld [vmem:[#allocation10 + $0x48] sm:$0xff]
    %v1808 = vld [vmem:[#allocation10 + $0x50] sm:$0xff]
    %v1809 = vld [vmem:[#allocation10 + $0x58] sm:$0xff]
    %v1810 = vld [vmem:[#allocation10 + $0x60] sm:$0xff]
    %v1811 = vld [vmem:[#allocation10 + $0x68] sm:$0xff]
    %v1812 = vld [vmem:[#allocation10 + $0x70] sm:$0xff]
    %v1813 = vld [vmem:[#allocation10 + $0x78] sm:$0xff]
    %v1814 = vld [vmem:[#allocation10 + $0x80] sm:$0xff]
    %v1815 = vld [vmem:[#allocation10 + $0x88] sm:$0xff]
    %v1816 = vld [vmem:[#allocation10 + $0x90] sm:$0xff]
    %v1817 = vld [vmem:[#allocation10 + $0x98] sm:$0xff]
    %v1818 = vld [vmem:[#allocation10 + $0xa0] sm:$0xff]
    %v1819 = vld [vmem:[#allocation10 + $0xa8] sm:$0xff]
    %v1820 = vld [vmem:[#allocation10 + $0xb0] sm:$0xff]
    %v1821 = vld [vmem:[#allocation10 + $0xb8] sm:$0xff]
    %v1822 = vld [vmem:[#allocation10 + $0xc0] sm:$0xff]
    %v1823 = vld [vmem:[#allocation10 + $0xc8] sm:$0xff]
    %v1824 = vld [vmem:[#allocation10 + $0xd0] sm:$0xff]
    %v1825 = vld [vmem:[#allocation10 + $0xd8] sm:$0xff]
    %v1826 = vld [vmem:[#allocation10 + $0xe0] sm:$0xff]
    %v1827 = vld [vmem:[#allocation10 + $0xe8] sm:$0xff]
    %v1828 = vld [vmem:[#allocation10 + $0xf0] sm:$0xff]
    %v1829 = vld [vmem:[#allocation10 + $0xf8] sm:$0xff]
    %v1830 = vld [vmem:[#allocation10 + $0x100] sm:$0xff]
    %v1831 = vld [vmem:[#allocation10 + $0x108] sm:$0xff]
    %v1832 = vld [vmem:[#allocation10 + $0x110] sm:$0xff]
    %v1833 = vld [vmem:[#allocation10 + $0x118] sm:$0xff]
    %v1834 = vld [vmem:[#allocation10 + $0x120] sm:$0xff]
    %v1835 = vld [vmem:[#allocation10 + $0x128] sm:$0xff]
    %v1836 = vld [vmem:[#allocation10 + $0x130] sm:$0xff]
    %v1837 = vld [vmem:[#allocation10 + $0x138] sm:$0xff]
    %v1838 = vld [vmem:[#allocation10 + $0x140] sm:$0xff]
    %v1839 = vld [vmem:[#allocation10 + $0x148] sm:$0xff]
    %v1840 = vld [vmem:[#allocation10 + $0x150] sm:$0xff]
    %v1841 = vld [vmem:[#allocation10 + $0x158] sm:$0xff]
    %v1842 = vld [vmem:[#allocation10 + $0x160] sm:$0xff]
    %v1843 = vld [vmem:[#allocation10 + $0x168] sm:$0xff]
    %v1844 = vld [vmem:[#allocation10 + $0x170] sm:$0xff]
    %v1845 = vld [vmem:[#allocation10 + $0x178] sm:$0xff]
    %v1846 = vld [vmem:[#allocation10 + $0x180] sm:$0xff]
    %v1847 = vld [vmem:[#allocation10 + $0x188] sm:$0xff]
    %v1848 = vld [vmem:[#allocation10 + $0x190] sm:$0xff]
    %v1849 = vld [vmem:[#allocation10 + $0x198] sm:$0xff]
    %v1850 = vld [vmem:[#allocation10 + $0x1a0] sm:$0xff]
    %v1851 = vld [vmem:[#allocation10 + $0x1a8] sm:$0xff]
    %v1852 = vld [vmem:[#allocation10 + $0x1b0] sm:$0xff]
    %v1853 = vld [vmem:[#allocation10 + $0x1b8] sm:$0xff]
    %v1854 = vld [vmem:[#allocation10 + $0x1c0] sm:$0xff]
    %v1855 = vld [vmem:[#allocation10 + $0x1c8] sm:$0xff]
    %v1856 = vld [vmem:[#allocation10 + $0x1d0] sm:$0xff]
    %v1857 = vld [vmem:[#allocation10 + $0x1d8] sm:$0xff]
    %v1858 = vld [vmem:[#allocation10 + $0x1e0] sm:$0xff]
    %v1859 = vld [vmem:[#allocation10 + $0x1e8] sm:$0xff]
    %v1860 = vld [vmem:[#allocation10 + $0x1f0] sm:$0xff]
    %v1861 = vld [vmem:[#allocation10 + $0x1f8] sm:$0xff]
    %1862 = vmatprep.subr.mxu0 %v1799
    %1863 = vmatpush1.msra.mxu0 %v1798
    %1864 = vmatprep.subr.mxu0 %v1803
    %1865 = vmatpush1.msra.mxu0 %v1802
    %1866 = vmatprep.subr.mxu0 %v1807
    %1867 = vmatpush1.msra.mxu0 %v1806
    %1868 = vmatprep.subr.mxu0 %v1811
    %1869 = vmatpush1.msra.mxu0 %v1810
    %1870 = vmatprep.subr.mxu0 %v1815
    %1871 = vmatpush1.msra.mxu0 %v1814
    %1872 = vmatprep.subr.mxu0 %v1819
    %1873 = vmatpush1.msra.mxu0 %v1818
    %1874 = vmatprep.subr.mxu0 %v1823
    %1875 = vmatpush1.msra.mxu0 %v1822
    %1876 = vmatprep.subr.mxu0 %v1827
    %1877 = vmatpush1.msra.mxu0 %v1826
    %1878 = vmatprep.subr.mxu0 %v1831
    %1879 = vmatpush1.msra.mxu0 %v1830
    %1880 = vmatprep.subr.mxu0 %v1835
    %1881 = vmatpush1.msra.mxu0 %v1834
    %1882 = vmatprep.subr.mxu0 %v1839
    %1883 = vmatpush1.msra.mxu0 %v1838
    %1884 = vmatprep.subr.mxu0 %v1843
    %1885 = vmatpush1.msra.mxu0 %v1842
    %1886 = vmatprep.subr.mxu0 %v1847
    %1887 = vmatpush1.msra.mxu0 %v1846
    %1888 = vmatprep.subr.mxu0 %v1851
    %1889 = vmatpush1.msra.mxu0 %v1850
    %1890 = vmatprep.subr.mxu0 %v1855
    %1891 = vmatpush1.msra.mxu0 %v1854
    %1892 = vmatprep.subr.mxu0 %v1859
    %1893 = vmatpush1.msra.mxu0 %v1858
    %1894 = vmatprep.subr.mxu0 0.0
    %1895 = vmatpush1.msra.mxu0 0.0
    %1896 = vmatprep.subr.mxu0 0.0
    %1897 = vmatpush1.msra.mxu0 0.0
    %1898 = vmatprep.subr.mxu0 0.0
    %1899 = vmatpush1.msra.mxu0 0.0
    %1900 = vmatprep.subr.mxu0 0.0
    %1901 = vmatpush1.msra.mxu0 0.0
    %1902 = vmatprep.subr.mxu0 0.0
    %1903 = vmatpush1.msra.mxu0 0.0
    %1904 = vmatprep.subr.mxu0 0.0
    %1905 = vmatpush1.msra.mxu0 0.0
    %1906 = vmatprep.subr.mxu0 0.0
    %1907 = vmatpush1.msra.mxu0 0.0
    %1908 = vmatprep.subr.mxu0 0.0
    %1909 = vmatpush1.msra.mxu0 0.0
    %1910 = vmatprep.subr.mxu0 0.0
    %1911 = vmatpush1.msra.mxu0 0.0
    %1912 = vmatprep.subr.mxu0 0.0
    %1913 = vmatpush1.msra.mxu0 0.0
    %1914 = vmatprep.subr.mxu0 0.0
    %1915 = vmatpush1.msra.mxu0 0.0
    %1916 = vmatprep.subr.mxu0 0.0
    %1917 = vmatpush1.msra.mxu0 0.0
    %1918 = vmatprep.subr.mxu0 0.0
    %1919 = vmatpush1.msra.mxu0 0.0
    %1920 = vmatprep.subr.mxu0 0.0
    %1921 = vmatpush1.msra.mxu0 0.0
    %1922 = vmatprep.subr.mxu0 0.0
    %1923 = vmatpush1.msra.mxu0 0.0
    %1924 = vmatprep.subr.mxu0 0.0
    %1925 = vmatpush1.msra.mxu0 0.0
    %1926 = vmatprep.mubr.f32.mxu0 0.0
    %1927 = vmatmul.mubr.f32.gmra.mrb[0].mxu0 %v1792
    %v1928 = vpop.f32.mrb[0].mxu0
    %v1929 = vadd.f32 0.0, %v1928
    %v1930 = vpop.f32.mrb[0].mxu0
    %v1931 = vadd.f32 0.0, %v1930
    %1932 = vdwg.mxu0
    %1933 = vmatprep.subr.mxu0 %v1801
    %1934 = vmatpush1.msra.mxu0 %v1800
    %1935 = vmatprep.subr.mxu0 %v1805
    %1936 = vmatpush1.msra.mxu0 %v1804
    %1937 = vmatprep.subr.mxu0 %v1809
    %1938 = vmatpush1.msra.mxu0 %v1808
    %1939 = vmatprep.subr.mxu0 %v1813
    %1940 = vmatpush1.msra.mxu0 %v1812
    %1941 = vmatprep.subr.mxu0 %v1817
    %1942 = vmatpush1.msra.mxu0 %v1816
    %1943 = vmatprep.subr.mxu0 %v1821
    %1944 = vmatpush1.msra.mxu0 %v1820
    %1945 = vmatprep.subr.mxu0 %v1825
    %1946 = vmatpush1.msra.mxu0 %v1824
    %1947 = vmatprep.subr.mxu0 %v1829
    %1948 = vmatpush1.msra.mxu0 %v1828
    %1949 = vmatprep.subr.mxu0 %v1833
    %1950 = vmatpush1.msra.mxu0 %v1832
    %1951 = vmatprep.subr.mxu0 %v1837
    %1952 = vmatpush1.msra.mxu0 %v1836
    %1953 = vmatprep.subr.mxu0 %v1841
    %1954 = vmatpush1.msra.mxu0 %v1840
    %1955 = vmatprep.subr.mxu0 %v1845
    %1956 = vmatpush1.msra.mxu0 %v1844
    %1957 = vmatprep.subr.mxu0 %v1849
    %1958 = vmatpush1.msra.mxu0 %v1848
    %1959 = vmatprep.subr.mxu0 %v1853
    %1960 = vmatpush1.msra.mxu0 %v1852
    %1961 = vmatprep.subr.mxu0 %v1857
    %1962 = vmatpush1.msra.mxu0 %v1856
    %1963 = vmatprep.subr.mxu0 %v1861
    %1964 = vmatpush1.msra.mxu0 %v1860
    %1965 = vmatprep.subr.mxu0 0.0
    %1966 = vmatpush1.msra.mxu0 0.0
    %1967 = vmatprep.subr.mxu0 0.0
    %1968 = vmatpush1.msra.mxu0 0.0
    %1969 = vmatprep.subr.mxu0 0.0
    %1970 = vmatpush1.msra.mxu0 0.0
    %1971 = vmatprep.subr.mxu0 0.0
    %1972 = vmatpush1.msra.mxu0 0.0
    %1973 = vmatprep.subr.mxu0 0.0
    %1974 = vmatpush1.msra.mxu0 0.0
    %1975 = vmatprep.subr.mxu0 0.0
    %1976 = vmatpush1.msra.mxu0 0.0
    %1977 = vmatprep.subr.mxu0 0.0
    %1978 = vmatpush1.msra.mxu0 0.0
    %1979 = vmatprep.subr.mxu0 0.0
    %1980 = vmatpush1.msra.mxu0 0.0
    %1981 = vmatprep.subr.mxu0 0.0
    %1982 = vmatpush1.msra.mxu0 0.0
    %1983 = vmatprep.subr.mxu0 0.0
    %1984 = vmatpush1.msra.mxu0 0.0
    %1985 = vmatprep.subr.mxu0 0.0
    %1986 = vmatpush1.msra.mxu0 0.0
    %1987 = vmatprep.subr.mxu0 0.0
    %1988 = vmatpush1.msra.mxu0 0.0
    %1989 = vmatprep.subr.mxu0 0.0
    %1990 = vmatpush1.msra.mxu0 0.0
    %1991 = vmatprep.subr.mxu0 0.0
    %1992 = vmatpush1.msra.mxu0 0.0
    %1993 = vmatprep.subr.mxu0 0.0
    %1994 = vmatpush1.msra.mxu0 0.0
    %1995 = vmatprep.subr.mxu0 0.0
    %1996 = vmatpush1.msra.mxu0 0.0
    %1997 = vmatprep.mubr.f32.mxu0 0.0
    %1998 = vmatmul.mubr.f32.gmra.mrb[0].mxu0 %v1792
    %v1999 = vpop.f32.mrb[0].mxu0
    %v2000 = vadd.f32 0.0, %v1999
    %v2001 = vpop.f32.mrb[0].mxu0
    %v2002 = vadd.f32 0.0, %v2001
    %2003 = vdwg.mxu0
    %v2008 = vrot.slane %v1929, 4
    %v2009 = vrot.slane %v1931, 4
    %v2010 = vrot.slane %v2000, 4
    %v2011 = vrot.slane %v2002, 4
    %v2016 = vadd.f32 %v1794, %v2008
    %v2017 = vadd.f32 %v1795, %v2009
    %v2018 = vadd.f32 %v1796, %v2010
    %v2019 = vadd.f32 %v1797, %v2011
    %v2020 = vxor.u32 %v2016, 2147483648
    %v2021 = vmul.f32 %v2020, 1.442695
    %v2022 = vpow.pop %v2021
    %v2023 = vadd.f32 %v2022, 1.0
    %v2024 = vrcp.pop %v2023
    %v2025 = vmul.f32 1.0, %v2024
    %v2026 = vxor.u32 %v2017, 2147483648
    %v2027 = vmul.f32 %v2026, 1.442695
    %v2028 = vpow.pop %v2027
    %v2029 = vadd.f32 %v2028, 1.0
    %v2030 = vrcp.pop %v2029
    %v2031 = vmul.f32 1.0, %v2030
    %v2032 = vtanh.pop %v2018
    %v2033 = vxor.u32 %v2019, 2147483648
    %v2034 = vmul.f32 %v2033, 1.442695
    %v2035 = vpow.pop %v2034
    %v2036 = vadd.f32 %v2035, 1.0
    %v2037 = vrcp.pop %v2036
    %v2038 = vmul.f32 1.0, %v2037
    %v2040 = vrot.slane %v1793, 4
    %v2042 = vmul.f32 %v2031, %v2040
    %v2043 = vmul.f32 %v2025, %v2032
    %v2044 = vadd.f32 %v2042, %v2043
    %v2045 = vtanh.pop %v2044
    %v2046 = vmul.f32 %v2038, %v2045
    %2047 = vst [vmem:[#allocation3 - $0x4] sm:$0x30] %v2046
    %2048 = vst [vmem:[#allocation4 - $0x4] sm:$0x30] %v2044
    %2049 = vst [vmem:[#allocation11 + $0x8] sm:$0x30] %v2046
    %v2050 = vld [vmem:[#allocation3] sm:$0x3]
    %v2051 = vld [vmem:[#allocation4] sm:$0x3]
    %v2052 = vld [vmem:[#allocation2 + $0x20] sm:$0xc0]
    %v2053 = vld [vmem:[#allocation2 + $0x28] sm:$0xc0]
    %v2054 = vld [vmem:[#allocation2 + $0x30] sm:$0xc0]
    %v2055 = vld [vmem:[#allocation2 + $0x38] sm:$0xc0]
    %v2056 = vld [vmem:[#allocation10] sm:$0xff]
    %v2057 = vld [vmem:[#allocation10 + $0x8] sm:$0xff]
    %v2058 = vld [vmem:[#allocation10 + $0x10] sm:$0xff]
    %v2059 = vld [vmem:[#allocation10 + $0x18] sm:$0xff]
    %v2060 = vld [vmem:[#allocation10 + $0x20] sm:$0xff]
    %v2061 = vld [vmem:[#allocation10 + $0x28] sm:$0xff]
    %v2062 = vld [vmem:[#allocation10 + $0x30] sm:$0xff]
    %v2063 = vld [vmem:[#allocation10 + $0x38] sm:$0xff]
    %v2064 = vld [vmem:[#allocation10 + $0x40] sm:$0xff]
    %v2065 = vld [vmem:[#allocation10 + $0x48] sm:$0xff]
    %v2066 = vld [vmem:[#allocation10 + $0x50] sm:$0xff]
    %v2067 = vld [vmem:[#allocation10 + $0x58] sm:$0xff]
    %v2068 = vld [vmem:[#allocation10 + $0x60] sm:$0xff]
    %v2069 = vld [vmem:[#allocation10 + $0x68] sm:$0xff]
    %v2070 = vld [vmem:[#allocation10 + $0x70] sm:$0xff]
    %v2071 = vld [vmem:[#allocation10 + $0x78] sm:$0xff]
    %v2072 = vld [vmem:[#allocation10 + $0x80] sm:$0xff]
    %v2073 = vld [vmem:[#allocation10 + $0x88] sm:$0xff]
    %v2074 = vld [vmem:[#allocation10 + $0x90] sm:$0xff]
    %v2075 = vld [vmem:[#allocation10 + $0x98] sm:$0xff]
    %v2076 = vld [vmem:[#allocation10 + $0xa0] sm:$0xff]
    %v2077 = vld [vmem:[#allocation10 + $0xa8] sm:$0xff]
    %v2078 = vld [vmem:[#allocation10 + $0xb0] sm:$0xff]
    %v2079 = vld [vmem:[#allocation10 + $0xb8] sm:$0xff]
    %v2080 = vld [vmem:[#allocation10 + $0xc0] sm:$0xff]
    %v2081 = vld [vmem:[#allocation10 + $0xc8] sm:$0xff]
    %v2082 = vld [vmem:[#allocation10 + $0xd0] sm:$0xff]
    %v2083 = vld [vmem:[#allocation10 + $0xd8] sm:$0xff]
    %v2084 = vld [vmem:[#allocation10 + $0xe0] sm:$0xff]
    %v2085 = vld [vmem:[#allocation10 + $0xe8] sm:$0xff]
    %v2086 = vld [vmem:[#allocation10 + $0xf0] sm:$0xff]
    %v2087 = vld [vmem:[#allocation10 + $0xf8] sm:$0xff]
    %v2088 = vld [vmem:[#allocation10 + $0x100] sm:$0xff]
    %v2089 = vld [vmem:[#allocation10 + $0x108] sm:$0xff]
    %v2090 = vld [vmem:[#allocation10 + $0x110] sm:$0xff]
    %v2091 = vld [vmem:[#allocation10 + $0x118] sm:$0xff]
    %v2092 = vld [vmem:[#allocation10 + $0x120] sm:$0xff]
    %v2093 = vld [vmem:[#allocation10 + $0x128] sm:$0xff]
    %v2094 = vld [vmem:[#allocation10 + $0x130] sm:$0xff]
    %v2095 = vld [vmem:[#allocation10 + $0x138] sm:$0xff]
    %v2096 = vld [vmem:[#allocation10 + $0x140] sm:$0xff]
    %v2097 = vld [vmem:[#allocation10 + $0x148] sm:$0xff]
    %v2098 = vld [vmem:[#allocation10 + $0x150] sm:$0xff]
    %v2099 = vld [vmem:[#allocation10 + $0x158] sm:$0xff]
    %v2100 = vld [vmem:[#allocation10 + $0x160] sm:$0xff]
    %v2101 = vld [vmem:[#allocation10 + $0x168] sm:$0xff]
    %v2102 = vld [vmem:[#allocation10 + $0x170] sm:$0xff]
    %v2103 = vld [vmem:[#allocation10 + $0x178] sm:$0xff]
    %v2104 = vld [vmem:[#allocation10 + $0x180] sm:$0xff]
    %v2105 = vld [vmem:[#allocation10 + $0x188] sm:$0xff]
    %v2106 = vld [vmem:[#allocation10 + $0x190] sm:$0xff]
    %v2107 = vld [vmem:[#allocation10 + $0x198] sm:$0xff]
    %v2108 = vld [vmem:[#allocation10 + $0x1a0] sm:$0xff]
    %v2109 = vld [vmem:[#allocation10 + $0x1a8] sm:$0xff]
    %v2110 = vld [vmem:[#allocation10 + $0x1b0] sm:$0xff]
    %v2111 = vld [vmem:[#allocation10 + $0x1b8] sm:$0xff]
    %v2112 = vld [vmem:[#allocation10 + $0x1c0] sm:$0xff]
    %v2113 = vld [vmem:[#allocation10 + $0x1c8] sm:$0xff]
    %v2114 = vld [vmem:[#allocation10 + $0x1d0] sm:$0xff]
    %v2115 = vld [vmem:[#allocation10 + $0x1d8] sm:$0xff]
    %v2116 = vld [vmem:[#allocation10 + $0x1e0] sm:$0xff]
    %v2117 = vld [vmem:[#allocation10 + $0x1e8] sm:$0xff]
    %v2118 = vld [vmem:[#allocation10 + $0x1f0] sm:$0xff]
    %v2119 = vld [vmem:[#allocation10 + $0x1f8] sm:$0xff]
    %2120 = vmatprep.subr.mxu0 %v2057
    %2121 = vmatpush1.msra.mxu0 %v2056
    %2122 = vmatprep.subr.mxu0 %v2061
    %2123 = vmatpush1.msra.mxu0 %v2060
    %2124 = vmatprep.subr.mxu0 %v2065
    %2125 = vmatpush1.msra.mxu0 %v2064
    %2126 = vmatprep.subr.mxu0 %v2069
    %2127 = vmatpush1.msra.mxu0 %v2068
    %2128 = vmatprep.subr.mxu0 %v2073
    %2129 = vmatpush1.msra.mxu0 %v2072
    %2130 = vmatprep.subr.mxu0 %v2077
    %2131 = vmatpush1.msra.mxu0 %v2076
    %2132 = vmatprep.subr.mxu0 %v2081
    %2133 = vmatpush1.msra.mxu0 %v2080
    %2134 = vmatprep.subr.mxu0 %v2085
    %2135 = vmatpush1.msra.mxu0 %v2084
    %2136 = vmatprep.subr.mxu0 %v2089
    %2137 = vmatpush1.msra.mxu0 %v2088
    %2138 = vmatprep.subr.mxu0 %v2093
    %2139 = vmatpush1.msra.mxu0 %v2092
    %2140 = vmatprep.subr.mxu0 %v2097
    %2141 = vmatpush1.msra.mxu0 %v2096
    %2142 = vmatprep.subr.mxu0 %v2101
    %2143 = vmatpush1.msra.mxu0 %v2100
    %2144 = vmatprep.subr.mxu0 %v2105
    %2145 = vmatpush1.msra.mxu0 %v2104
    %2146 = vmatprep.subr.mxu0 %v2109
    %2147 = vmatpush1.msra.mxu0 %v2108
    %2148 = vmatprep.subr.mxu0 %v2113
    %2149 = vmatpush1.msra.mxu0 %v2112
    %2150 = vmatprep.subr.mxu0 %v2117
    %2151 = vmatpush1.msra.mxu0 %v2116
    %2152 = vmatprep.subr.mxu0 0.0
    %2153 = vmatpush1.msra.mxu0 0.0
    %2154 = vmatprep.subr.mxu0 0.0
    %2155 = vmatpush1.msra.mxu0 0.0
    %2156 = vmatprep.subr.mxu0 0.0
    %2157 = vmatpush1.msra.mxu0 0.0
    %2158 = vmatprep.subr.mxu0 0.0
    %2159 = vmatpush1.msra.mxu0 0.0
    %2160 = vmatprep.subr.mxu0 0.0
    %2161 = vmatpush1.msra.mxu0 0.0
    %2162 = vmatprep.subr.mxu0 0.0
    %2163 = vmatpush1.msra.mxu0 0.0
    %2164 = vmatprep.subr.mxu0 0.0
    %2165 = vmatpush1.msra.mxu0 0.0
    %2166 = vmatprep.subr.mxu0 0.0
    %2167 = vmatpush1.msra.mxu0 0.0
    %2168 = vmatprep.subr.mxu0 0.0
    %2169 = vmatpush1.msra.mxu0 0.0
    %2170 = vmatprep.subr.mxu0 0.0
    %2171 = vmatpush1.msra.mxu0 0.0
    %2172 = vmatprep.subr.mxu0 0.0
    %2173 = vmatpush1.msra.mxu0 0.0
    %2174 = vmatprep.subr.mxu0 0.0
    %2175 = vmatpush1.msra.mxu0 0.0
    %2176 = vmatprep.subr.mxu0 0.0
    %2177 = vmatpush1.msra.mxu0 0.0
    %2178 = vmatprep.subr.mxu0 0.0
    %2179 = vmatpush1.msra.mxu0 0.0
    %2180 = vmatprep.subr.mxu0 0.0
    %2181 = vmatpush1.msra.mxu0 0.0
    %2182 = vmatprep.subr.mxu0 0.0
    %2183 = vmatpush1.msra.mxu0 0.0
    %2184 = vmatprep.mubr.f32.mxu0 0.0
    %2185 = vmatmul.mubr.f32.gmra.mrb[0].mxu0 %v2050
    %v2186 = vpop.f32.mrb[0].mxu0
    %v2187 = vadd.f32 0.0, %v2186
    %v2188 = vpop.f32.mrb[0].mxu0
    %v2189 = vadd.f32 0.0, %v2188
    %2190 = vdwg.mxu0
    %2191 = vmatprep.subr.mxu0 %v2059
    %2192 = vmatpush1.msra.mxu0 %v2058
    %2193 = vmatprep.subr.mxu0 %v2063
    %2194 = vmatpush1.msra.mxu0 %v2062
    %2195 = vmatprep.subr.mxu0 %v2067
    %2196 = vmatpush1.msra.mxu0 %v2066
    %2197 = vmatprep.subr.mxu0 %v2071
    %2198 = vmatpush1.msra.mxu0 %v2070
    %2199 = vmatprep.subr.mxu0 %v2075
    %2200 = vmatpush1.msra.mxu0 %v2074
    %2201 = vmatprep.subr.mxu0 %v2079
    %2202 = vmatpush1.msra.mxu0 %v2078
    %2203 = vmatprep.subr.mxu0 %v2083
    %2204 = vmatpush1.msra.mxu0 %v2082
    %2205 = vmatprep.subr.mxu0 %v2087
    %2206 = vmatpush1.msra.mxu0 %v2086
    %2207 = vmatprep.subr.mxu0 %v2091
    %2208 = vmatpush1.msra.mxu0 %v2090
    %2209 = vmatprep.subr.mxu0 %v2095
    %2210 = vmatpush1.msra.mxu0 %v2094
    %2211 = vmatprep.subr.mxu0 %v2099
    %2212 = vmatpush1.msra.mxu0 %v2098
    %2213 = vmatprep.subr.mxu0 %v2103
    %2214 = vmatpush1.msra.mxu0 %v2102
    %2215 = vmatprep.subr.mxu0 %v2107
    %2216 = vmatpush1.msra.mxu0 %v2106
    %2217 = vmatprep.subr.mxu0 %v2111
    %2218 = vmatpush1.msra.mxu0 %v2110
    %2219 = vmatprep.subr.mxu0 %v2115
    %2220 = vmatpush1.msra.mxu0 %v2114
    %2221 = vmatprep.subr.mxu0 %v2119
    %2222 = vmatpush1.msra.mxu0 %v2118
    %2223 = vmatprep.subr.mxu0 0.0
    %2224 = vmatpush1.msra.mxu0 0.0
    %2225 = vmatprep.subr.mxu0 0.0
    %2226 = vmatpush1.msra.mxu0 0.0
    %2227 = vmatprep.subr.mxu0 0.0
    %2228 = vmatpush1.msra.mxu0 0.0
    %2229 = vmatprep.subr.mxu0 0.0
    %2230 = vmatpush1.msra.mxu0 0.0
    %2231 = vmatprep.subr.mxu0 0.0
    %2232 = vmatpush1.msra.mxu0 0.0
    %2233 = vmatprep.subr.mxu0 0.0
    %2234 = vmatpush1.msra.mxu0 0.0
    %2235 = vmatprep.subr.mxu0 0.0
    %2236 = vmatpush1.msra.mxu0 0.0
    %2237 = vmatprep.subr.mxu0 0.0
    %2238 = vmatpush1.msra.mxu0 0.0
    %2239 = vmatprep.subr.mxu0 0.0
    %2240 = vmatpush1.msra.mxu0 0.0
    %2241 = vmatprep.subr.mxu0 0.0
    %2242 = vmatpush1.msra.mxu0 0.0
    %2243 = vmatprep.subr.mxu0 0.0
    %2244 = vmatpush1.msra.mxu0 0.0
    %2245 = vmatprep.subr.mxu0 0.0
    %2246 = vmatpush1.msra.mxu0 0.0
    %2247 = vmatprep.subr.mxu0 0.0
    %2248 = vmatpush1.msra.mxu0 0.0
    %2249 = vmatprep.subr.mxu0 0.0
    %2250 = vmatpush1.msra.mxu0 0.0
    %2251 = vmatprep.subr.mxu0 0.0
    %2252 = vmatpush1.msra.mxu0 0.0
    %2253 = vmatprep.subr.mxu0 0.0
    %2254 = vmatpush1.msra.mxu0 0.0
    %2255 = vmatprep.mubr.f32.mxu0 0.0
    %2256 = vmatmul.mubr.f32.gmra.mrb[0].mxu0 %v2050
    %v2257 = vpop.f32.mrb[0].mxu0
    %v2258 = vadd.f32 0.0, %v2257
    %v2259 = vpop.f32.mrb[0].mxu0
    %v2260 = vadd.f32 0.0, %v2259
    %2261 = vdwg.mxu0
    %v2266 = vrot.slane %v2187, 2
    %v2267 = vrot.slane %v2189, 2
    %v2268 = vrot.slane %v2258, 2
    %v2269 = vrot.slane %v2260, 2
    %v2274 = vadd.f32 %v2052, %v2266
    %v2275 = vadd.f32 %v2053, %v2267
    %v2276 = vadd.f32 %v2054, %v2268
    %v2277 = vadd.f32 %v2055, %v2269
    %v2278 = vxor.u32 %v2274, 2147483648
    %v2279 = vmul.f32 %v2278, 1.442695
    %v2280 = vpow.pop %v2279
    %v2281 = vadd.f32 %v2280, 1.0
    %v2282 = vrcp.pop %v2281
    %v2283 = vmul.f32 1.0, %v2282
    %v2284 = vxor.u32 %v2275, 2147483648
    %v2285 = vmul.f32 %v2284, 1.442695
    %v2286 = vpow.pop %v2285
    %v2287 = vadd.f32 %v2286, 1.0
    %v2288 = vrcp.pop %v2287
    %v2289 = vmul.f32 1.0, %v2288
    %v2290 = vtanh.pop %v2276
    %v2291 = vxor.u32 %v2277, 2147483648
    %v2292 = vmul.f32 %v2291, 1.442695
    %v2293 = vpow.pop %v2292
    %v2294 = vadd.f32 %v2293, 1.0
    %v2295 = vrcp.pop %v2294
    %v2296 = vmul.f32 1.0, %v2295
    %v2298 = vrot.slane %v2051, 2
    %v2300 = vmul.f32 %v2289, %v2298
    %v2301 = vmul.f32 %v2283, %v2290
    %v2302 = vadd.f32 %v2300, %v2301
    %v2303 = vtanh.pop %v2302
    %v2304 = vmul.f32 %v2296, %v2303
    %2305 = vst [vmem:[#allocation3 - $0x6] sm:$0xc0] %v2304
    %2306 = vst [vmem:[#allocation4 - $0x6] sm:$0xc0] %v2302
    %2307 = vst [vmem:[#allocation11 + $0x8] sm:$0xc0] %v2304
    // Predicated region
    $region34: #{tpu_custom_call.1} parent=1 // pred_check
      _
    $region35: #{tpu_custom_call.1} parent=1 // pred_check_branch
      %2309 = sbr.rel (0) target = $region37
    $region36: #{tpu_custom_call.1} parent=1 // pred_region
      %s2311 = ssub.s32 256, 256
      %2312 = vsyncadd [#allocation7], %s2311
      %s2313 = sshll.u32 [#allocation11], 4
      %s2314 = int_to_ptr.vmem [resolvable:$true] %s2313
      %2319 = dma.vmem_to_hbm [thread:$0]  %s2314, 256, %s4, [#allocation7], 128, 128, 8
    $region37: #{tpu_custom_call.1} parent=1 // pred_fallthru
      _
    // Predicated region
    $region38: #{tpu_custom_call.1} parent=1 // pred_check
      _
    $region39: #{tpu_custom_call.1} parent=1 // pred_check_branch
      %2321 = sbr.rel (0) target = $region41
    $region40: #{tpu_custom_call.1} parent=1 // pred_region
      %2322 = dma.done [#allocation7], 256
    $region41: #{tpu_custom_call.1} parent=1 // pred_fallthru
      _
    %2323 = vsyncpa [#allocation6], 1
    %2324 = vsyncpa [#allocation9], 1
    %2325 = vsyncpa [#allocation7], 1

</llo_original>
